<compile_context>
chip_gen: v7x
topology: tpu7x:2x2x1
jax: 0.10.0
libtpu: 0.0.40
codegen_flags: <defaults>
</compile_context>

<pallas_src>
import jax
import jax.numpy as jnp
from jax.experimental import pallas as pl
from jax.experimental.pallas import tpu as pltpu


# --------------------- constants hardcoded by the torch forward ------------ #
_DEPTH_MIN = 2.0
_DEPTH_MAX = 46.8
_NUM_BINS = 40
_BIN_SIZE = 2.0 * (_DEPTH_MAX - _DEPTH_MIN) / (_NUM_BINS * (1 + _NUM_BINS))
_EIGHT_OVER_BIN = 8.0 / _BIN_SIZE          # multiply instead of divide
_U_SCALE = 2.0 / (360.0 - 1.0)             # frustum_shape [40,240,360], flipped
_V_SCALE = 2.0 / (240.0 - 1.0)
_B_SCALE = 2.0 / (float(_NUM_BINS) - 1.0)
_OOB = -2.0
_EPS = 1e-8                                # kornia convert_points_from_homogeneous eps


# ----------------------------- Pallas kernel ------------------------------ #
def _frustum_kernel(tran_ref, proj_ref, out_ref):
    # tran_ref: SMEM (B*16,)  row-major  Tran = RT @ un_project  per batch
    # proj_ref: SMEM (B*12,)  row-major  cam_to_img (3x4)        per batch
    # out_ref : VMEM block (1, DT, 3, H, W)
    b = pl.program_id(0)
    DT = out_ref.shape[1]
    H = out_ref.shape[3]
    W = out_ref.shape[4]
    d_base = pl.program_id(1) * DT

    # ---- per-batch scalars: hoisted, read once per grid step (28 sld) ----
    tb = b * 16
    pb = b * 12
    T = [[tran_ref[tb + 4 * i + j] for j in range(4)] for i in range(4)]
    C = [[proj_ref[pb + 4 * i + j] for j in range(4)] for i in range(3)]

    # ---- depth-independent (H, W) bases: hoisted out of the d loop ----
    # voxel point (kornia create_meshgrid3d + 0.5):  p = (d, w, h) + 0.5
    p1 = jax.lax.broadcasted_iota(jnp.int32, (H, W), 1).astype(jnp.float32) + 0.5  # width idx
    p2 = jax.lax.broadcasted_iota(jnp.int32, (H, W), 0).astype(jnp.float32) + 0.5  # height idx
    base = [T[i][1] * p1 + T[i][2] * p2 + T[i][3] for i in range(4)]  # ~8 vregs live

    # Fully unrolled depth loop: static store offsets, per-d working set stays
    # at a few (H, W) vregs (no (DT*H, W) temps -> no spills).
    for dl in range(DT):
        p0 = (d_base + dl).astype(jnp.float32) + 0.5   # depth index (scalar)

        # camera_grid = kornia.transform_points(Tran, voxel_grid)
        wh = base[3] + T[3][0] * p0
        s1 = jnp.where(jnp.abs(wh) > _EPS, 1.0 / (wh + _EPS), 1.0)
        cx = (base[0] + T[0][0] * p0) * s1
        cy = (base[1] + T[1][0] * p0) * s1
        cz = (base[2] + T[2][0] * p0) * s1

        # project_to_image: img_h = I_C @ [cam, 1]
        ih0 = C[0][0] * cx + C[0][1] * cy + C[0][2] * cz + C[0][3]
        ih1 = C[1][0] * cx + C[1][1] * cy + C[1][2] * cz + C[1][3]
        z = C[2][0] * cx + C[2][1] * cy + C[2][2] * cz + C[2][3]
        s2 = jnp.where(jnp.abs(z) > _EPS, 1.0 / (z + _EPS), 1.0)
        u = ih0 * s2
        v = ih1 * s2
        depth = z - C[2][3]     # points_t[..., -1] - project[..., 2, 3]

        # bin_depths(mode='LID', depth_min=2.0, depth_max=46.8, num_bins=40, target=True)
        idx = -0.5 + 0.5 * jnp.sqrt(1.0 + (depth - _DEPTH_MIN) * _EIGHT_OVER_BIN)
        bad = (idx < 0.0) | (idx > float(_NUM_BINS)) | (~jnp.isfinite(idx))
        idx = jnp.floor(jnp.where(bad, float(_NUM_BINS), idx))  # trunc == floor (idx >= 0)

        # normalize_coords with frustum_shape = [40, 240, 360] (flipped -> [360, 240, 40])
        out_u = u * _U_SCALE - 1.0
        out_v = v * _V_SCALE - 1.0
        out_b = idx * _B_SCALE - 1.0

        # out-of-bounds (non-finite) -> -2 ; out_b is always finite after the
        # LID clamp, so its guard is dropped.
        out_ref[0, dl, 0, :, :] = jnp.where(jnp.isfinite(out_u), out_u, _OOB)
        out_ref[0, dl, 1, :, :] = jnp.where(jnp.isfinite(out_v), out_v, _OOB)
        out_ref[0, dl, 2, :, :] = out_b


def _choose_d_tile(D, H, W, max_block_bytes=4 << 20, max_unroll=32):
    """Largest divisor of D such that the (1, DT, 3, H, W) f32 block stays small.

    Keeps the 2x-buffered output block well under the scoped-VMEM default
    (32 MiB; v7x has only 64 MiB physical VMEM) and bounds the in-kernel
    unroll factor.
    """
    bytes_per_d = 3 * H * W * 4
    cap = max(1, min(D, max_unroll, max_block_bytes // max(bytes_per_d, 1)))
    for dt in range(cap, 0, -1):
        if D % dt == 0:
            return dt
    return 1


# ------------------------------ JAX wrapper -------------------------------- #
def frustum_grid_forward(intrins, RT, un_project, D, H, W, channels_last=True):
    """intrins: (B, 3, 4), RT: (B, 4, 4) -> frustum grid.

    channels_last=True  : (B, D, H, W, 3)  (PyTorch layout, extra transpose)
    channels_last=False : (B, D, 3, H, W)  (TPU-friendly planes layout)
    """
    B = intrins.shape[0]
    # glue: per-batch Tran = RT.float() @ un_project.float()  (B tiny 4x4 matmuls)
    Tran = jnp.einsum(
        "bij,jk->bik", RT.astype(jnp.float32), un_project.astype(jnp.float32)
    )
    # 1-D SMEM layout avoids 2-D SMEM padding.
    tran_flat = Tran.reshape(B * 16)
    proj_flat = intrins.astype(jnp.float32).reshape(B * 12)

    DT = _choose_d_tile(D, H, W)
    grid = (B, D // DT)

    out = pl.pallas_call(
        _frustum_kernel,
        grid=grid,
        in_specs=[
            pl.BlockSpec(memory_space=pltpu.MemorySpace.SMEM),  # Tran (B*16,)
            pl.BlockSpec(memory_space=pltpu.MemorySpace.SMEM),  # intrins (B*12,)
        ],
        out_specs=pl.BlockSpec((1, DT, 3, H, W), lambda b, dc: (b, dc, 0, 0, 0)),
        out_shape=jax.ShapeDtypeStruct((B, D, 3, H, W), jnp.float32),
        compiler_params=pltpu.CompilerParams(
            # Both axes are independent -> shard across the two TCs on v7x.
            dimension_semantics=("parallel", "parallel")
        ),
    )(tran_flat, proj_flat)

    if channels_last:
        # PyTorch's (B, D, H, W, 3).  NOTE: this is a separate lane-sparse XLA
        # transpose; downstream consumers should prefer channels_last=False
        # and fuse the channel interleave into their own kernel.
        return jnp.transpose(out, (0, 1, 3, 4, 2))
    return out


class FrustumGridGenerator:
    """JAX/Pallas port of CaDDN FrustumGridGenerator (float32 on TPU)."""

    def __init__(self, grid_size, pc_range, disc_cfg):
        self.grid_size = [float(g) for g in grid_size]
        self.pc_range = pc_range
        self.out_of_bounds_val = -2.0
        self.disc_cfg = disc_cfg  # stored (forward hardcodes LID/2.0/46.8/40, like the torch code)

        pc_min = [float(x) for x in pc_range[:3]]
        pc_max = [float(x) for x in pc_range[3:]]
        voxel_size = [(mx - mn) / g for mn, mx, g in zip(pc_min, pc_max, self.grid_size)]
        self.pc_min = pc_min
        self.pc_max = pc_max
        self.voxel_size = voxel_size

        # grid_size = (depth, width, height)
        self.depth, self.width, self.height = [int(g) for g in grid_size]

        x_size, y_size, z_size = voxel_size
        x_min, y_min, z_min = pc_min
        self.un_project = jnp.array(
            [[x_size, 0.0, 0.0, x_min],
             [0.0, y_size, 0.0, y_min],
             [0.0, 0.0, z_size, z_min],
             [0.0, 0.0, 0.0, 1.0]],
            dtype=jnp.float32,
        )

    def __call__(self, intrins, RT, channels_last=True):
        return frustum_grid_forward(
            intrins, RT, self.un_project,
            self.depth, self.height, self.width,
            channels_last=channels_last,
        )


# --------------------------------- main ------------------------------------ #
if __name__ == "__main__":
    B = 2
    grid_size = (8, 128, 16)  # (depth, width, height)
    pc_range = [0.0, -40.0, -3.0, 70.4, 40.0, 1.0]
    disc_cfg = {"mode": "LID", "num_bins": 40, "depth_min": 2.0, "depth_max": 46.8}

    gen = FrustumGridGenerator(grid_size, pc_range, disc_cfg)

    key = jax.random.PRNGKey(0)
    k1, k2 = jax.random.split(key)
    base_K = jnp.array(
        [[720.0, 0.0, 64.0, 40.0],
         [0.0, 720.0, 64.0, 2.0],
         [0.0, 0.0, 1.0, 0.27]],
        dtype=jnp.float32,
    )
    intrins = base_K[None, :, :] + 0.01 * jax.random.normal(k1, (B, 3, 4), jnp.float32)

    RT = jnp.tile(jnp.eye(4, dtype=jnp.float32)[None, :, :], (B, 1, 1))
    RT = RT.at[:, :3, :].add(0.01 * jax.random.normal(k2, (B, 3, 4), jnp.float32))

    out = gen(intrins, RT)
    out = jax.block_until_ready(out)

    assert out.shape == (B, grid_size[0], grid_size[2], grid_size[1], 3), out.shape
    assert out.dtype == jnp.float32
    assert bool(jnp.all(jnp.isfinite(out)))

    # planes-layout path (no transpose) must agree with the channels-last path
    out_planes = jax.block_until_ready(gen(intrins, RT, channels_last=False))
    assert out_planes.shape == (B, grid_size[0], 3, grid_size[2], grid_size[1])
    assert bool(
        jnp.allclose(jnp.transpose(out_planes, (0, 1, 3, 4, 2)), out)
    )

    print("KERNEL_OK")
</pallas_src>

<mosaic_0001>
module attributes {stable_mosaic.version = 11 : i64} {
  func.func @_frustum_kernel(%arg0: i32, %arg1: i32, %arg2: memref<32xf32, #tpu.memory_space<smem>>, %arg3: memref<24xf32, #tpu.memory_space<smem>>, %arg4: memref<1x8x3x16x128xf32, #tpu.memory_space<vmem>>) attributes {dimension_semantics = [#tpu.dimension_semantics<parallel>, #tpu.dimension_semantics<parallel>], iteration_bounds = array<i64: 2, 1>, scalar_prefetch = 0 : i64, scratch_operands = 0 : i64, tpu.core_type = #tpu.core_type<tc>, window_params = [{transform_indices = @transform_0, window_bounds = array<i64: 32>}, {transform_indices = @transform_1, window_bounds = array<i64: 24>}, {transform_indices = @transform_2, window_bounds = array<i64: 1, 8, 3, 16, 128>}]} {
    %c8_i32 = arith.constant 8 : i32
    %0 = arith.muli %arg1, %c8_i32 : i32
    %c16_i32 = arith.constant 16 : i32
    %1 = arith.muli %arg0, %c16_i32 : i32
    %c12_i32 = arith.constant 12 : i32
    %2 = arith.muli %arg0, %c12_i32 : i32
    %c0_i32 = arith.constant 0 : i32
    %3 = arith.addi %1, %c0_i32 : i32
    %c0_i32_0 = arith.constant 0 : i32
    %4 = arith.addi %3, %c0_i32_0 : i32
    %5 = arith.index_cast %4 : i32 to index
    %6 = memref.load %arg2[%5] : memref<32xf32, #tpu.memory_space<smem>>
    %c0_i32_1 = arith.constant 0 : i32
    %7 = arith.addi %1, %c0_i32_1 : i32
    %c1_i32 = arith.constant 1 : i32
    %8 = arith.addi %7, %c1_i32 : i32
    %9 = arith.index_cast %8 : i32 to index
    %10 = memref.load %arg2[%9] : memref<32xf32, #tpu.memory_space<smem>>
    %c0_i32_2 = arith.constant 0 : i32
    %11 = arith.addi %1, %c0_i32_2 : i32
    %c2_i32 = arith.constant 2 : i32
    %12 = arith.addi %11, %c2_i32 : i32
    %13 = arith.index_cast %12 : i32 to index
    %14 = memref.load %arg2[%13] : memref<32xf32, #tpu.memory_space<smem>>
    %c0_i32_3 = arith.constant 0 : i32
    %15 = arith.addi %1, %c0_i32_3 : i32
    %c3_i32 = arith.constant 3 : i32
    %16 = arith.addi %15, %c3_i32 : i32
    %17 = arith.index_cast %16 : i32 to index
    %18 = memref.load %arg2[%17] : memref<32xf32, #tpu.memory_space<smem>>
    %c4_i32 = arith.constant 4 : i32
    %19 = arith.addi %1, %c4_i32 : i32
    %c0_i32_4 = arith.constant 0 : i32
    %20 = arith.addi %19, %c0_i32_4 : i32
    %21 = arith.index_cast %20 : i32 to index
    %22 = memref.load %arg2[%21] : memref<32xf32, #tpu.memory_space<smem>>
    %c4_i32_5 = arith.constant 4 : i32
    %23 = arith.addi %1, %c4_i32_5 : i32
    %c1_i32_6 = arith.constant 1 : i32
    %24 = arith.addi %23, %c1_i32_6 : i32
    %25 = arith.index_cast %24 : i32 to index
    %26 = memref.load %arg2[%25] : memref<32xf32, #tpu.memory_space<smem>>
    %c4_i32_7 = arith.constant 4 : i32
    %27 = arith.addi %1, %c4_i32_7 : i32
    %c2_i32_8 = arith.constant 2 : i32
    %28 = arith.addi %27, %c2_i32_8 : i32
    %29 = arith.index_cast %28 : i32 to index
    %30 = memref.load %arg2[%29] : memref<32xf32, #tpu.memory_space<smem>>
    %c4_i32_9 = arith.constant 4 : i32
    %31 = arith.addi %1, %c4_i32_9 : i32
    %c3_i32_10 = arith.constant 3 : i32
    %32 = arith.addi %31, %c3_i32_10 : i32
    %33 = arith.index_cast %32 : i32 to index
    %34 = memref.load %arg2[%33] : memref<32xf32, #tpu.memory_space<smem>>
    %c8_i32_11 = arith.constant 8 : i32
    %35 = arith.addi %1, %c8_i32_11 : i32
    %c0_i32_12 = arith.constant 0 : i32
    %36 = arith.addi %35, %c0_i32_12 : i32
    %37 = arith.index_cast %36 : i32 to index
    %38 = memref.load %arg2[%37] : memref<32xf32, #tpu.memory_space<smem>>
    %c8_i32_13 = arith.constant 8 : i32
    %39 = arith.addi %1, %c8_i32_13 : i32
    %c1_i32_14 = arith.constant 1 : i32
    %40 = arith.addi %39, %c1_i32_14 : i32
    %41 = arith.index_cast %40 : i32 to index
    %42 = memref.load %arg2[%41] : memref<32xf32, #tpu.memory_space<smem>>
    %c8_i32_15 = arith.constant 8 : i32
    %43 = arith.addi %1, %c8_i32_15 : i32
    %c2_i32_16 = arith.constant 2 : i32
    %44 = arith.addi %43, %c2_i32_16 : i32
    %45 = arith.index_cast %44 : i32 to index
    %46 = memref.load %arg2[%45] : memref<32xf32, #tpu.memory_space<smem>>
    %c8_i32_17 = arith.constant 8 : i32
    %47 = arith.addi %1, %c8_i32_17 : i32
    %c3_i32_18 = arith.constant 3 : i32
    %48 = arith.addi %47, %c3_i32_18 : i32
    %49 = arith.index_cast %48 : i32 to index
    %50 = memref.load %arg2[%49] : memref<32xf32, #tpu.memory_space<smem>>
    %c12_i32_19 = arith.constant 12 : i32
    %51 = arith.addi %1, %c12_i32_19 : i32
    %c0_i32_20 = arith.constant 0 : i32
    %52 = arith.addi %51, %c0_i32_20 : i32
    %53 = arith.index_cast %52 : i32 to index
    %54 = memref.load %arg2[%53] : memref<32xf32, #tpu.memory_space<smem>>
    %c12_i32_21 = arith.constant 12 : i32
    %55 = arith.addi %1, %c12_i32_21 : i32
    %c1_i32_22 = arith.constant 1 : i32
    %56 = arith.addi %55, %c1_i32_22 : i32
    %57 = arith.index_cast %56 : i32 to index
    %58 = memref.load %arg2[%57] : memref<32xf32, #tpu.memory_space<smem>>
    %c12_i32_23 = arith.constant 12 : i32
    %59 = arith.addi %1, %c12_i32_23 : i32
    %c2_i32_24 = arith.constant 2 : i32
    %60 = arith.addi %59, %c2_i32_24 : i32
    %61 = arith.index_cast %60 : i32 to index
    %62 = memref.load %arg2[%61] : memref<32xf32, #tpu.memory_space<smem>>
    %c12_i32_25 = arith.constant 12 : i32
    %63 = arith.addi %1, %c12_i32_25 : i32
    %c3_i32_26 = arith.constant 3 : i32
    %64 = arith.addi %63, %c3_i32_26 : i32
    %65 = arith.index_cast %64 : i32 to index
    %66 = memref.load %arg2[%65] : memref<32xf32, #tpu.memory_space<smem>>
    %c0_i32_27 = arith.constant 0 : i32
    %67 = arith.addi %2, %c0_i32_27 : i32
    %c0_i32_28 = arith.constant 0 : i32
    %68 = arith.addi %67, %c0_i32_28 : i32
    %69 = arith.index_cast %68 : i32 to index
    %70 = memref.load %arg3[%69] : memref<24xf32, #tpu.memory_space<smem>>
    %c0_i32_29 = arith.constant 0 : i32
    %71 = arith.addi %2, %c0_i32_29 : i32
    %c1_i32_30 = arith.constant 1 : i32
    %72 = arith.addi %71, %c1_i32_30 : i32
    %73 = arith.index_cast %72 : i32 to index
    %74 = memref.load %arg3[%73] : memref<24xf32, #tpu.memory_space<smem>>
    %c0_i32_31 = arith.constant 0 : i32
    %75 = arith.addi %2, %c0_i32_31 : i32
    %c2_i32_32 = arith.constant 2 : i32
    %76 = arith.addi %75, %c2_i32_32 : i32
    %77 = arith.index_cast %76 : i32 to index
    %78 = memref.load %arg3[%77] : memref<24xf32, #tpu.memory_space<smem>>
    %c0_i32_33 = arith.constant 0 : i32
    %79 = arith.addi %2, %c0_i32_33 : i32
    %c3_i32_34 = arith.constant 3 : i32
    %80 = arith.addi %79, %c3_i32_34 : i32
    %81 = arith.index_cast %80 : i32 to index
    %82 = memref.load %arg3[%81] : memref<24xf32, #tpu.memory_space<smem>>
    %c4_i32_35 = arith.constant 4 : i32
    %83 = arith.addi %2, %c4_i32_35 : i32
    %c0_i32_36 = arith.constant 0 : i32
    %84 = arith.addi %83, %c0_i32_36 : i32
    %85 = arith.index_cast %84 : i32 to index
    %86 = memref.load %arg3[%85] : memref<24xf32, #tpu.memory_space<smem>>
    %c4_i32_37 = arith.constant 4 : i32
    %87 = arith.addi %2, %c4_i32_37 : i32
    %c1_i32_38 = arith.constant 1 : i32
    %88 = arith.addi %87, %c1_i32_38 : i32
    %89 = arith.index_cast %88 : i32 to index
    %90 = memref.load %arg3[%89] : memref<24xf32, #tpu.memory_space<smem>>
    %c4_i32_39 = arith.constant 4 : i32
    %91 = arith.addi %2, %c4_i32_39 : i32
    %c2_i32_40 = arith.constant 2 : i32
    %92 = arith.addi %91, %c2_i32_40 : i32
    %93 = arith.index_cast %92 : i32 to index
    %94 = memref.load %arg3[%93] : memref<24xf32, #tpu.memory_space<smem>>
    %c4_i32_41 = arith.constant 4 : i32
    %95 = arith.addi %2, %c4_i32_41 : i32
    %c3_i32_42 = arith.constant 3 : i32
    %96 = arith.addi %95, %c3_i32_42 : i32
    %97 = arith.index_cast %96 : i32 to index
    %98 = memref.load %arg3[%97] : memref<24xf32, #tpu.memory_space<smem>>
    %c8_i32_43 = arith.constant 8 : i32
    %99 = arith.addi %2, %c8_i32_43 : i32
    %c0_i32_44 = arith.constant 0 : i32
    %100 = arith.addi %99, %c0_i32_44 : i32
    %101 = arith.index_cast %100 : i32 to index
    %102 = memref.load %arg3[%101] : memref<24xf32, #tpu.memory_space<smem>>
    %c8_i32_45 = arith.constant 8 : i32
    %103 = arith.addi %2, %c8_i32_45 : i32
    %c1_i32_46 = arith.constant 1 : i32
    %104 = arith.addi %103, %c1_i32_46 : i32
    %105 = arith.index_cast %104 : i32 to index
    %106 = memref.load %arg3[%105] : memref<24xf32, #tpu.memory_space<smem>>
    %c8_i32_47 = arith.constant 8 : i32
    %107 = arith.addi %2, %c8_i32_47 : i32
    %c2_i32_48 = arith.constant 2 : i32
    %108 = arith.addi %107, %c2_i32_48 : i32
    %109 = arith.index_cast %108 : i32 to index
    %110 = memref.load %arg3[%109] : memref<24xf32, #tpu.memory_space<smem>>
    %c8_i32_49 = arith.constant 8 : i32
    %111 = arith.addi %2, %c8_i32_49 : i32
    %c3_i32_50 = arith.constant 3 : i32
    %112 = arith.addi %111, %c3_i32_50 : i32
    %113 = arith.index_cast %112 : i32 to index
    %114 = memref.load %arg3[%113] : memref<24xf32, #tpu.memory_space<smem>>
    %115 = tpu.iota {dimensions = array<i32: 1>} : vector<16x128xi32>
    %116 = arith.sitofp %115 : vector<16x128xi32> to vector<16x128xf32>
    %cst = arith.constant 5.000000e-01 : f32
    %117 = vector.broadcast %cst : f32 to vector<16x128xf32>
    %118 = arith.addf %116, %117 : vector<16x128xf32>
    %119 = tpu.iota {dimensions = array<i32: 0>} : vector<16x128xi32>
    %120 = arith.sitofp %119 : vector<16x128xi32> to vector<16x128xf32>
    %cst_51 = arith.constant 5.000000e-01 : f32
    %121 = vector.broadcast %cst_51 : f32 to vector<16x128xf32>
    %122 = arith.addf %120, %121 : vector<16x128xf32>
    %123 = vector.broadcast %10 : f32 to vector<16x128xf32>
    %124 = arith.mulf %123, %118 : vector<16x128xf32>
    %125 = vector.broadcast %14 : f32 to vector<16x128xf32>
    %126 = arith.mulf %125, %122 : vector<16x128xf32>
    %127 = arith.addf %124, %126 : vector<16x128xf32>
    %128 = vector.broadcast %18 : f32 to vector<16x128xf32>
    %129 = arith.addf %127, %128 : vector<16x128xf32>
    %130 = vector.broadcast %26 : f32 to vector<16x128xf32>
    %131 = arith.mulf %130, %118 : vector<16x128xf32>
    %132 = vector.broadcast %30 : f32 to vector<16x128xf32>
    %133 = arith.mulf %132, %122 : vector<16x128xf32>
    %134 = arith.addf %131, %133 : vector<16x128xf32>
    %135 = vector.broadcast %34 : f32 to vector<16x128xf32>
    %136 = arith.addf %134, %135 : vector<16x128xf32>
    %137 = vector.broadcast %42 : f32 to vector<16x128xf32>
    %138 = arith.mulf %137, %118 : vector<16x128xf32>
    %139 = vector.broadcast %46 : f32 to vector<16x128xf32>
    %140 = arith.mulf %139, %122 : vector<16x128xf32>
    %141 = arith.addf %138, %140 : vector<16x128xf32>
    %142 = vector.broadcast %50 : f32 to vector<16x128xf32>
    %143 = arith.addf %141, %142 : vector<16x128xf32>
    %144 = vector.broadcast %58 : f32 to vector<16x128xf32>
    %145 = arith.mulf %144, %118 : vector<16x128xf32>
    %146 = vector.broadcast %62 : f32 to vector<16x128xf32>
    %147 = arith.mulf %146, %122 : vector<16x128xf32>
    %148 = arith.addf %145, %147 : vector<16x128xf32>
    %149 = vector.broadcast %66 : f32 to vector<16x128xf32>
    %150 = arith.addf %148, %149 : vector<16x128xf32>
    %c0_i32_52 = arith.constant 0 : i32
    %151 = arith.addi %0, %c0_i32_52 : i32
    %152 = arith.sitofp %151 : i32 to f32
    %cst_53 = arith.constant 5.000000e-01 : f32
    %153 = arith.addf %152, %cst_53 : f32
    %154 = arith.mulf %54, %153 : f32
    %155 = vector.broadcast %154 : f32 to vector<16x128xf32>
    %156 = arith.addf %150, %155 : vector<16x128xf32>
    %157 = math.absf %156 : vector<16x128xf32>
    %cst_54 = arith.constant 9.99999993E-9 : f32
    %158 = vector.broadcast %cst_54 : f32 to vector<16x128xf32>
    %159 = arith.cmpf ogt, %157, %158 : vector<16x128xf32>
    %cst_55 = arith.constant 9.99999993E-9 : f32
    %160 = vector.broadcast %cst_55 : f32 to vector<16x128xf32>
    %161 = arith.addf %156, %160 : vector<16x128xf32>
    %cst_56 = arith.constant 1.000000e+00 : f32
    %162 = vector.broadcast %cst_56 : f32 to vector<16x128xf32>
    %163 = arith.divf %162, %161 : vector<16x128xf32>
    %cst_57 = arith.constant 1.000000e+00 : f32
    %164 = vector.broadcast %cst_57 : f32 to vector<16x128xf32>
    %165 = arith.select %159, %163, %164 : vector<16x128xi1>, vector<16x128xf32>
    %166 = arith.mulf %6, %153 : f32
    %167 = vector.broadcast %166 : f32 to vector<16x128xf32>
    %168 = arith.addf %129, %167 : vector<16x128xf32>
    %169 = arith.mulf %168, %165 : vector<16x128xf32>
    %170 = arith.mulf %22, %153 : f32
    %171 = vector.broadcast %170 : f32 to vector<16x128xf32>
    %172 = arith.addf %136, %171 : vector<16x128xf32>
    %173 = arith.mulf %172, %165 : vector<16x128xf32>
    %174 = arith.mulf %38, %153 : f32
    %175 = vector.broadcast %174 : f32 to vector<16x128xf32>
    %176 = arith.addf %143, %175 : vector<16x128xf32>
    %177 = arith.mulf %176, %165 : vector<16x128xf32>
    %178 = vector.broadcast %70 : f32 to vector<16x128xf32>
    %179 = arith.mulf %178, %169 : vector<16x128xf32>
    %180 = vector.broadcast %74 : f32 to vector<16x128xf32>
    %181 = arith.mulf %180, %173 : vector<16x128xf32>
    %182 = arith.addf %179, %181 : vector<16x128xf32>
    %183 = vector.broadcast %78 : f32 to vector<16x128xf32>
    %184 = arith.mulf %183, %177 : vector<16x128xf32>
    %185 = arith.addf %182, %184 : vector<16x128xf32>
    %186 = vector.broadcast %82 : f32 to vector<16x128xf32>
    %187 = arith.addf %185, %186 : vector<16x128xf32>
    %188 = vector.broadcast %86 : f32 to vector<16x128xf32>
    %189 = arith.mulf %188, %169 : vector<16x128xf32>
    %190 = vector.broadcast %90 : f32 to vector<16x128xf32>
    %191 = arith.mulf %190, %173 : vector<16x128xf32>
    %192 = arith.addf %189, %191 : vector<16x128xf32>
    %193 = vector.broadcast %94 : f32 to vector<16x128xf32>
    %194 = arith.mulf %193, %177 : vector<16x128xf32>
    %195 = arith.addf %192, %194 : vector<16x128xf32>
    %196 = vector.broadcast %98 : f32 to vector<16x128xf32>
    %197 = arith.addf %195, %196 : vector<16x128xf32>
    %198 = vector.broadcast %102 : f32 to vector<16x128xf32>
    %199 = arith.mulf %198, %169 : vector<16x128xf32>
    %200 = vector.broadcast %106 : f32 to vector<16x128xf32>
    %201 = arith.mulf %200, %173 : vector<16x128xf32>
    %202 = arith.addf %199, %201 : vector<16x128xf32>
    %203 = vector.broadcast %110 : f32 to vector<16x128xf32>
    %204 = arith.mulf %203, %177 : vector<16x128xf32>
    %205 = arith.addf %202, %204 : vector<16x128xf32>
    %206 = vector.broadcast %114 : f32 to vector<16x128xf32>
    %207 = arith.addf %205, %206 : vector<16x128xf32>
    %208 = math.absf %207 : vector<16x128xf32>
    %cst_58 = arith.constant 9.99999993E-9 : f32
    %209 = vector.broadcast %cst_58 : f32 to vector<16x128xf32>
    %210 = arith.cmpf ogt, %208, %209 : vector<16x128xf32>
    %cst_59 = arith.constant 9.99999993E-9 : f32
    %211 = vector.broadcast %cst_59 : f32 to vector<16x128xf32>
    %212 = arith.addf %207, %211 : vector<16x128xf32>
    %cst_60 = arith.constant 1.000000e+00 : f32
    %213 = vector.broadcast %cst_60 : f32 to vector<16x128xf32>
    %214 = arith.divf %213, %212 : vector<16x128xf32>
    %cst_61 = arith.constant 1.000000e+00 : f32
    %215 = vector.broadcast %cst_61 : f32 to vector<16x128xf32>
    %216 = arith.select %210, %214, %215 : vector<16x128xi1>, vector<16x128xf32>
    %217 = arith.mulf %187, %216 : vector<16x128xf32>
    %218 = arith.mulf %197, %216 : vector<16x128xf32>
    %219 = vector.broadcast %114 : f32 to vector<16x128xf32>
    %220 = arith.subf %207, %219 : vector<16x128xf32>
    %cst_62 = arith.constant 2.000000e+00 : f32
    %221 = vector.broadcast %cst_62 : f32 to vector<16x128xf32>
    %222 = arith.subf %220, %221 : vector<16x128xf32>
    %cst_63 = arith.constant 146.428574 : f32
    %223 = vector.broadcast %cst_63 : f32 to vector<16x128xf32>
    %224 = arith.mulf %222, %223 : vector<16x128xf32>
    %cst_64 = arith.constant 1.000000e+00 : f32
    %225 = vector.broadcast %cst_64 : f32 to vector<16x128xf32>
    %226 = arith.addf %225, %224 : vector<16x128xf32>
    %227 = math.sqrt %226 : vector<16x128xf32>
    %cst_65 = arith.constant 5.000000e-01 : f32
    %228 = vector.broadcast %cst_65 : f32 to vector<16x128xf32>
    %229 = arith.mulf %228, %227 : vector<16x128xf32>
    %cst_66 = arith.constant -5.000000e-01 : f32
    %230 = vector.broadcast %cst_66 : f32 to vector<16x128xf32>
    %231 = arith.addf %230, %229 : vector<16x128xf32>
    %cst_67 = arith.constant 0.000000e+00 : f32
    %232 = vector.broadcast %cst_67 : f32 to vector<16x128xf32>
    %233 = arith.cmpf olt, %231, %232 : vector<16x128xf32>
    %cst_68 = arith.constant 4.000000e+01 : f32
    %234 = vector.broadcast %cst_68 : f32 to vector<16x128xf32>
    %235 = arith.cmpf ogt, %231, %234 : vector<16x128xf32>
    %236 = arith.ori %233, %235 : vector<16x128xi1>
    %237 = tpu.weird %231 : vector<16x128xf32> -> vector<16x128xi1>
    %cst_69 = arith.constant dense<true> : vector<16x128xi1>
    %238 = arith.xori %237, %cst_69 : vector<16x128xi1>
    %cst_70 = arith.constant dense<true> : vector<16x128xi1>
    %239 = arith.xori %238, %cst_70 : vector<16x128xi1>
    %240 = arith.ori %236, %239 : vector<16x128xi1>
    %cst_71 = arith.constant 4.000000e+01 : f32
    %241 = vector.broadcast %cst_71 : f32 to vector<16x128xf32>
    %242 = arith.select %240, %241, %231 : vector<16x128xi1>, vector<16x128xf32>
    %243 = math.floor %242 : vector<16x128xf32>
    %cst_72 = arith.constant 0.00557103055 : f32
    %244 = vector.broadcast %cst_72 : f32 to vector<16x128xf32>
    %245 = arith.mulf %217, %244 : vector<16x128xf32>
    %cst_73 = arith.constant 1.000000e+00 : f32
    %246 = vector.broadcast %cst_73 : f32 to vector<16x128xf32>
    %247 = arith.subf %245, %246 : vector<16x128xf32>
    %cst_74 = arith.constant 0.00836820062 : f32
    %248 = vector.broadcast %cst_74 : f32 to vector<16x128xf32>
    %249 = arith.mulf %218, %248 : vector<16x128xf32>
    %cst_75 = arith.constant 1.000000e+00 : f32
    %250 = vector.broadcast %cst_75 : f32 to vector<16x128xf32>
    %251 = arith.subf %249, %250 : vector<16x128xf32>
    %cst_76 = arith.constant 0.051282052 : f32
    %252 = vector.broadcast %cst_76 : f32 to vector<16x128xf32>
    %253 = arith.mulf %243, %252 : vector<16x128xf32>
    %cst_77 = arith.constant 1.000000e+00 : f32
    %254 = vector.broadcast %cst_77 : f32 to vector<16x128xf32>
    %255 = arith.subf %253, %254 : vector<16x128xf32>
    %256 = tpu.weird %247 : vector<16x128xf32> -> vector<16x128xi1>
    %cst_78 = arith.constant dense<true> : vector<16x128xi1>
    %257 = arith.xori %256, %cst_78 : vector<16x128xi1>
    %cst_79 = arith.constant -2.000000e+00 : f32
    %258 = vector.broadcast %cst_79 : f32 to vector<16x128xf32>
    %259 = arith.select %257, %247, %258 : vector<16x128xi1>, vector<16x128xf32>
    %c0 = arith.constant 0 : index
    %c0_80 = arith.constant 0 : index
    %c0_81 = arith.constant 0 : index
    %c0_82 = arith.constant 0 : index
    %c0_83 = arith.constant 0 : index
    %260 = vector.load %arg4[%c0, %c0_80, %c0_81, %c0_82, %c0_83] : memref<1x8x3x16x128xf32, #tpu.memory_space<vmem>>, vector<1x1x1x16x128xf32>
    %261 = vector.shape_cast %260 : vector<1x1x1x16x128xf32> to vector<16x128xf32>
    %262 = vector.shape_cast %259 : vector<16x128xf32> to vector<1x1x1x16x128xf32>
    tpu.vector_store %arg4[%c0, %c0_80, %c0_81, %c0_82, %c0_83], %262 {strides = array<i32>} : memref<1x8x3x16x128xf32, #tpu.memory_space<vmem>>, vector<1x1x1x16x128xf32>,
    %263 = tpu.weird %251 : vector<16x128xf32> -> vector<16x128xi1>
    %cst_84 = arith.constant dense<true> : vector<16x128xi1>
    %264 = arith.xori %263, %cst_84 : vector<16x128xi1>
    %cst_85 = arith.constant -2.000000e+00 : f32
    %265 = vector.broadcast %cst_85 : f32 to vector<16x128xf32>
    %266 = arith.select %264, %251, %265 : vector<16x128xi1>, vector<16x128xf32>
    %c0_86 = arith.constant 0 : index
    %c0_87 = arith.constant 0 : index
    %c1 = arith.constant 1 : index
    %c0_88 = arith.constant 0 : index
    %c0_89 = arith.constant 0 : index
    %267 = vector.load %arg4[%c0_86, %c0_87, %c1, %c0_88, %c0_89] : memref<1x8x3x16x128xf32, #tpu.memory_space<vmem>>, vector<1x1x1x16x128xf32>
    %268 = vector.shape_cast %267 : vector<1x1x1x16x128xf32> to vector<16x128xf32>
    %269 = vector.shape_cast %266 : vector<16x128xf32> to vector<1x1x1x16x128xf32>
    tpu.vector_store %arg4[%c0_86, %c0_87, %c1, %c0_88, %c0_89], %269 {strides = array<i32>} : memref<1x8x3x16x128xf32, #tpu.memory_space<vmem>>, vector<1x1x1x16x128xf32>,
    %c0_90 = arith.constant 0 : index
    %c0_91 = arith.constant 0 : index
    %c2 = arith.constant 2 : index
    %c0_92 = arith.constant 0 : index
    %c0_93 = arith.constant 0 : index
    %270 = vector.load %arg4[%c0_90, %c0_91, %c2, %c0_92, %c0_93] : memref<1x8x3x16x128xf32, #tpu.memory_space<vmem>>, vector<1x1x1x16x128xf32>
    %271 = vector.shape_cast %270 : vector<1x1x1x16x128xf32> to vector<16x128xf32>
    %272 = vector.shape_cast %255 : vector<16x128xf32> to vector<1x1x1x16x128xf32>
    tpu.vector_store %arg4[%c0_90, %c0_91, %c2, %c0_92, %c0_93], %272 {strides = array<i32>} : memref<1x8x3x16x128xf32, #tpu.memory_space<vmem>>, vector<1x1x1x16x128xf32>,
    %c1_i32_94 = arith.constant 1 : i32
    %273 = arith.addi %0, %c1_i32_94 : i32
    %274 = arith.sitofp %273 : i32 to f32
    %cst_95 = arith.constant 5.000000e-01 : f32
    %275 = arith.addf %274, %cst_95 : f32
    %276 = arith.mulf %54, %275 : f32
    %277 = vector.broadcast %276 : f32 to vector<16x128xf32>
    %278 = arith.addf %150, %277 : vector<16x128xf32>
    %279 = math.absf %278 : vector<16x128xf32>
    %cst_96 = arith.constant 9.99999993E-9 : f32
    %280 = vector.broadcast %cst_96 : f32 to vector<16x128xf32>
    %281 = arith.cmpf ogt, %279, %280 : vector<16x128xf32>
    %cst_97 = arith.constant 9.99999993E-9 : f32
    %282 = vector.broadcast %cst_97 : f32 to vector<16x128xf32>
    %283 = arith.addf %278, %282 : vector<16x128xf32>
    %cst_98 = arith.constant 1.000000e+00 : f32
    %284 = vector.broadcast %cst_98 : f32 to vector<16x128xf32>
    %285 = arith.divf %284, %283 : vector<16x128xf32>
    %cst_99 = arith.constant 1.000000e+00 : f32
    %286 = vector.broadcast %cst_99 : f32 to vector<16x128xf32>
    %287 = arith.select %281, %285, %286 : vector<16x128xi1>, vector<16x128xf32>
    %288 = arith.mulf %6, %275 : f32
    %289 = vector.broadcast %288 : f32 to vector<16x128xf32>
    %290 = arith.addf %129, %289 : vector<16x128xf32>
    %291 = arith.mulf %290, %287 : vector<16x128xf32>
    %292 = arith.mulf %22, %275 : f32
    %293 = vector.broadcast %292 : f32 to vector<16x128xf32>
    %294 = arith.addf %136, %293 : vector<16x128xf32>
    %295 = arith.mulf %294, %287 : vector<16x128xf32>
    %296 = arith.mulf %38, %275 : f32
    %297 = vector.broadcast %296 : f32 to vector<16x128xf32>
    %298 = arith.addf %143, %297 : vector<16x128xf32>
    %299 = arith.mulf %298, %287 : vector<16x128xf32>
    %300 = vector.broadcast %70 : f32 to vector<16x128xf32>
    %301 = arith.mulf %300, %291 : vector<16x128xf32>
    %302 = vector.broadcast %74 : f32 to vector<16x128xf32>
    %303 = arith.mulf %302, %295 : vector<16x128xf32>
    %304 = arith.addf %301, %303 : vector<16x128xf32>
    %305 = vector.broadcast %78 : f32 to vector<16x128xf32>
    %306 = arith.mulf %305, %299 : vector<16x128xf32>
    %307 = arith.addf %304, %306 : vector<16x128xf32>
    %308 = vector.broadcast %82 : f32 to vector<16x128xf32>
    %309 = arith.addf %307, %308 : vector<16x128xf32>
    %310 = vector.broadcast %86 : f32 to vector<16x128xf32>
    %311 = arith.mulf %310, %291 : vector<16x128xf32>
    %312 = vector.broadcast %90 : f32 to vector<16x128xf32>
    %313 = arith.mulf %312, %295 : vector<16x128xf32>
    %314 = arith.addf %311, %313 : vector<16x128xf32>
    %315 = vector.broadcast %94 : f32 to vector<16x128xf32>
    %316 = arith.mulf %315, %299 : vector<16x128xf32>
    %317 = arith.addf %314, %316 : vector<16x128xf32>
    %318 = vector.broadcast %98 : f32 to vector<16x128xf32>
    %319 = arith.addf %317, %318 : vector<16x128xf32>
    %320 = vector.broadcast %102 : f32 to vector<16x128xf32>
    %321 = arith.mulf %320, %291 : vector<16x128xf32>
    %322 = vector.broadcast %106 : f32 to vector<16x128xf32>
    %323 = arith.mulf %322, %295 : vector<16x128xf32>
    %324 = arith.addf %321, %323 : vector<16x128xf32>
    %325 = vector.broadcast %110 : f32 to vector<16x128xf32>
    %326 = arith.mulf %325, %299 : vector<16x128xf32>
    %327 = arith.addf %324, %326 : vector<16x128xf32>
    %328 = vector.broadcast %114 : f32 to vector<16x128xf32>
    %329 = arith.addf %327, %328 : vector<16x128xf32>
    %330 = math.absf %329 : vector<16x128xf32>
    %cst_100 = arith.constant 9.99999993E-9 : f32
    %331 = vector.broadcast %cst_100 : f32 to vector<16x128xf32>
    %332 = arith.cmpf ogt, %330, %331 : vector<16x128xf32>
    %cst_101 = arith.constant 9.99999993E-9 : f32
    %333 = vector.broadcast %cst_101 : f32 to vector<16x128xf32>
    %334 = arith.addf %329, %333 : vector<16x128xf32>
    %cst_102 = arith.constant 1.000000e+00 : f32
    %335 = vector.broadcast %cst_102 : f32 to vector<16x128xf32>
    %336 = arith.divf %335, %334 : vector<16x128xf32>
    %cst_103 = arith.constant 1.000000e+00 : f32
    %337 = vector.broadcast %cst_103 : f32 to vector<16x128xf32>
    %338 = arith.select %332, %336, %337 : vector<16x128xi1>, vector<16x128xf32>
    %339 = arith.mulf %309, %338 : vector<16x128xf32>
    %340 = arith.mulf %319, %338 : vector<16x128xf32>
    %341 = vector.broadcast %114 : f32 to vector<16x128xf32>
    %342 = arith.subf %329, %341 : vector<16x128xf32>
    %cst_104 = arith.constant 2.000000e+00 : f32
    %343 = vector.broadcast %cst_104 : f32 to vector<16x128xf32>
    %344 = arith.subf %342, %343 : vector<16x128xf32>
    %cst_105 = arith.constant 146.428574 : f32
    %345 = vector.broadcast %cst_105 : f32 to vector<16x128xf32>
    %346 = arith.mulf %344, %345 : vector<16x128xf32>
    %cst_106 = arith.constant 1.000000e+00 : f32
    %347 = vector.broadcast %cst_106 : f32 to vector<16x128xf32>
    %348 = arith.addf %347, %346 : vector<16x128xf32>
    %349 = math.sqrt %348 : vector<16x128xf32>
    %cst_107 = arith.constant 5.000000e-01 : f32
    %350 = vector.broadcast %cst_107 : f32 to vector<16x128xf32>
    %351 = arith.mulf %350, %349 : vector<16x128xf32>
    %cst_108 = arith.constant -5.000000e-01 : f32
    %352 = vector.broadcast %cst_108 : f32 to vector<16x128xf32>
    %353 = arith.addf %352, %351 : vector<16x128xf32>
    %cst_109 = arith.constant 0.000000e+00 : f32
    %354 = vector.broadcast %cst_109 : f32 to vector<16x128xf32>
    %355 = arith.cmpf olt, %353, %354 : vector<16x128xf32>
    %cst_110 = arith.constant 4.000000e+01 : f32
    %356 = vector.broadcast %cst_110 : f32 to vector<16x128xf32>
    %357 = arith.cmpf ogt, %353, %356 : vector<16x128xf32>
    %358 = arith.ori %355, %357 : vector<16x128xi1>
    %359 = tpu.weird %353 : vector<16x128xf32> -> vector<16x128xi1>
    %cst_111 = arith.constant dense<true> : vector<16x128xi1>
    %360 = arith.xori %359, %cst_111 : vector<16x128xi1>
    %cst_112 = arith.constant dense<true> : vector<16x128xi1>
    %361 = arith.xori %360, %cst_112 : vector<16x128xi1>
    %362 = arith.ori %358, %361 : vector<16x128xi1>
    %cst_113 = arith.constant 4.000000e+01 : f32
    %363 = vector.broadcast %cst_113 : f32 to vector<16x128xf32>
    %364 = arith.select %362, %363, %353 : vector<16x128xi1>, vector<16x128xf32>
    %365 = math.floor %364 : vector<16x128xf32>
    %cst_114 = arith.constant 0.00557103055 : f32
    %366 = vector.broadcast %cst_114 : f32 to vector<16x128xf32>
    %367 = arith.mulf %339, %366 : vector<16x128xf32>
    %cst_115 = arith.constant 1.000000e+00 : f32
    %368 = vector.broadcast %cst_115 : f32 to vector<16x128xf32>
    %369 = arith.subf %367, %368 : vector<16x128xf32>
    %cst_116 = arith.constant 0.00836820062 : f32
    %370 = vector.broadcast %cst_116 : f32 to vector<16x128xf32>
    %371 = arith.mulf %340, %370 : vector<16x128xf32>
    %cst_117 = arith.constant 1.000000e+00 : f32
    %372 = vector.broadcast %cst_117 : f32 to vector<16x128xf32>
    %373 = arith.subf %371, %372 : vector<16x128xf32>
    %cst_118 = arith.constant 0.051282052 : f32
    %374 = vector.broadcast %cst_118 : f32 to vector<16x128xf32>
    %375 = arith.mulf %365, %374 : vector<16x128xf32>
    %cst_119 = arith.constant 1.000000e+00 : f32
    %376 = vector.broadcast %cst_119 : f32 to vector<16x128xf32>
    %377 = arith.subf %375, %376 : vector<16x128xf32>
    %378 = tpu.weird %369 : vector<16x128xf32> -> vector<16x128xi1>
    %cst_120 = arith.constant dense<true> : vector<16x128xi1>
    %379 = arith.xori %378, %cst_120 : vector<16x128xi1>
    %cst_121 = arith.constant -2.000000e+00 : f32
    %380 = vector.broadcast %cst_121 : f32 to vector<16x128xf32>
    %381 = arith.select %379, %369, %380 : vector<16x128xi1>, vector<16x128xf32>
    %c0_122 = arith.constant 0 : index
    %c1_123 = arith.constant 1 : index
    %c0_124 = arith.constant 0 : index
    %c0_125 = arith.constant 0 : index
    %c0_126 = arith.constant 0 : index
    %382 = vector.load %arg4[%c0_122, %c1_123, %c0_124, %c0_125, %c0_126] : memref<1x8x3x16x128xf32, #tpu.memory_space<vmem>>, vector<1x1x1x16x128xf32>
    %383 = vector.shape_cast %382 : vector<1x1x1x16x128xf32> to vector<16x128xf32>
    %384 = vector.shape_cast %381 : vector<16x128xf32> to vector<1x1x1x16x128xf32>
    tpu.vector_store %arg4[%c0_122, %c1_123, %c0_124, %c0_125, %c0_126], %384 {strides = array<i32>} : memref<1x8x3x16x128xf32, #tpu.memory_space<vmem>>, vector<1x1x1x16x128xf32>,
    %385 = tpu.weird %373 : vector<16x128xf32> -> vector<16x128xi1>
    %cst_127 = arith.constant dense<true> : vector<16x128xi1>
    %386 = arith.xori %385, %cst_127 : vector<16x128xi1>
    %cst_128 = arith.constant -2.000000e+00 : f32
    %387 = vector.broadcast %cst_128 : f32 to vector<16x128xf32>
    %388 = arith.select %386, %373, %387 : vector<16x128xi1>, vector<16x128xf32>
    %c0_129 = arith.constant 0 : index
    %c1_130 = arith.constant 1 : index
    %c1_131 = arith.constant 1 : index
    %c0_132 = arith.constant 0 : index
    %c0_133 = arith.constant 0 : index
    %389 = vector.load %arg4[%c0_129, %c1_130, %c1_131, %c0_132, %c0_133] : memref<1x8x3x16x128xf32, #tpu.memory_space<vmem>>, vector<1x1x1x16x128xf32>
    %390 = vector.shape_cast %389 : vector<1x1x1x16x128xf32> to vector<16x128xf32>
    %391 = vector.shape_cast %388 : vector<16x128xf32> to vector<1x1x1x16x128xf32>
    tpu.vector_store %arg4[%c0_129, %c1_130, %c1_131, %c0_132, %c0_133], %391 {strides = array<i32>} : memref<1x8x3x16x128xf32, #tpu.memory_space<vmem>>, vector<1x1x1x16x128xf32>,
    %c0_134 = arith.constant 0 : index
    %c1_135 = arith.constant 1 : index
    %c2_136 = arith.constant 2 : index
    %c0_137 = arith.constant 0 : index
    %c0_138 = arith.constant 0 : index
    %392 = vector.load %arg4[%c0_134, %c1_135, %c2_136, %c0_137, %c0_138] : memref<1x8x3x16x128xf32, #tpu.memory_space<vmem>>, vector<1x1x1x16x128xf32>
    %393 = vector.shape_cast %392 : vector<1x1x1x16x128xf32> to vector<16x128xf32>
    %394 = vector.shape_cast %377 : vector<16x128xf32> to vector<1x1x1x16x128xf32>
    tpu.vector_store %arg4[%c0_134, %c1_135, %c2_136, %c0_137, %c0_138], %394 {strides = array<i32>} : memref<1x8x3x16x128xf32, #tpu.memory_space<vmem>>, vector<1x1x1x16x128xf32>,
    %c2_i32_139 = arith.constant 2 : i32
    %395 = arith.addi %0, %c2_i32_139 : i32
    %396 = arith.sitofp %395 : i32 to f32
    %cst_140 = arith.constant 5.000000e-01 : f32
    %397 = arith.addf %396, %cst_140 : f32
    %398 = arith.mulf %54, %397 : f32
    %399 = vector.broadcast %398 : f32 to vector<16x128xf32>
    %400 = arith.addf %150, %399 : vector<16x128xf32>
    %401 = math.absf %400 : vector<16x128xf32>
    %cst_141 = arith.constant 9.99999993E-9 : f32
    %402 = vector.broadcast %cst_141 : f32 to vector<16x128xf32>
    %403 = arith.cmpf ogt, %401, %402 : vector<16x128xf32>
    %cst_142 = arith.constant 9.99999993E-9 : f32
    %404 = vector.broadcast %cst_142 : f32 to vector<16x128xf32>
    %405 = arith.addf %400, %404 : vector<16x128xf32>
    %cst_143 = arith.constant 1.000000e+00 : f32
    %406 = vector.broadcast %cst_143 : f32 to vector<16x128xf32>
    %407 = arith.divf %406, %405 : vector<16x128xf32>
    %cst_144 = arith.constant 1.000000e+00 : f32
    %408 = vector.broadcast %cst_144 : f32 to vector<16x128xf32>
    %409 = arith.select %403, %407, %408 : vector<16x128xi1>, vector<16x128xf32>
    %410 = arith.mulf %6, %397 : f32
    %411 = vector.broadcast %410 : f32 to vector<16x128xf32>
    %412 = arith.addf %129, %411 : vector<16x128xf32>
    %413 = arith.mulf %412, %409 : vector<16x128xf32>
    %414 = arith.mulf %22, %397 : f32
    %415 = vector.broadcast %414 : f32 to vector<16x128xf32>
    %416 = arith.addf %136, %415 : vector<16x128xf32>
    %417 = arith.mulf %416, %409 : vector<16x128xf32>
    %418 = arith.mulf %38, %397 : f32
    %419 = vector.broadcast %418 : f32 to vector<16x128xf32>
    %420 = arith.addf %143, %419 : vector<16x128xf32>
    %421 = arith.mulf %420, %409 : vector<16x128xf32>
    %422 = vector.broadcast %70 : f32 to vector<16x128xf32>
    %423 = arith.mulf %422, %413 : vector<16x128xf32>
    %424 = vector.broadcast %74 : f32 to vector<16x128xf32>
    %425 = arith.mulf %424, %417 : vector<16x128xf32>
    %426 = arith.addf %423, %425 : vector<16x128xf32>
    %427 = vector.broadcast %78 : f32 to vector<16x128xf32>
    %428 = arith.mulf %427, %421 : vector<16x128xf32>
    %429 = arith.addf %426, %428 : vector<16x128xf32>
    %430 = vector.broadcast %82 : f32 to vector<16x128xf32>
    %431 = arith.addf %429, %430 : vector<16x128xf32>
    %432 = vector.broadcast %86 : f32 to vector<16x128xf32>
    %433 = arith.mulf %432, %413 : vector<16x128xf32>
    %434 = vector.broadcast %90 : f32 to vector<16x128xf32>
    %435 = arith.mulf %434, %417 : vector<16x128xf32>
    %436 = arith.addf %433, %435 : vector<16x128xf32>
    %437 = vector.broadcast %94 : f32 to vector<16x128xf32>
    %438 = arith.mulf %437, %421 : vector<16x128xf32>
    %439 = arith.addf %436, %438 : vector<16x128xf32>
    %440 = vector.broadcast %98 : f32 to vector<16x128xf32>
    %441 = arith.addf %439, %440 : vector<16x128xf32>
    %442 = vector.broadcast %102 : f32 to vector<16x128xf32>
    %443 = arith.mulf %442, %413 : vector<16x128xf32>
    %444 = vector.broadcast %106 : f32 to vector<16x128xf32>
    %445 = arith.mulf %444, %417 : vector<16x128xf32>
    %446 = arith.addf %443, %445 : vector<16x128xf32>
    %447 = vector.broadcast %110 : f32 to vector<16x128xf32>
    %448 = arith.mulf %447, %421 : vector<16x128xf32>
    %449 = arith.addf %446, %448 : vector<16x128xf32>
    %450 = vector.broadcast %114 : f32 to vector<16x128xf32>
    %451 = arith.addf %449, %450 : vector<16x128xf32>
    %452 = math.absf %451 : vector<16x128xf32>
    %cst_145 = arith.constant 9.99999993E-9 : f32
    %453 = vector.broadcast %cst_145 : f32 to vector<16x128xf32>
    %454 = arith.cmpf ogt, %452, %453 : vector<16x128xf32>
    %cst_146 = arith.constant 9.99999993E-9 : f32
    %455 = vector.broadcast %cst_146 : f32 to vector<16x128xf32>
    %456 = arith.addf %451, %455 : vector<16x128xf32>
    %cst_147 = arith.constant 1.000000e+00 : f32
    %457 = vector.broadcast %cst_147 : f32 to vector<16x128xf32>
    %458 = arith.divf %457, %456 : vector<16x128xf32>
    %cst_148 = arith.constant 1.000000e+00 : f32
    %459 = vector.broadcast %cst_148 : f32 to vector<16x128xf32>
    %460 = arith.select %454, %458, %459 : vector<16x128xi1>, vector<16x128xf32>
    %461 = arith.mulf %431, %460 : vector<16x128xf32>
    %462 = arith.mulf %441, %460 : vector<16x128xf32>
    %463 = vector.broadcast %114 : f32 to vector<16x128xf32>
    %464 = arith.subf %451, %463 : vector<16x128xf32>
    %cst_149 = arith.constant 2.000000e+00 : f32
    %465 = vector.broadcast %cst_149 : f32 to vector<16x128xf32>
    %466 = arith.subf %464, %465 : vector<16x128xf32>
    %cst_150 = arith.constant 146.428574 : f32
    %467 = vector.broadcast %cst_150 : f32 to vector<16x128xf32>
    %468 = arith.mulf %466, %467 : vector<16x128xf32>
    %cst_151 = arith.constant 1.000000e+00 : f32
    %469 = vector.broadcast %cst_151 : f32 to vector<16x128xf32>
    %470 = arith.addf %469, %468 : vector<16x128xf32>
    %471 = math.sqrt %470 : vector<16x128xf32>
    %cst_152 = arith.constant 5.000000e-01 : f32
    %472 = vector.broadcast %cst_152 : f32 to vector<16x128xf32>
    %473 = arith.mulf %472, %471 : vector<16x128xf32>
    %cst_153 = arith.constant -5.000000e-01 : f32
    %474 = vector.broadcast %cst_153 : f32 to vector<16x128xf32>
    %475 = arith.addf %474, %473 : vector<16x128xf32>
    %cst_154 = arith.constant 0.000000e+00 : f32
    %476 = vector.broadcast %cst_154 : f32 to vector<16x128xf32>
    %477 = arith.cmpf olt, %475, %476 : vector<16x128xf32>
    %cst_155 = arith.constant 4.000000e+01 : f32
    %478 = vector.broadcast %cst_155 : f32 to vector<16x128xf32>
    %479 = arith.cmpf ogt, %475, %478 : vector<16x128xf32>
    %480 = arith.ori %477, %479 : vector<16x128xi1>
    %481 = tpu.weird %475 : vector<16x128xf32> -> vector<16x128xi1>
    %cst_156 = arith.constant dense<true> : vector<16x128xi1>
    %482 = arith.xori %481, %cst_156 : vector<16x128xi1>
    %cst_157 = arith.constant dense<true> : vector<16x128xi1>
    %483 = arith.xori %482, %cst_157 : vector<16x128xi1>
    %484 = arith.ori %480, %483 : vector<16x128xi1>
    %cst_158 = arith.constant 4.000000e+01 : f32
    %485 = vector.broadcast %cst_158 : f32 to vector<16x128xf32>
    %486 = arith.select %484, %485, %475 : vector<16x128xi1>, vector<16x128xf32>
    %487 = math.floor %486 : vector<16x128xf32>
    %cst_159 = arith.constant 0.00557103055 : f32
    %488 = vector.broadcast %cst_159 : f32 to vector<16x128xf32>
    %489 = arith.mulf %461, %488 : vector<16x128xf32>
    %cst_160 = arith.constant 1.000000e+00 : f32
    %490 = vector.broadcast %cst_160 : f32 to vector<16x128xf32>
    %491 = arith.subf %489, %490 : vector<16x128xf32>
    %cst_161 = arith.constant 0.00836820062 : f32
    %492 = vector.broadcast %cst_161 : f32 to vector<16x128xf32>
    %493 = arith.mulf %462, %492 : vector<16x128xf32>
    %cst_162 = arith.constant 1.000000e+00 : f32
    %494 = vector.broadcast %cst_162 : f32 to vector<16x128xf32>
    %495 = arith.subf %493, %494 : vector<16x128xf32>
    %cst_163 = arith.constant 0.051282052 : f32
    %496 = vector.broadcast %cst_163 : f32 to vector<16x128xf32>
    %497 = arith.mulf %487, %496 : vector<16x128xf32>
    %cst_164 = arith.constant 1.000000e+00 : f32
    %498 = vector.broadcast %cst_164 : f32 to vector<16x128xf32>
    %499 = arith.subf %497, %498 : vector<16x128xf32>
    %500 = tpu.weird %491 : vector<16x128xf32> -> vector<16x128xi1>
    %cst_165 = arith.constant dense<true> : vector<16x128xi1>
    %501 = arith.xori %500, %cst_165 : vector<16x128xi1>
    %cst_166 = arith.constant -2.000000e+00 : f32
    %502 = vector.broadcast %cst_166 : f32 to vector<16x128xf32>
    %503 = arith.select %501, %491, %502 : vector<16x128xi1>, vector<16x128xf32>
    %c0_167 = arith.constant 0 : index
    %c2_168 = arith.constant 2 : index
    %c0_169 = arith.constant 0 : index
    %c0_170 = arith.constant 0 : index
    %c0_171 = arith.constant 0 : index
    %504 = vector.load %arg4[%c0_167, %c2_168, %c0_169, %c0_170, %c0_171] : memref<1x8x3x16x128xf32, #tpu.memory_space<vmem>>, vector<1x1x1x16x128xf32>
    %505 = vector.shape_cast %504 : vector<1x1x1x16x128xf32> to vector<16x128xf32>
    %506 = vector.shape_cast %503 : vector<16x128xf32> to vector<1x1x1x16x128xf32>
    tpu.vector_store %arg4[%c0_167, %c2_168, %c0_169, %c0_170, %c0_171], %506 {strides = array<i32>} : memref<1x8x3x16x128xf32, #tpu.memory_space<vmem>>, vector<1x1x1x16x128xf32>,
    %507 = tpu.weird %495 : vector<16x128xf32> -> vector<16x128xi1>
    %cst_172 = arith.constant dense<true> : vector<16x128xi1>
    %508 = arith.xori %507, %cst_172 : vector<16x128xi1>
    %cst_173 = arith.constant -2.000000e+00 : f32
    %509 = vector.broadcast %cst_173 : f32 to vector<16x128xf32>
    %510 = arith.select %508, %495, %509 : vector<16x128xi1>, vector<16x128xf32>
    %c0_174 = arith.constant 0 : index
    %c2_175 = arith.constant 2 : index
    %c1_176 = arith.constant 1 : index
    %c0_177 = arith.constant 0 : index
    %c0_178 = arith.constant 0 : index
    %511 = vector.load %arg4[%c0_174, %c2_175, %c1_176, %c0_177, %c0_178] : memref<1x8x3x16x128xf32, #tpu.memory_space<vmem>>, vector<1x1x1x16x128xf32>
    %512 = vector.shape_cast %511 : vector<1x1x1x16x128xf32> to vector<16x128xf32>
    %513 = vector.shape_cast %510 : vector<16x128xf32> to vector<1x1x1x16x128xf32>
    tpu.vector_store %arg4[%c0_174, %c2_175, %c1_176, %c0_177, %c0_178], %513 {strides = array<i32>} : memref<1x8x3x16x128xf32, #tpu.memory_space<vmem>>, vector<1x1x1x16x128xf32>,
    %c0_179 = arith.constant 0 : index
    %c2_180 = arith.constant 2 : index
    %c2_181 = arith.constant 2 : index
    %c0_182 = arith.constant 0 : index
    %c0_183 = arith.constant 0 : index
    %514 = vector.load %arg4[%c0_179, %c2_180, %c2_181, %c0_182, %c0_183] : memref<1x8x3x16x128xf32, #tpu.memory_space<vmem>>, vector<1x1x1x16x128xf32>
    %515 = vector.shape_cast %514 : vector<1x1x1x16x128xf32> to vector<16x128xf32>
    %516 = vector.shape_cast %499 : vector<16x128xf32> to vector<1x1x1x16x128xf32>
    tpu.vector_store %arg4[%c0_179, %c2_180, %c2_181, %c0_182, %c0_183], %516 {strides = array<i32>} : memref<1x8x3x16x128xf32, #tpu.memory_space<vmem>>, vector<1x1x1x16x128xf32>,
    %c3_i32_184 = arith.constant 3 : i32
    %517 = arith.addi %0, %c3_i32_184 : i32
    %518 = arith.sitofp %517 : i32 to f32
    %cst_185 = arith.constant 5.000000e-01 : f32
    %519 = arith.addf %518, %cst_185 : f32
    %520 = arith.mulf %54, %519 : f32
    %521 = vector.broadcast %520 : f32 to vector<16x128xf32>
    %522 = arith.addf %150, %521 : vector<16x128xf32>
    %523 = math.absf %522 : vector<16x128xf32>
    %cst_186 = arith.constant 9.99999993E-9 : f32
    %524 = vector.broadcast %cst_186 : f32 to vector<16x128xf32>
    %525 = arith.cmpf ogt, %523, %524 : vector<16x128xf32>
    %cst_187 = arith.constant 9.99999993E-9 : f32
    %526 = vector.broadcast %cst_187 : f32 to vector<16x128xf32>
    %527 = arith.addf %522, %526 : vector<16x128xf32>
    %cst_188 = arith.constant 1.000000e+00 : f32
    %528 = vector.broadcast %cst_188 : f32 to vector<16x128xf32>
    %529 = arith.divf %528, %527 : vector<16x128xf32>
    %cst_189 = arith.constant 1.000000e+00 : f32
    %530 = vector.broadcast %cst_189 : f32 to vector<16x128xf32>
    %531 = arith.select %525, %529, %530 : vector<16x128xi1>, vector<16x128xf32>
    %532 = arith.mulf %6, %519 : f32
    %533 = vector.broadcast %532 : f32 to vector<16x128xf32>
    %534 = arith.addf %129, %533 : vector<16x128xf32>
    %535 = arith.mulf %534, %531 : vector<16x128xf32>
    %536 = arith.mulf %22, %519 : f32
    %537 = vector.broadcast %536 : f32 to vector<16x128xf32>
    %538 = arith.addf %136, %537 : vector<16x128xf32>
    %539 = arith.mulf %538, %531 : vector<16x128xf32>
    %540 = arith.mulf %38, %519 : f32
    %541 = vector.broadcast %540 : f32 to vector<16x128xf32>
    %542 = arith.addf %143, %541 : vector<16x128xf32>
    %543 = arith.mulf %542, %531 : vector<16x128xf32>
    %544 = vector.broadcast %70 : f32 to vector<16x128xf32>
    %545 = arith.mulf %544, %535 : vector<16x128xf32>
    %546 = vector.broadcast %74 : f32 to vector<16x128xf32>
    %547 = arith.mulf %546, %539 : vector<16x128xf32>
    %548 = arith.addf %545, %547 : vector<16x128xf32>
    %549 = vector.broadcast %78 : f32 to vector<16x128xf32>
    %550 = arith.mulf %549, %543 : vector<16x128xf32>
    %551 = arith.addf %548, %550 : vector<16x128xf32>
    %552 = vector.broadcast %82 : f32 to vector<16x128xf32>
    %553 = arith.addf %551, %552 : vector<16x128xf32>
    %554 = vector.broadcast %86 : f32 to vector<16x128xf32>
    %555 = arith.mulf %554, %535 : vector<16x128xf32>
    %556 = vector.broadcast %90 : f32 to vector<16x128xf32>
    %557 = arith.mulf %556, %539 : vector<16x128xf32>
    %558 = arith.addf %555, %557 : vector<16x128xf32>
    %559 = vector.broadcast %94 : f32 to vector<16x128xf32>
    %560 = arith.mulf %559, %543 : vector<16x128xf32>
    %561 = arith.addf %558, %560 : vector<16x128xf32>
    %562 = vector.broadcast %98 : f32 to vector<16x128xf32>
    %563 = arith.addf %561, %562 : vector<16x128xf32>
    %564 = vector.broadcast %102 : f32 to vector<16x128xf32>
    %565 = arith.mulf %564, %535 : vector<16x128xf32>
    %566 = vector.broadcast %106 : f32 to vector<16x128xf32>
    %567 = arith.mulf %566, %539 : vector<16x128xf32>
    %568 = arith.addf %565, %567 : vector<16x128xf32>
    %569 = vector.broadcast %110 : f32 to vector<16x128xf32>
    %570 = arith.mulf %569, %543 : vector<16x128xf32>
    %571 = arith.addf %568, %570 : vector<16x128xf32>
    %572 = vector.broadcast %114 : f32 to vector<16x128xf32>
    %573 = arith.addf %571, %572 : vector<16x128xf32>
    %574 = math.absf %573 : vector<16x128xf32>
    %cst_190 = arith.constant 9.99999993E-9 : f32
    %575 = vector.broadcast %cst_190 : f32 to vector<16x128xf32>
    %576 = arith.cmpf ogt, %574, %575 : vector<16x128xf32>
    %cst_191 = arith.constant 9.99999993E-9 : f32
    %577 = vector.broadcast %cst_191 : f32 to vector<16x128xf32>
    %578 = arith.addf %573, %577 : vector<16x128xf32>
    %cst_192 = arith.constant 1.000000e+00 : f32
    %579 = vector.broadcast %cst_192 : f32 to vector<16x128xf32>
    %580 = arith.divf %579, %578 : vector<16x128xf32>
    %cst_193 = arith.constant 1.000000e+00 : f32
    %581 = vector.broadcast %cst_193 : f32 to vector<16x128xf32>
    %582 = arith.select %576, %580, %581 : vector<16x128xi1>, vector<16x128xf32>
    %583 = arith.mulf %553, %582 : vector<16x128xf32>
    %584 = arith.mulf %563, %582 : vector<16x128xf32>
    %585 = vector.broadcast %114 : f32 to vector<16x128xf32>
    %586 = arith.subf %573, %585 : vector<16x128xf32>
    %cst_194 = arith.constant 2.000000e+00 : f32
    %587 = vector.broadcast %cst_194 : f32 to vector<16x128xf32>
    %588 = arith.subf %586, %587 : vector<16x128xf32>
    %cst_195 = arith.constant 146.428574 : f32
    %589 = vector.broadcast %cst_195 : f32 to vector<16x128xf32>
    %590 = arith.mulf %588, %589 : vector<16x128xf32>
    %cst_196 = arith.constant 1.000000e+00 : f32
    %591 = vector.broadcast %cst_196 : f32 to vector<16x128xf32>
    %592 = arith.addf %591, %590 : vector<16x128xf32>
    %593 = math.sqrt %592 : vector<16x128xf32>
    %cst_197 = arith.constant 5.000000e-01 : f32
    %594 = vector.broadcast %cst_197 : f32 to vector<16x128xf32>
    %595 = arith.mulf %594, %593 : vector<16x128xf32>
    %cst_198 = arith.constant -5.000000e-01 : f32
    %596 = vector.broadcast %cst_198 : f32 to vector<16x128xf32>
    %597 = arith.addf %596, %595 : vector<16x128xf32>
    %cst_199 = arith.constant 0.000000e+00 : f32
    %598 = vector.broadcast %cst_199 : f32 to vector<16x128xf32>
    %599 = arith.cmpf olt, %597, %598 : vector<16x128xf32>
    %cst_200 = arith.constant 4.000000e+01 : f32
    %600 = vector.broadcast %cst_200 : f32 to vector<16x128xf32>
    %601 = arith.cmpf ogt, %597, %600 : vector<16x128xf32>
    %602 = arith.ori %599, %601 : vector<16x128xi1>
    %603 = tpu.weird %597 : vector<16x128xf32> -> vector<16x128xi1>
    %cst_201 = arith.constant dense<true> : vector<16x128xi1>
    %604 = arith.xori %603, %cst_201 : vector<16x128xi1>
    %cst_202 = arith.constant dense<true> : vector<16x128xi1>
    %605 = arith.xori %604, %cst_202 : vector<16x128xi1>
    %606 = arith.ori %602, %605 : vector<16x128xi1>
    %cst_203 = arith.constant 4.000000e+01 : f32
    %607 = vector.broadcast %cst_203 : f32 to vector<16x128xf32>
    %608 = arith.select %606, %607, %597 : vector<16x128xi1>, vector<16x128xf32>
    %609 = math.floor %608 : vector<16x128xf32>
    %cst_204 = arith.constant 0.00557103055 : f32
    %610 = vector.broadcast %cst_204 : f32 to vector<16x128xf32>
    %611 = arith.mulf %583, %610 : vector<16x128xf32>
    %cst_205 = arith.constant 1.000000e+00 : f32
    %612 = vector.broadcast %cst_205 : f32 to vector<16x128xf32>
    %613 = arith.subf %611, %612 : vector<16x128xf32>
    %cst_206 = arith.constant 0.00836820062 : f32
    %614 = vector.broadcast %cst_206 : f32 to vector<16x128xf32>
    %615 = arith.mulf %584, %614 : vector<16x128xf32>
    %cst_207 = arith.constant 1.000000e+00 : f32
    %616 = vector.broadcast %cst_207 : f32 to vector<16x128xf32>
    %617 = arith.subf %615, %616 : vector<16x128xf32>
    %cst_208 = arith.constant 0.051282052 : f32
    %618 = vector.broadcast %cst_208 : f32 to vector<16x128xf32>
    %619 = arith.mulf %609, %618 : vector<16x128xf32>
    %cst_209 = arith.constant 1.000000e+00 : f32
    %620 = vector.broadcast %cst_209 : f32 to vector<16x128xf32>
    %621 = arith.subf %619, %620 : vector<16x128xf32>
    %622 = tpu.weird %613 : vector<16x128xf32> -> vector<16x128xi1>
    %cst_210 = arith.constant dense<true> : vector<16x128xi1>
    %623 = arith.xori %622, %cst_210 : vector<16x128xi1>
    %cst_211 = arith.constant -2.000000e+00 : f32
    %624 = vector.broadcast %cst_211 : f32 to vector<16x128xf32>
    %625 = arith.select %623, %613, %624 : vector<16x128xi1>, vector<16x128xf32>
    %c0_212 = arith.constant 0 : index
    %c3 = arith.constant 3 : index
    %c0_213 = arith.constant 0 : index
    %c0_214 = arith.constant 0 : index
    %c0_215 = arith.constant 0 : index
    %626 = vector.load %arg4[%c0_212, %c3, %c0_213, %c0_214, %c0_215] : memref<1x8x3x16x128xf32, #tpu.memory_space<vmem>>, vector<1x1x1x16x128xf32>
    %627 = vector.shape_cast %626 : vector<1x1x1x16x128xf32> to vector<16x128xf32>
    %628 = vector.shape_cast %625 : vector<16x128xf32> to vector<1x1x1x16x128xf32>
    tpu.vector_store %arg4[%c0_212, %c3, %c0_213, %c0_214, %c0_215], %628 {strides = array<i32>} : memref<1x8x3x16x128xf32, #tpu.memory_space<vmem>>, vector<1x1x1x16x128xf32>,
    %629 = tpu.weird %617 : vector<16x128xf32> -> vector<16x128xi1>
    %cst_216 = arith.constant dense<true> : vector<16x128xi1>
    %630 = arith.xori %629, %cst_216 : vector<16x128xi1>
    %cst_217 = arith.constant -2.000000e+00 : f32
    %631 = vector.broadcast %cst_217 : f32 to vector<16x128xf32>
    %632 = arith.select %630, %617, %631 : vector<16x128xi1>, vector<16x128xf32>
    %c0_218 = arith.constant 0 : index
    %c3_219 = arith.constant 3 : index
    %c1_220 = arith.constant 1 : index
    %c0_221 = arith.constant 0 : index
    %c0_222 = arith.constant 0 : index
    %633 = vector.load %arg4[%c0_218, %c3_219, %c1_220, %c0_221, %c0_222] : memref<1x8x3x16x128xf32, #tpu.memory_space<vmem>>, vector<1x1x1x16x128xf32>
    %634 = vector.shape_cast %633 : vector<1x1x1x16x128xf32> to vector<16x128xf32>
    %635 = vector.shape_cast %632 : vector<16x128xf32> to vector<1x1x1x16x128xf32>
    tpu.vector_store %arg4[%c0_218, %c3_219, %c1_220, %c0_221, %c0_222], %635 {strides = array<i32>} : memref<1x8x3x16x128xf32, #tpu.memory_space<vmem>>, vector<1x1x1x16x128xf32>,
    %c0_223 = arith.constant 0 : index
    %c3_224 = arith.constant 3 : index
    %c2_225 = arith.constant 2 : index
    %c0_226 = arith.constant 0 : index
    %c0_227 = arith.constant 0 : index
    %636 = vector.load %arg4[%c0_223, %c3_224, %c2_225, %c0_226, %c0_227] : memref<1x8x3x16x128xf32, #tpu.memory_space<vmem>>, vector<1x1x1x16x128xf32>
    %637 = vector.shape_cast %636 : vector<1x1x1x16x128xf32> to vector<16x128xf32>
    %638 = vector.shape_cast %621 : vector<16x128xf32> to vector<1x1x1x16x128xf32>
    tpu.vector_store %arg4[%c0_223, %c3_224, %c2_225, %c0_226, %c0_227], %638 {strides = array<i32>} : memref<1x8x3x16x128xf32, #tpu.memory_space<vmem>>, vector<1x1x1x16x128xf32>,
    %c4_i32_228 = arith.constant 4 : i32
    %639 = arith.addi %0, %c4_i32_228 : i32
    %640 = arith.sitofp %639 : i32 to f32
    %cst_229 = arith.constant 5.000000e-01 : f32
    %641 = arith.addf %640, %cst_229 : f32
    %642 = arith.mulf %54, %641 : f32
    %643 = vector.broadcast %642 : f32 to vector<16x128xf32>
    %644 = arith.addf %150, %643 : vector<16x128xf32>
    %645 = math.absf %644 : vector<16x128xf32>
    %cst_230 = arith.constant 9.99999993E-9 : f32
    %646 = vector.broadcast %cst_230 : f32 to vector<16x128xf32>
    %647 = arith.cmpf ogt, %645, %646 : vector<16x128xf32>
    %cst_231 = arith.constant 9.99999993E-9 : f32
    %648 = vector.broadcast %cst_231 : f32 to vector<16x128xf32>
    %649 = arith.addf %644, %648 : vector<16x128xf32>
    %cst_232 = arith.constant 1.000000e+00 : f32
    %650 = vector.broadcast %cst_232 : f32 to vector<16x128xf32>
    %651 = arith.divf %650, %649 : vector<16x128xf32>
    %cst_233 = arith.constant 1.000000e+00 : f32
    %652 = vector.broadcast %cst_233 : f32 to vector<16x128xf32>
    %653 = arith.select %647, %651, %652 : vector<16x128xi1>, vector<16x128xf32>
    %654 = arith.mulf %6, %641 : f32
    %655 = vector.broadcast %654 : f32 to vector<16x128xf32>
    %656 = arith.addf %129, %655 : vector<16x128xf32>
    %657 = arith.mulf %656, %653 : vector<16x128xf32>
    %658 = arith.mulf %22, %641 : f32
    %659 = vector.broadcast %658 : f32 to vector<16x128xf32>
    %660 = arith.addf %136, %659 : vector<16x128xf32>
    %661 = arith.mulf %660, %653 : vector<16x128xf32>
    %662 = arith.mulf %38, %641 : f32
    %663 = vector.broadcast %662 : f32 to vector<16x128xf32>
    %664 = arith.addf %143, %663 : vector<16x128xf32>
    %665 = arith.mulf %664, %653 : vector<16x128xf32>
    %666 = vector.broadcast %70 : f32 to vector<16x128xf32>
    %667 = arith.mulf %666, %657 : vector<16x128xf32>
    %668 = vector.broadcast %74 : f32 to vector<16x128xf32>
    %669 = arith.mulf %668, %661 : vector<16x128xf32>
    %670 = arith.addf %667, %669 : vector<16x128xf32>
    %671 = vector.broadcast %78 : f32 to vector<16x128xf32>
    %672 = arith.mulf %671, %665 : vector<16x128xf32>
    %673 = arith.addf %670, %672 : vector<16x128xf32>
    %674 = vector.broadcast %82 : f32 to vector<16x128xf32>
    %675 = arith.addf %673, %674 : vector<16x128xf32>
    %676 = vector.broadcast %86 : f32 to vector<16x128xf32>
    %677 = arith.mulf %676, %657 : vector<16x128xf32>
    %678 = vector.broadcast %90 : f32 to vector<16x128xf32>
    %679 = arith.mulf %678, %661 : vector<16x128xf32>
    %680 = arith.addf %677, %679 : vector<16x128xf32>
    %681 = vector.broadcast %94 : f32 to vector<16x128xf32>
    %682 = arith.mulf %681, %665 : vector<16x128xf32>
    %683 = arith.addf %680, %682 : vector<16x128xf32>
    %684 = vector.broadcast %98 : f32 to vector<16x128xf32>
    %685 = arith.addf %683, %684 : vector<16x128xf32>
    %686 = vector.broadcast %102 : f32 to vector<16x128xf32>
    %687 = arith.mulf %686, %657 : vector<16x128xf32>
    %688 = vector.broadcast %106 : f32 to vector<16x128xf32>
    %689 = arith.mulf %688, %661 : vector<16x128xf32>
    %690 = arith.addf %687, %689 : vector<16x128xf32>
    %691 = vector.broadcast %110 : f32 to vector<16x128xf32>
    %692 = arith.mulf %691, %665 : vector<16x128xf32>
    %693 = arith.addf %690, %692 : vector<16x128xf32>
    %694 = vector.broadcast %114 : f32 to vector<16x128xf32>
    %695 = arith.addf %693, %694 : vector<16x128xf32>
    %696 = math.absf %695 : vector<16x128xf32>
    %cst_234 = arith.constant 9.99999993E-9 : f32
    %697 = vector.broadcast %cst_234 : f32 to vector<16x128xf32>
    %698 = arith.cmpf ogt, %696, %697 : vector<16x128xf32>
    %cst_235 = arith.constant 9.99999993E-9 : f32
    %699 = vector.broadcast %cst_235 : f32 to vector<16x128xf32>
    %700 = arith.addf %695, %699 : vector<16x128xf32>
    %cst_236 = arith.constant 1.000000e+00 : f32
    %701 = vector.broadcast %cst_236 : f32 to vector<16x128xf32>
    %702 = arith.divf %701, %700 : vector<16x128xf32>
    %cst_237 = arith.constant 1.000000e+00 : f32
    %703 = vector.broadcast %cst_237 : f32 to vector<16x128xf32>
    %704 = arith.select %698, %702, %703 : vector<16x128xi1>, vector<16x128xf32>
    %705 = arith.mulf %675, %704 : vector<16x128xf32>
    %706 = arith.mulf %685, %704 : vector<16x128xf32>
    %707 = vector.broadcast %114 : f32 to vector<16x128xf32>
    %708 = arith.subf %695, %707 : vector<16x128xf32>
    %cst_238 = arith.constant 2.000000e+00 : f32
    %709 = vector.broadcast %cst_238 : f32 to vector<16x128xf32>
    %710 = arith.subf %708, %709 : vector<16x128xf32>
    %cst_239 = arith.constant 146.428574 : f32
    %711 = vector.broadcast %cst_239 : f32 to vector<16x128xf32>
    %712 = arith.mulf %710, %711 : vector<16x128xf32>
    %cst_240 = arith.constant 1.000000e+00 : f32
    %713 = vector.broadcast %cst_240 : f32 to vector<16x128xf32>
    %714 = arith.addf %713, %712 : vector<16x128xf32>
    %715 = math.sqrt %714 : vector<16x128xf32>
    %cst_241 = arith.constant 5.000000e-01 : f32
    %716 = vector.broadcast %cst_241 : f32 to vector<16x128xf32>
    %717 = arith.mulf %716, %715 : vector<16x128xf32>
    %cst_242 = arith.constant -5.000000e-01 : f32
    %718 = vector.broadcast %cst_242 : f32 to vector<16x128xf32>
    %719 = arith.addf %718, %717 : vector<16x128xf32>
    %cst_243 = arith.constant 0.000000e+00 : f32
    %720 = vector.broadcast %cst_243 : f32 to vector<16x128xf32>
    %721 = arith.cmpf olt, %719, %720 : vector<16x128xf32>
    %cst_244 = arith.constant 4.000000e+01 : f32
    %722 = vector.broadcast %cst_244 : f32 to vector<16x128xf32>
    %723 = arith.cmpf ogt, %719, %722 : vector<16x128xf32>
    %724 = arith.ori %721, %723 : vector<16x128xi1>
    %725 = tpu.weird %719 : vector<16x128xf32> -> vector<16x128xi1>
    %cst_245 = arith.constant dense<true> : vector<16x128xi1>
    %726 = arith.xori %725, %cst_245 : vector<16x128xi1>
    %cst_246 = arith.constant dense<true> : vector<16x128xi1>
    %727 = arith.xori %726, %cst_246 : vector<16x128xi1>
    %728 = arith.ori %724, %727 : vector<16x128xi1>
    %cst_247 = arith.constant 4.000000e+01 : f32
    %729 = vector.broadcast %cst_247 : f32 to vector<16x128xf32>
    %730 = arith.select %728, %729, %719 : vector<16x128xi1>, vector<16x128xf32>
    %731 = math.floor %730 : vector<16x128xf32>
    %cst_248 = arith.constant 0.00557103055 : f32
    %732 = vector.broadcast %cst_248 : f32 to vector<16x128xf32>
    %733 = arith.mulf %705, %732 : vector<16x128xf32>
    %cst_249 = arith.constant 1.000000e+00 : f32
    %734 = vector.broadcast %cst_249 : f32 to vector<16x128xf32>
    %735 = arith.subf %733, %734 : vector<16x128xf32>
    %cst_250 = arith.constant 0.00836820062 : f32
    %736 = vector.broadcast %cst_250 : f32 to vector<16x128xf32>
    %737 = arith.mulf %706, %736 : vector<16x128xf32>
    %cst_251 = arith.constant 1.000000e+00 : f32
    %738 = vector.broadcast %cst_251 : f32 to vector<16x128xf32>
    %739 = arith.subf %737, %738 : vector<16x128xf32>
    %cst_252 = arith.constant 0.051282052 : f32
    %740 = vector.broadcast %cst_252 : f32 to vector<16x128xf32>
    %741 = arith.mulf %731, %740 : vector<16x128xf32>
    %cst_253 = arith.constant 1.000000e+00 : f32
    %742 = vector.broadcast %cst_253 : f32 to vector<16x128xf32>
    %743 = arith.subf %741, %742 : vector<16x128xf32>
    %744 = tpu.weird %735 : vector<16x128xf32> -> vector<16x128xi1>
    %cst_254 = arith.constant dense<true> : vector<16x128xi1>
    %745 = arith.xori %744, %cst_254 : vector<16x128xi1>
    %cst_255 = arith.constant -2.000000e+00 : f32
    %746 = vector.broadcast %cst_255 : f32 to vector<16x128xf32>
    %747 = arith.select %745, %735, %746 : vector<16x128xi1>, vector<16x128xf32>
    %c0_256 = arith.constant 0 : index
    %c4 = arith.constant 4 : index
    %c0_257 = arith.constant 0 : index
    %c0_258 = arith.constant 0 : index
    %c0_259 = arith.constant 0 : index
    %748 = vector.load %arg4[%c0_256, %c4, %c0_257, %c0_258, %c0_259] : memref<1x8x3x16x128xf32, #tpu.memory_space<vmem>>, vector<1x1x1x16x128xf32>
    %749 = vector.shape_cast %748 : vector<1x1x1x16x128xf32> to vector<16x128xf32>
    %750 = vector.shape_cast %747 : vector<16x128xf32> to vector<1x1x1x16x128xf32>
    tpu.vector_store %arg4[%c0_256, %c4, %c0_257, %c0_258, %c0_259], %750 {strides = array<i32>} : memref<1x8x3x16x128xf32, #tpu.memory_space<vmem>>, vector<1x1x1x16x128xf32>,
    %751 = tpu.weird %739 : vector<16x128xf32> -> vector<16x128xi1>
    %cst_260 = arith.constant dense<true> : vector<16x128xi1>
    %752 = arith.xori %751, %cst_260 : vector<16x128xi1>
    %cst_261 = arith.constant -2.000000e+00 : f32
    %753 = vector.broadcast %cst_261 : f32 to vector<16x128xf32>
    %754 = arith.select %752, %739, %753 : vector<16x128xi1>, vector<16x128xf32>
    %c0_262 = arith.constant 0 : index
    %c4_263 = arith.constant 4 : index
    %c1_264 = arith.constant 1 : index
    %c0_265 = arith.constant 0 : index
    %c0_266 = arith.constant 0 : index
    %755 = vector.load %arg4[%c0_262, %c4_263, %c1_264, %c0_265, %c0_266] : memref<1x8x3x16x128xf32, #tpu.memory_space<vmem>>, vector<1x1x1x16x128xf32>
    %756 = vector.shape_cast %755 : vector<1x1x1x16x128xf32> to vector<16x128xf32>
    %757 = vector.shape_cast %754 : vector<16x128xf32> to vector<1x1x1x16x128xf32>
    tpu.vector_store %arg4[%c0_262, %c4_263, %c1_264, %c0_265, %c0_266], %757 {strides = array<i32>} : memref<1x8x3x16x128xf32, #tpu.memory_space<vmem>>, vector<1x1x1x16x128xf32>,
    %c0_267 = arith.constant 0 : index
    %c4_268 = arith.constant 4 : index
    %c2_269 = arith.constant 2 : index
    %c0_270 = arith.constant 0 : index
    %c0_271 = arith.constant 0 : index
    %758 = vector.load %arg4[%c0_267, %c4_268, %c2_269, %c0_270, %c0_271] : memref<1x8x3x16x128xf32, #tpu.memory_space<vmem>>, vector<1x1x1x16x128xf32>
    %759 = vector.shape_cast %758 : vector<1x1x1x16x128xf32> to vector<16x128xf32>
    %760 = vector.shape_cast %743 : vector<16x128xf32> to vector<1x1x1x16x128xf32>
    tpu.vector_store %arg4[%c0_267, %c4_268, %c2_269, %c0_270, %c0_271], %760 {strides = array<i32>} : memref<1x8x3x16x128xf32, #tpu.memory_space<vmem>>, vector<1x1x1x16x128xf32>,
    %c5_i32 = arith.constant 5 : i32
    %761 = arith.addi %0, %c5_i32 : i32
    %762 = arith.sitofp %761 : i32 to f32
    %cst_272 = arith.constant 5.000000e-01 : f32
    %763 = arith.addf %762, %cst_272 : f32
    %764 = arith.mulf %54, %763 : f32
    %765 = vector.broadcast %764 : f32 to vector<16x128xf32>
    %766 = arith.addf %150, %765 : vector<16x128xf32>
    %767 = math.absf %766 : vector<16x128xf32>
    %cst_273 = arith.constant 9.99999993E-9 : f32
    %768 = vector.broadcast %cst_273 : f32 to vector<16x128xf32>
    %769 = arith.cmpf ogt, %767, %768 : vector<16x128xf32>
    %cst_274 = arith.constant 9.99999993E-9 : f32
    %770 = vector.broadcast %cst_274 : f32 to vector<16x128xf32>
    %771 = arith.addf %766, %770 : vector<16x128xf32>
    %cst_275 = arith.constant 1.000000e+00 : f32
    %772 = vector.broadcast %cst_275 : f32 to vector<16x128xf32>
    %773 = arith.divf %772, %771 : vector<16x128xf32>
    %cst_276 = arith.constant 1.000000e+00 : f32
    %774 = vector.broadcast %cst_276 : f32 to vector<16x128xf32>
    %775 = arith.select %769, %773, %774 : vector<16x128xi1>, vector<16x128xf32>
    %776 = arith.mulf %6, %763 : f32
    %777 = vector.broadcast %776 : f32 to vector<16x128xf32>
    %778 = arith.addf %129, %777 : vector<16x128xf32>
    %779 = arith.mulf %778, %775 : vector<16x128xf32>
    %780 = arith.mulf %22, %763 : f32
    %781 = vector.broadcast %780 : f32 to vector<16x128xf32>
    %782 = arith.addf %136, %781 : vector<16x128xf32>
    %783 = arith.mulf %782, %775 : vector<16x128xf32>
    %784 = arith.mulf %38, %763 : f32
    %785 = vector.broadcast %784 : f32 to vector<16x128xf32>
    %786 = arith.addf %143, %785 : vector<16x128xf32>
    %787 = arith.mulf %786, %775 : vector<16x128xf32>
    %788 = vector.broadcast %70 : f32 to vector<16x128xf32>
    %789 = arith.mulf %788, %779 : vector<16x128xf32>
    %790 = vector.broadcast %74 : f32 to vector<16x128xf32>
    %791 = arith.mulf %790, %783 : vector<16x128xf32>
    %792 = arith.addf %789, %791 : vector<16x128xf32>
    %793 = vector.broadcast %78 : f32 to vector<16x128xf32>
    %794 = arith.mulf %793, %787 : vector<16x128xf32>
    %795 = arith.addf %792, %794 : vector<16x128xf32>
    %796 = vector.broadcast %82 : f32 to vector<16x128xf32>
    %797 = arith.addf %795, %796 : vector<16x128xf32>
    %798 = vector.broadcast %86 : f32 to vector<16x128xf32>
    %799 = arith.mulf %798, %779 : vector<16x128xf32>
    %800 = vector.broadcast %90 : f32 to vector<16x128xf32>
    %801 = arith.mulf %800, %783 : vector<16x128xf32>
    %802 = arith.addf %799, %801 : vector<16x128xf32>
    %803 = vector.broadcast %94 : f32 to vector<16x128xf32>
    %804 = arith.mulf %803, %787 : vector<16x128xf32>
    %805 = arith.addf %802, %804 : vector<16x128xf32>
    %806 = vector.broadcast %98 : f32 to vector<16x128xf32>
    %807 = arith.addf %805, %806 : vector<16x128xf32>
    %808 = vector.broadcast %102 : f32 to vector<16x128xf32>
    %809 = arith.mulf %808, %779 : vector<16x128xf32>
    %810 = vector.broadcast %106 : f32 to vector<16x128xf32>
    %811 = arith.mulf %810, %783 : vector<16x128xf32>
    %812 = arith.addf %809, %811 : vector<16x128xf32>
    %813 = vector.broadcast %110 : f32 to vector<16x128xf32>
    %814 = arith.mulf %813, %787 : vector<16x128xf32>
    %815 = arith.addf %812, %814 : vector<16x128xf32>
    %816 = vector.broadcast %114 : f32 to vector<16x128xf32>
    %817 = arith.addf %815, %816 : vector<16x128xf32>
    %818 = math.absf %817 : vector<16x128xf32>
    %cst_277 = arith.constant 9.99999993E-9 : f32
    %819 = vector.broadcast %cst_277 : f32 to vector<16x128xf32>
    %820 = arith.cmpf ogt, %818, %819 : vector<16x128xf32>
    %cst_278 = arith.constant 9.99999993E-9 : f32
    %821 = vector.broadcast %cst_278 : f32 to vector<16x128xf32>
    %822 = arith.addf %817, %821 : vector<16x128xf32>
    %cst_279 = arith.constant 1.000000e+00 : f32
    %823 = vector.broadcast %cst_279 : f32 to vector<16x128xf32>
    %824 = arith.divf %823, %822 : vector<16x128xf32>
    %cst_280 = arith.constant 1.000000e+00 : f32
    %825 = vector.broadcast %cst_280 : f32 to vector<16x128xf32>
    %826 = arith.select %820, %824, %825 : vector<16x128xi1>, vector<16x128xf32>
    %827 = arith.mulf %797, %826 : vector<16x128xf32>
    %828 = arith.mulf %807, %826 : vector<16x128xf32>
    %829 = vector.broadcast %114 : f32 to vector<16x128xf32>
    %830 = arith.subf %817, %829 : vector<16x128xf32>
    %cst_281 = arith.constant 2.000000e+00 : f32
    %831 = vector.broadcast %cst_281 : f32 to vector<16x128xf32>
    %832 = arith.subf %830, %831 : vector<16x128xf32>
    %cst_282 = arith.constant 146.428574 : f32
    %833 = vector.broadcast %cst_282 : f32 to vector<16x128xf32>
    %834 = arith.mulf %832, %833 : vector<16x128xf32>
    %cst_283 = arith.constant 1.000000e+00 : f32
    %835 = vector.broadcast %cst_283 : f32 to vector<16x128xf32>
    %836 = arith.addf %835, %834 : vector<16x128xf32>
    %837 = math.sqrt %836 : vector<16x128xf32>
    %cst_284 = arith.constant 5.000000e-01 : f32
    %838 = vector.broadcast %cst_284 : f32 to vector<16x128xf32>
    %839 = arith.mulf %838, %837 : vector<16x128xf32>
    %cst_285 = arith.constant -5.000000e-01 : f32
    %840 = vector.broadcast %cst_285 : f32 to vector<16x128xf32>
    %841 = arith.addf %840, %839 : vector<16x128xf32>
    %cst_286 = arith.constant 0.000000e+00 : f32
    %842 = vector.broadcast %cst_286 : f32 to vector<16x128xf32>
    %843 = arith.cmpf olt, %841, %842 : vector<16x128xf32>
    %cst_287 = arith.constant 4.000000e+01 : f32
    %844 = vector.broadcast %cst_287 : f32 to vector<16x128xf32>
    %845 = arith.cmpf ogt, %841, %844 : vector<16x128xf32>
    %846 = arith.ori %843, %845 : vector<16x128xi1>
    %847 = tpu.weird %841 : vector<16x128xf32> -> vector<16x128xi1>
    %cst_288 = arith.constant dense<true> : vector<16x128xi1>
    %848 = arith.xori %847, %cst_288 : vector<16x128xi1>
    %cst_289 = arith.constant dense<true> : vector<16x128xi1>
    %849 = arith.xori %848, %cst_289 : vector<16x128xi1>
    %850 = arith.ori %846, %849 : vector<16x128xi1>
    %cst_290 = arith.constant 4.000000e+01 : f32
    %851 = vector.broadcast %cst_290 : f32 to vector<16x128xf32>
    %852 = arith.select %850, %851, %841 : vector<16x128xi1>, vector<16x128xf32>
    %853 = math.floor %852 : vector<16x128xf32>
    %cst_291 = arith.constant 0.00557103055 : f32
    %854 = vector.broadcast %cst_291 : f32 to vector<16x128xf32>
    %855 = arith.mulf %827, %854 : vector<16x128xf32>
    %cst_292 = arith.constant 1.000000e+00 : f32
    %856 = vector.broadcast %cst_292 : f32 to vector<16x128xf32>
    %857 = arith.subf %855, %856 : vector<16x128xf32>
    %cst_293 = arith.constant 0.00836820062 : f32
    %858 = vector.broadcast %cst_293 : f32 to vector<16x128xf32>
    %859 = arith.mulf %828, %858 : vector<16x128xf32>
    %cst_294 = arith.constant 1.000000e+00 : f32
    %860 = vector.broadcast %cst_294 : f32 to vector<16x128xf32>
    %861 = arith.subf %859, %860 : vector<16x128xf32>
    %cst_295 = arith.constant 0.051282052 : f32
    %862 = vector.broadcast %cst_295 : f32 to vector<16x128xf32>
    %863 = arith.mulf %853, %862 : vector<16x128xf32>
    %cst_296 = arith.constant 1.000000e+00 : f32
    %864 = vector.broadcast %cst_296 : f32 to vector<16x128xf32>
    %865 = arith.subf %863, %864 : vector<16x128xf32>
    %866 = tpu.weird %857 : vector<16x128xf32> -> vector<16x128xi1>
    %cst_297 = arith.constant dense<true> : vector<16x128xi1>
    %867 = arith.xori %866, %cst_297 : vector<16x128xi1>
    %cst_298 = arith.constant -2.000000e+00 : f32
    %868 = vector.broadcast %cst_298 : f32 to vector<16x128xf32>
    %869 = arith.select %867, %857, %868 : vector<16x128xi1>, vector<16x128xf32>
    %c0_299 = arith.constant 0 : index
    %c5 = arith.constant 5 : index
    %c0_300 = arith.constant 0 : index
    %c0_301 = arith.constant 0 : index
    %c0_302 = arith.constant 0 : index
    %870 = vector.load %arg4[%c0_299, %c5, %c0_300, %c0_301, %c0_302] : memref<1x8x3x16x128xf32, #tpu.memory_space<vmem>>, vector<1x1x1x16x128xf32>
    %871 = vector.shape_cast %870 : vector<1x1x1x16x128xf32> to vector<16x128xf32>
    %872 = vector.shape_cast %869 : vector<16x128xf32> to vector<1x1x1x16x128xf32>
    tpu.vector_store %arg4[%c0_299, %c5, %c0_300, %c0_301, %c0_302], %872 {strides = array<i32>} : memref<1x8x3x16x128xf32, #tpu.memory_space<vmem>>, vector<1x1x1x16x128xf32>,
    %873 = tpu.weird %861 : vector<16x128xf32> -> vector<16x128xi1>
    %cst_303 = arith.constant dense<true> : vector<16x128xi1>
    %874 = arith.xori %873, %cst_303 : vector<16x128xi1>
    %cst_304 = arith.constant -2.000000e+00 : f32
    %875 = vector.broadcast %cst_304 : f32 to vector<16x128xf32>
    %876 = arith.select %874, %861, %875 : vector<16x128xi1>, vector<16x128xf32>
    %c0_305 = arith.constant 0 : index
    %c5_306 = arith.constant 5 : index
    %c1_307 = arith.constant 1 : index
    %c0_308 = arith.constant 0 : index
    %c0_309 = arith.constant 0 : index
    %877 = vector.load %arg4[%c0_305, %c5_306, %c1_307, %c0_308, %c0_309] : memref<1x8x3x16x128xf32, #tpu.memory_space<vmem>>, vector<1x1x1x16x128xf32>
    %878 = vector.shape_cast %877 : vector<1x1x1x16x128xf32> to vector<16x128xf32>
    %879 = vector.shape_cast %876 : vector<16x128xf32> to vector<1x1x1x16x128xf32>
    tpu.vector_store %arg4[%c0_305, %c5_306, %c1_307, %c0_308, %c0_309], %879 {strides = array<i32>} : memref<1x8x3x16x128xf32, #tpu.memory_space<vmem>>, vector<1x1x1x16x128xf32>,
    %c0_310 = arith.constant 0 : index
    %c5_311 = arith.constant 5 : index
    %c2_312 = arith.constant 2 : index
    %c0_313 = arith.constant 0 : index
    %c0_314 = arith.constant 0 : index
    %880 = vector.load %arg4[%c0_310, %c5_311, %c2_312, %c0_313, %c0_314] : memref<1x8x3x16x128xf32, #tpu.memory_space<vmem>>, vector<1x1x1x16x128xf32>
    %881 = vector.shape_cast %880 : vector<1x1x1x16x128xf32> to vector<16x128xf32>
    %882 = vector.shape_cast %865 : vector<16x128xf32> to vector<1x1x1x16x128xf32>
    tpu.vector_store %arg4[%c0_310, %c5_311, %c2_312, %c0_313, %c0_314], %882 {strides = array<i32>} : memref<1x8x3x16x128xf32, #tpu.memory_space<vmem>>, vector<1x1x1x16x128xf32>,
    %c6_i32 = arith.constant 6 : i32
    %883 = arith.addi %0, %c6_i32 : i32
    %884 = arith.sitofp %883 : i32 to f32
    %cst_315 = arith.constant 5.000000e-01 : f32
    %885 = arith.addf %884, %cst_315 : f32
    %886 = arith.mulf %54, %885 : f32
    %887 = vector.broadcast %886 : f32 to vector<16x128xf32>
    %888 = arith.addf %150, %887 : vector<16x128xf32>
    %889 = math.absf %888 : vector<16x128xf32>
    %cst_316 = arith.constant 9.99999993E-9 : f32
    %890 = vector.broadcast %cst_316 : f32 to vector<16x128xf32>
    %891 = arith.cmpf ogt, %889, %890 : vector<16x128xf32>
    %cst_317 = arith.constant 9.99999993E-9 : f32
    %892 = vector.broadcast %cst_317 : f32 to vector<16x128xf32>
    %893 = arith.addf %888, %892 : vector<16x128xf32>
    %cst_318 = arith.constant 1.000000e+00 : f32
    %894 = vector.broadcast %cst_318 : f32 to vector<16x128xf32>
    %895 = arith.divf %894, %893 : vector<16x128xf32>
    %cst_319 = arith.constant 1.000000e+00 : f32
    %896 = vector.broadcast %cst_319 : f32 to vector<16x128xf32>
    %897 = arith.select %891, %895, %896 : vector<16x128xi1>, vector<16x128xf32>
    %898 = arith.mulf %6, %885 : f32
    %899 = vector.broadcast %898 : f32 to vector<16x128xf32>
    %900 = arith.addf %129, %899 : vector<16x128xf32>
    %901 = arith.mulf %900, %897 : vector<16x128xf32>
    %902 = arith.mulf %22, %885 : f32
    %903 = vector.broadcast %902 : f32 to vector<16x128xf32>
    %904 = arith.addf %136, %903 : vector<16x128xf32>
    %905 = arith.mulf %904, %897 : vector<16x128xf32>
    %906 = arith.mulf %38, %885 : f32
    %907 = vector.broadcast %906 : f32 to vector<16x128xf32>
    %908 = arith.addf %143, %907 : vector<16x128xf32>
    %909 = arith.mulf %908, %897 : vector<16x128xf32>
    %910 = vector.broadcast %70 : f32 to vector<16x128xf32>
    %911 = arith.mulf %910, %901 : vector<16x128xf32>
    %912 = vector.broadcast %74 : f32 to vector<16x128xf32>
    %913 = arith.mulf %912, %905 : vector<16x128xf32>
    %914 = arith.addf %911, %913 : vector<16x128xf32>
    %915 = vector.broadcast %78 : f32 to vector<16x128xf32>
    %916 = arith.mulf %915, %909 : vector<16x128xf32>
    %917 = arith.addf %914, %916 : vector<16x128xf32>
    %918 = vector.broadcast %82 : f32 to vector<16x128xf32>
    %919 = arith.addf %917, %918 : vector<16x128xf32>
    %920 = vector.broadcast %86 : f32 to vector<16x128xf32>
    %921 = arith.mulf %920, %901 : vector<16x128xf32>
    %922 = vector.broadcast %90 : f32 to vector<16x128xf32>
    %923 = arith.mulf %922, %905 : vector<16x128xf32>
    %924 = arith.addf %921, %923 : vector<16x128xf32>
    %925 = vector.broadcast %94 : f32 to vector<16x128xf32>
    %926 = arith.mulf %925, %909 : vector<16x128xf32>
    %927 = arith.addf %924, %926 : vector<16x128xf32>
    %928 = vector.broadcast %98 : f32 to vector<16x128xf32>
    %929 = arith.addf %927, %928 : vector<16x128xf32>
    %930 = vector.broadcast %102 : f32 to vector<16x128xf32>
    %931 = arith.mulf %930, %901 : vector<16x128xf32>
    %932 = vector.broadcast %106 : f32 to vector<16x128xf32>
    %933 = arith.mulf %932, %905 : vector<16x128xf32>
    %934 = arith.addf %931, %933 : vector<16x128xf32>
    %935 = vector.broadcast %110 : f32 to vector<16x128xf32>
    %936 = arith.mulf %935, %909 : vector<16x128xf32>
    %937 = arith.addf %934, %936 : vector<16x128xf32>
    %938 = vector.broadcast %114 : f32 to vector<16x128xf32>
    %939 = arith.addf %937, %938 : vector<16x128xf32>
    %940 = math.absf %939 : vector<16x128xf32>
    %cst_320 = arith.constant 9.99999993E-9 : f32
    %941 = vector.broadcast %cst_320 : f32 to vector<16x128xf32>
    %942 = arith.cmpf ogt, %940, %941 : vector<16x128xf32>
    %cst_321 = arith.constant 9.99999993E-9 : f32
    %943 = vector.broadcast %cst_321 : f32 to vector<16x128xf32>
    %944 = arith.addf %939, %943 : vector<16x128xf32>
    %cst_322 = arith.constant 1.000000e+00 : f32
    %945 = vector.broadcast %cst_322 : f32 to vector<16x128xf32>
    %946 = arith.divf %945, %944 : vector<16x128xf32>
    %cst_323 = arith.constant 1.000000e+00 : f32
    %947 = vector.broadcast %cst_323 : f32 to vector<16x128xf32>
    %948 = arith.select %942, %946, %947 : vector<16x128xi1>, vector<16x128xf32>
    %949 = arith.mulf %919, %948 : vector<16x128xf32>
    %950 = arith.mulf %929, %948 : vector<16x128xf32>
    %951 = vector.broadcast %114 : f32 to vector<16x128xf32>
    %952 = arith.subf %939, %951 : vector<16x128xf32>
    %cst_324 = arith.constant 2.000000e+00 : f32
    %953 = vector.broadcast %cst_324 : f32 to vector<16x128xf32>
    %954 = arith.subf %952, %953 : vector<16x128xf32>
    %cst_325 = arith.constant 146.428574 : f32
    %955 = vector.broadcast %cst_325 : f32 to vector<16x128xf32>
    %956 = arith.mulf %954, %955 : vector<16x128xf32>
    %cst_326 = arith.constant 1.000000e+00 : f32
    %957 = vector.broadcast %cst_326 : f32 to vector<16x128xf32>
    %958 = arith.addf %957, %956 : vector<16x128xf32>
    %959 = math.sqrt %958 : vector<16x128xf32>
    %cst_327 = arith.constant 5.000000e-01 : f32
    %960 = vector.broadcast %cst_327 : f32 to vector<16x128xf32>
    %961 = arith.mulf %960, %959 : vector<16x128xf32>
    %cst_328 = arith.constant -5.000000e-01 : f32
    %962 = vector.broadcast %cst_328 : f32 to vector<16x128xf32>
    %963 = arith.addf %962, %961 : vector<16x128xf32>
    %cst_329 = arith.constant 0.000000e+00 : f32
    %964 = vector.broadcast %cst_329 : f32 to vector<16x128xf32>
    %965 = arith.cmpf olt, %963, %964 : vector<16x128xf32>
    %cst_330 = arith.constant 4.000000e+01 : f32
    %966 = vector.broadcast %cst_330 : f32 to vector<16x128xf32>
    %967 = arith.cmpf ogt, %963, %966 : vector<16x128xf32>
    %968 = arith.ori %965, %967 : vector<16x128xi1>
    %969 = tpu.weird %963 : vector<16x128xf32> -> vector<16x128xi1>
    %cst_331 = arith.constant dense<true> : vector<16x128xi1>
    %970 = arith.xori %969, %cst_331 : vector<16x128xi1>
    %cst_332 = arith.constant dense<true> : vector<16x128xi1>
    %971 = arith.xori %970, %cst_332 : vector<16x128xi1>
    %972 = arith.ori %968, %971 : vector<16x128xi1>
    %cst_333 = arith.constant 4.000000e+01 : f32
    %973 = vector.broadcast %cst_333 : f32 to vector<16x128xf32>
    %974 = arith.select %972, %973, %963 : vector<16x128xi1>, vector<16x128xf32>
    %975 = math.floor %974 : vector<16x128xf32>
    %cst_334 = arith.constant 0.00557103055 : f32
    %976 = vector.broadcast %cst_334 : f32 to vector<16x128xf32>
    %977 = arith.mulf %949, %976 : vector<16x128xf32>
    %cst_335 = arith.constant 1.000000e+00 : f32
    %978 = vector.broadcast %cst_335 : f32 to vector<16x128xf32>
    %979 = arith.subf %977, %978 : vector<16x128xf32>
    %cst_336 = arith.constant 0.00836820062 : f32
    %980 = vector.broadcast %cst_336 : f32 to vector<16x128xf32>
    %981 = arith.mulf %950, %980 : vector<16x128xf32>
    %cst_337 = arith.constant 1.000000e+00 : f32
    %982 = vector.broadcast %cst_337 : f32 to vector<16x128xf32>
    %983 = arith.subf %981, %982 : vector<16x128xf32>
    %cst_338 = arith.constant 0.051282052 : f32
    %984 = vector.broadcast %cst_338 : f32 to vector<16x128xf32>
    %985 = arith.mulf %975, %984 : vector<16x128xf32>
    %cst_339 = arith.constant 1.000000e+00 : f32
    %986 = vector.broadcast %cst_339 : f32 to vector<16x128xf32>
    %987 = arith.subf %985, %986 : vector<16x128xf32>
    %988 = tpu.weird %979 : vector<16x128xf32> -> vector<16x128xi1>
    %cst_340 = arith.constant dense<true> : vector<16x128xi1>
    %989 = arith.xori %988, %cst_340 : vector<16x128xi1>
    %cst_341 = arith.constant -2.000000e+00 : f32
    %990 = vector.broadcast %cst_341 : f32 to vector<16x128xf32>
    %991 = arith.select %989, %979, %990 : vector<16x128xi1>, vector<16x128xf32>
    %c0_342 = arith.constant 0 : index
    %c6 = arith.constant 6 : index
    %c0_343 = arith.constant 0 : index
    %c0_344 = arith.constant 0 : index
    %c0_345 = arith.constant 0 : index
    %992 = vector.load %arg4[%c0_342, %c6, %c0_343, %c0_344, %c0_345] : memref<1x8x3x16x128xf32, #tpu.memory_space<vmem>>, vector<1x1x1x16x128xf32>
    %993 = vector.shape_cast %992 : vector<1x1x1x16x128xf32> to vector<16x128xf32>
    %994 = vector.shape_cast %991 : vector<16x128xf32> to vector<1x1x1x16x128xf32>
    tpu.vector_store %arg4[%c0_342, %c6, %c0_343, %c0_344, %c0_345], %994 {strides = array<i32>} : memref<1x8x3x16x128xf32, #tpu.memory_space<vmem>>, vector<1x1x1x16x128xf32>,
    %995 = tpu.weird %983 : vector<16x128xf32> -> vector<16x128xi1>
    %cst_346 = arith.constant dense<true> : vector<16x128xi1>
    %996 = arith.xori %995, %cst_346 : vector<16x128xi1>
    %cst_347 = arith.constant -2.000000e+00 : f32
    %997 = vector.broadcast %cst_347 : f32 to vector<16x128xf32>
    %998 = arith.select %996, %983, %997 : vector<16x128xi1>, vector<16x128xf32>
    %c0_348 = arith.constant 0 : index
    %c6_349 = arith.constant 6 : index
    %c1_350 = arith.constant 1 : index
    %c0_351 = arith.constant 0 : index
    %c0_352 = arith.constant 0 : index
    %999 = vector.load %arg4[%c0_348, %c6_349, %c1_350, %c0_351, %c0_352] : memref<1x8x3x16x128xf32, #tpu.memory_space<vmem>>, vector<1x1x1x16x128xf32>
    %1000 = vector.shape_cast %999 : vector<1x1x1x16x128xf32> to vector<16x128xf32>
    %1001 = vector.shape_cast %998 : vector<16x128xf32> to vector<1x1x1x16x128xf32>
    tpu.vector_store %arg4[%c0_348, %c6_349, %c1_350, %c0_351, %c0_352], %1001 {strides = array<i32>} : memref<1x8x3x16x128xf32, #tpu.memory_space<vmem>>, vector<1x1x1x16x128xf32>,
    %c0_353 = arith.constant 0 : index
    %c6_354 = arith.constant 6 : index
    %c2_355 = arith.constant 2 : index
    %c0_356 = arith.constant 0 : index
    %c0_357 = arith.constant 0 : index
    %1002 = vector.load %arg4[%c0_353, %c6_354, %c2_355, %c0_356, %c0_357] : memref<1x8x3x16x128xf32, #tpu.memory_space<vmem>>, vector<1x1x1x16x128xf32>
    %1003 = vector.shape_cast %1002 : vector<1x1x1x16x128xf32> to vector<16x128xf32>
    %1004 = vector.shape_cast %987 : vector<16x128xf32> to vector<1x1x1x16x128xf32>
    tpu.vector_store %arg4[%c0_353, %c6_354, %c2_355, %c0_356, %c0_357], %1004 {strides = array<i32>} : memref<1x8x3x16x128xf32, #tpu.memory_space<vmem>>, vector<1x1x1x16x128xf32>,
    %c7_i32 = arith.constant 7 : i32
    %1005 = arith.addi %0, %c7_i32 : i32
    %1006 = arith.sitofp %1005 : i32 to f32
    %cst_358 = arith.constant 5.000000e-01 : f32
    %1007 = arith.addf %1006, %cst_358 : f32
    %1008 = arith.mulf %54, %1007 : f32
    %1009 = vector.broadcast %1008 : f32 to vector<16x128xf32>
    %1010 = arith.addf %150, %1009 : vector<16x128xf32>
    %1011 = math.absf %1010 : vector<16x128xf32>
    %cst_359 = arith.constant 9.99999993E-9 : f32
    %1012 = vector.broadcast %cst_359 : f32 to vector<16x128xf32>
    %1013 = arith.cmpf ogt, %1011, %1012 : vector<16x128xf32>
    %cst_360 = arith.constant 9.99999993E-9 : f32
    %1014 = vector.broadcast %cst_360 : f32 to vector<16x128xf32>
    %1015 = arith.addf %1010, %1014 : vector<16x128xf32>
    %cst_361 = arith.constant 1.000000e+00 : f32
    %1016 = vector.broadcast %cst_361 : f32 to vector<16x128xf32>
    %1017 = arith.divf %1016, %1015 : vector<16x128xf32>
    %cst_362 = arith.constant 1.000000e+00 : f32
    %1018 = vector.broadcast %cst_362 : f32 to vector<16x128xf32>
    %1019 = arith.select %1013, %1017, %1018 : vector<16x128xi1>, vector<16x128xf32>
    %1020 = arith.mulf %6, %1007 : f32
    %1021 = vector.broadcast %1020 : f32 to vector<16x128xf32>
    %1022 = arith.addf %129, %1021 : vector<16x128xf32>
    %1023 = arith.mulf %1022, %1019 : vector<16x128xf32>
    %1024 = arith.mulf %22, %1007 : f32
    %1025 = vector.broadcast %1024 : f32 to vector<16x128xf32>
    %1026 = arith.addf %136, %1025 : vector<16x128xf32>
    %1027 = arith.mulf %1026, %1019 : vector<16x128xf32>
    %1028 = arith.mulf %38, %1007 : f32
    %1029 = vector.broadcast %1028 : f32 to vector<16x128xf32>
    %1030 = arith.addf %143, %1029 : vector<16x128xf32>
    %1031 = arith.mulf %1030, %1019 : vector<16x128xf32>
    %1032 = vector.broadcast %70 : f32 to vector<16x128xf32>
    %1033 = arith.mulf %1032, %1023 : vector<16x128xf32>
    %1034 = vector.broadcast %74 : f32 to vector<16x128xf32>
    %1035 = arith.mulf %1034, %1027 : vector<16x128xf32>
    %1036 = arith.addf %1033, %1035 : vector<16x128xf32>
    %1037 = vector.broadcast %78 : f32 to vector<16x128xf32>
    %1038 = arith.mulf %1037, %1031 : vector<16x128xf32>
    %1039 = arith.addf %1036, %1038 : vector<16x128xf32>
    %1040 = vector.broadcast %82 : f32 to vector<16x128xf32>
    %1041 = arith.addf %1039, %1040 : vector<16x128xf32>
    %1042 = vector.broadcast %86 : f32 to vector<16x128xf32>
    %1043 = arith.mulf %1042, %1023 : vector<16x128xf32>
    %1044 = vector.broadcast %90 : f32 to vector<16x128xf32>
    %1045 = arith.mulf %1044, %1027 : vector<16x128xf32>
    %1046 = arith.addf %1043, %1045 : vector<16x128xf32>
    %1047 = vector.broadcast %94 : f32 to vector<16x128xf32>
    %1048 = arith.mulf %1047, %1031 : vector<16x128xf32>
    %1049 = arith.addf %1046, %1048 : vector<16x128xf32>
    %1050 = vector.broadcast %98 : f32 to vector<16x128xf32>
    %1051 = arith.addf %1049, %1050 : vector<16x128xf32>
    %1052 = vector.broadcast %102 : f32 to vector<16x128xf32>
    %1053 = arith.mulf %1052, %1023 : vector<16x128xf32>
    %1054 = vector.broadcast %106 : f32 to vector<16x128xf32>
    %1055 = arith.mulf %1054, %1027 : vector<16x128xf32>
    %1056 = arith.addf %1053, %1055 : vector<16x128xf32>
    %1057 = vector.broadcast %110 : f32 to vector<16x128xf32>
    %1058 = arith.mulf %1057, %1031 : vector<16x128xf32>
    %1059 = arith.addf %1056, %1058 : vector<16x128xf32>
    %1060 = vector.broadcast %114 : f32 to vector<16x128xf32>
    %1061 = arith.addf %1059, %1060 : vector<16x128xf32>
    %1062 = math.absf %1061 : vector<16x128xf32>
    %cst_363 = arith.constant 9.99999993E-9 : f32
    %1063 = vector.broadcast %cst_363 : f32 to vector<16x128xf32>
    %1064 = arith.cmpf ogt, %1062, %1063 : vector<16x128xf32>
    %cst_364 = arith.constant 9.99999993E-9 : f32
    %1065 = vector.broadcast %cst_364 : f32 to vector<16x128xf32>
    %1066 = arith.addf %1061, %1065 : vector<16x128xf32>
    %cst_365 = arith.constant 1.000000e+00 : f32
    %1067 = vector.broadcast %cst_365 : f32 to vector<16x128xf32>
    %1068 = arith.divf %1067, %1066 : vector<16x128xf32>
    %cst_366 = arith.constant 1.000000e+00 : f32
    %1069 = vector.broadcast %cst_366 : f32 to vector<16x128xf32>
    %1070 = arith.select %1064, %1068, %1069 : vector<16x128xi1>, vector<16x128xf32>
    %1071 = arith.mulf %1041, %1070 : vector<16x128xf32>
    %1072 = arith.mulf %1051, %1070 : vector<16x128xf32>
    %1073 = vector.broadcast %114 : f32 to vector<16x128xf32>
    %1074 = arith.subf %1061, %1073 : vector<16x128xf32>
    %cst_367 = arith.constant 2.000000e+00 : f32
    %1075 = vector.broadcast %cst_367 : f32 to vector<16x128xf32>
    %1076 = arith.subf %1074, %1075 : vector<16x128xf32>
    %cst_368 = arith.constant 146.428574 : f32
    %1077 = vector.broadcast %cst_368 : f32 to vector<16x128xf32>
    %1078 = arith.mulf %1076, %1077 : vector<16x128xf32>
    %cst_369 = arith.constant 1.000000e+00 : f32
    %1079 = vector.broadcast %cst_369 : f32 to vector<16x128xf32>
    %1080 = arith.addf %1079, %1078 : vector<16x128xf32>
    %1081 = math.sqrt %1080 : vector<16x128xf32>
    %cst_370 = arith.constant 5.000000e-01 : f32
    %1082 = vector.broadcast %cst_370 : f32 to vector<16x128xf32>
    %1083 = arith.mulf %1082, %1081 : vector<16x128xf32>
    %cst_371 = arith.constant -5.000000e-01 : f32
    %1084 = vector.broadcast %cst_371 : f32 to vector<16x128xf32>
    %1085 = arith.addf %1084, %1083 : vector<16x128xf32>
    %cst_372 = arith.constant 0.000000e+00 : f32
    %1086 = vector.broadcast %cst_372 : f32 to vector<16x128xf32>
    %1087 = arith.cmpf olt, %1085, %1086 : vector<16x128xf32>
    %cst_373 = arith.constant 4.000000e+01 : f32
    %1088 = vector.broadcast %cst_373 : f32 to vector<16x128xf32>
    %1089 = arith.cmpf ogt, %1085, %1088 : vector<16x128xf32>
    %1090 = arith.ori %1087, %1089 : vector<16x128xi1>
    %1091 = tpu.weird %1085 : vector<16x128xf32> -> vector<16x128xi1>
    %cst_374 = arith.constant dense<true> : vector<16x128xi1>
    %1092 = arith.xori %1091, %cst_374 : vector<16x128xi1>
    %cst_375 = arith.constant dense<true> : vector<16x128xi1>
    %1093 = arith.xori %1092, %cst_375 : vector<16x128xi1>
    %1094 = arith.ori %1090, %1093 : vector<16x128xi1>
    %cst_376 = arith.constant 4.000000e+01 : f32
    %1095 = vector.broadcast %cst_376 : f32 to vector<16x128xf32>
    %1096 = arith.select %1094, %1095, %1085 : vector<16x128xi1>, vector<16x128xf32>
    %1097 = math.floor %1096 : vector<16x128xf32>
    %cst_377 = arith.constant 0.00557103055 : f32
    %1098 = vector.broadcast %cst_377 : f32 to vector<16x128xf32>
    %1099 = arith.mulf %1071, %1098 : vector<16x128xf32>
    %cst_378 = arith.constant 1.000000e+00 : f32
    %1100 = vector.broadcast %cst_378 : f32 to vector<16x128xf32>
    %1101 = arith.subf %1099, %1100 : vector<16x128xf32>
    %cst_379 = arith.constant 0.00836820062 : f32
    %1102 = vector.broadcast %cst_379 : f32 to vector<16x128xf32>
    %1103 = arith.mulf %1072, %1102 : vector<16x128xf32>
    %cst_380 = arith.constant 1.000000e+00 : f32
    %1104 = vector.broadcast %cst_380 : f32 to vector<16x128xf32>
    %1105 = arith.subf %1103, %1104 : vector<16x128xf32>
    %cst_381 = arith.constant 0.051282052 : f32
    %1106 = vector.broadcast %cst_381 : f32 to vector<16x128xf32>
    %1107 = arith.mulf %1097, %1106 : vector<16x128xf32>
    %cst_382 = arith.constant 1.000000e+00 : f32
    %1108 = vector.broadcast %cst_382 : f32 to vector<16x128xf32>
    %1109 = arith.subf %1107, %1108 : vector<16x128xf32>
    %1110 = tpu.weird %1101 : vector<16x128xf32> -> vector<16x128xi1>
    %cst_383 = arith.constant dense<true> : vector<16x128xi1>
    %1111 = arith.xori %1110, %cst_383 : vector<16x128xi1>
    %cst_384 = arith.constant -2.000000e+00 : f32
    %1112 = vector.broadcast %cst_384 : f32 to vector<16x128xf32>
    %1113 = arith.select %1111, %1101, %1112 : vector<16x128xi1>, vector<16x128xf32>
    %c0_385 = arith.constant 0 : index
    %c7 = arith.constant 7 : index
    %c0_386 = arith.constant 0 : index
    %c0_387 = arith.constant 0 : index
    %c0_388 = arith.constant 0 : index
    %1114 = vector.load %arg4[%c0_385, %c7, %c0_386, %c0_387, %c0_388] : memref<1x8x3x16x128xf32, #tpu.memory_space<vmem>>, vector<1x1x1x16x128xf32>
    %1115 = vector.shape_cast %1114 : vector<1x1x1x16x128xf32> to vector<16x128xf32>
    %1116 = vector.shape_cast %1113 : vector<16x128xf32> to vector<1x1x1x16x128xf32>
    tpu.vector_store %arg4[%c0_385, %c7, %c0_386, %c0_387, %c0_388], %1116 {strides = array<i32>} : memref<1x8x3x16x128xf32, #tpu.memory_space<vmem>>, vector<1x1x1x16x128xf32>,
    %1117 = tpu.weird %1105 : vector<16x128xf32> -> vector<16x128xi1>
    %cst_389 = arith.constant dense<true> : vector<16x128xi1>
    %1118 = arith.xori %1117, %cst_389 : vector<16x128xi1>
    %cst_390 = arith.constant -2.000000e+00 : f32
    %1119 = vector.broadcast %cst_390 : f32 to vector<16x128xf32>
    %1120 = arith.select %1118, %1105, %1119 : vector<16x128xi1>, vector<16x128xf32>
    %c0_391 = arith.constant 0 : index
    %c7_392 = arith.constant 7 : index
    %c1_393 = arith.constant 1 : index
    %c0_394 = arith.constant 0 : index
    %c0_395 = arith.constant 0 : index
    %1121 = vector.load %arg4[%c0_391, %c7_392, %c1_393, %c0_394, %c0_395] : memref<1x8x3x16x128xf32, #tpu.memory_space<vmem>>, vector<1x1x1x16x128xf32>
    %1122 = vector.shape_cast %1121 : vector<1x1x1x16x128xf32> to vector<16x128xf32>
    %1123 = vector.shape_cast %1120 : vector<16x128xf32> to vector<1x1x1x16x128xf32>
    tpu.vector_store %arg4[%c0_391, %c7_392, %c1_393, %c0_394, %c0_395], %1123 {strides = array<i32>} : memref<1x8x3x16x128xf32, #tpu.memory_space<vmem>>, vector<1x1x1x16x128xf32>,
    %c0_396 = arith.constant 0 : index
    %c7_397 = arith.constant 7 : index
    %c2_398 = arith.constant 2 : index
    %c0_399 = arith.constant 0 : index
    %c0_400 = arith.constant 0 : index
    %1124 = vector.load %arg4[%c0_396, %c7_397, %c2_398, %c0_399, %c0_400] : memref<1x8x3x16x128xf32, #tpu.memory_space<vmem>>, vector<1x1x1x16x128xf32>
    %1125 = vector.shape_cast %1124 : vector<1x1x1x16x128xf32> to vector<16x128xf32>
    %1126 = vector.shape_cast %1109 : vector<16x128xf32> to vector<1x1x1x16x128xf32>
    tpu.vector_store %arg4[%c0_396, %c7_397, %c2_398, %c0_399, %c0_400], %1126 {strides = array<i32>} : memref<1x8x3x16x128xf32, #tpu.memory_space<vmem>>, vector<1x1x1x16x128xf32>,
    return
  }
  func.func @transform_0(%arg0: i32, %arg1: i32) -> i32 {
    %c0_i32 = arith.constant 0 : i32
    %c0_i32_0 = arith.constant 0 : i32
    return %c0_i32 : i32
  }
  func.func @transform_1(%arg0: i32, %arg1: i32) -> i32 {
    %c0_i32 = arith.constant 0 : i32
    %c0_i32_0 = arith.constant 0 : i32
    return %c0_i32 : i32
  }
  func.func @transform_2(%arg0: i32, %arg1: i32) -> (i32, i32, i32, i32, i32) {
    %c0_i32 = arith.constant 0 : i32
    %c0_i32_0 = arith.constant 0 : i32
    %c0_i32_1 = arith.constant 0 : i32
    %c0_i32_2 = arith.constant 0 : i32
    return %arg0, %arg1, %c0_i32, %c0_i32_0, %c0_i32_1 : i32, i32, i32, i32, i32
  }
}

</mosaic_0001>

<llo_original>
// kernel: tpu_custom_call.1
$region0: #{tpu_custom_call.1}
  #allocation0 [shape = 'u32[]', space=smem, size = 0x4, offset = 0x4, fixed_abs, tag = 'smem constant byte address 0x4 - core index']
  #allocation1 [shape = 'u32[144,128]{1,0:T(1,128)}', space=vmem, size = 0x12000, scoped, tag = 'internal scratch']
  %s0 = inlined_call_operand.hbm [shape: f32[32], index: 0, kind: input, shape index: {}]
  %s1 = inlined_call_operand.vmem [shape: f32[24], index: 1, kind: input, shape index: {}]
  %s2 = inlined_call_operand.hbm [shape: f32[2,8,3,16,128], index: 2, kind: output, shape index: {}]
  %s3 = sld [smem:[#allocation0]]
  $region49: #{tpu_custom_call.1} parent=0
    _
  %s5 = ssub.s32 1, %s3
  %s6 = scalar_select 0, %s5, %s3
  $region1: #{tpu_custom_call.1} parent=0
    #allocation2 [shape = 'u8[512]{0}', space=smem, size = 0x200, scoped, tag = 'input window, operand 0, single buffered']
    #allocation3 [shape = 's32[2]{0}', space=sflag, size = 0x8, scoped, tag = 'scoped memory for tpu_custom_call.1']
    #allocation4 [shape = 's32[2]{0}', space=sflag, size = 0x8, scoped, tag = 'scoped memory for tpu_custom_call.1']
    #allocation5 [shape = 's32[2]{0}', space=sflag, size = 0x8, scoped, tag = 'scoped memory for tpu_custom_call.1']
    #allocation6 [shape = 'u8[512]{0}', space=smem, size = 0x200, scoped, tag = 'input window, operand 1, single buffered']
    #allocation7 [shape = 'u8[393216]{0}', space=vmem, size = 0x60000, scoped, tag = 'output window, operand 0']
    %7 = vsyncpa [#allocation4], 0
    %8 = vsyncpa [#allocation5], 0
    %9 = vsyncpa [#allocation3], 0
    %s10 = scalar_lea.sflag [#allocation3], 1
    %11 = vsyncpa %s10, 0
    loop: start=0, step=1, limit=4
    $region2: #{tpu_custom_call.1} parent=1 // loop_pre_header
      _
    $region3: #{tpu_custom_call.1} parent=1 // loop_header
      %s13 = sphi 0, %s17
      %p14 = scmp.ge.s32.totalorder %s13, 4
      %s20 = sphi 0, %s32
      %s21 = sphi 0, %s28
      %s22 = sphi 0, %s20
      %s23 = sphi 0, %s21
      %s24 = sphi 0, %s22
      %s25 = sphi 0, %s23
      %s33 = sphi 0, %s33
      %s35 = sphi 0, %s33
      %s36 = sphi 0, %s35
      %s50 = sphi 0, %s36
      %s54 = sphi 0, %s54
      %s56 = sphi 0, %s54
      %s57 = sphi 0, %s56
      %s71 = sphi 0, %s57
      %s79 = sphi 0, %s81
      %s82 = sphi 0, %s79
      %s83 = sphi 0, %s82
      %s99 = sphi 0, %s83
    $region4: #{tpu_custom_call.1} parent=1 // loop_header_branch
      %16 = sbr.rel (%p14) target = $region8
    $region5: #{tpu_custom_call.1} parent=1 // loop_body
      %s18 = ssub.s32 %s13, 1
      %s19 = ssub.s32 %s13, 2
      %s26 = sadd.s32 1, %s21
      %p27 = scmp.ge.s32.totalorder %s26, 1
      %s28 = scalar_select %p27, 0, %s26
      %s29 = sadd.s32 1, %s20
      %s30 = scalar_select %p27, %s29, %s20
      %p31 = scmp.ge.s32.totalorder %s30, 2
      %s32 = scalar_select %p31, 0, %s30
      %s34 = sadd.s32 %s33, 1
      %p37 = scmp.eq.s32.totalorder %s13, 1
      %p38 = scmp.ne.s32.totalorder %s33, %s35
      %p39 = scmp.eq.s32.totalorder %s13, 0
      %p40 = por %p38, %p39
      %p41 = scmp.ne.s32.totalorder %s33, %s35
      %p42 = scmp.eq.s32.totalorder %s18, 1
      %p43 = por %p41, %p42
      %p44 = scmp.ne.s32.totalorder %s35, %s36
      %p45 = scmp.eq.s32.totalorder %s18, 0
      %p46 = por %p44, %p45
      %p47 = scmp.ne.s32.totalorder %s35, %s36
      %p48 = scmp.eq.s32.totalorder %s19, 1
      %p49 = por %p47, %p48
      %p51 = scmp.ne.s32.totalorder %s36, %s50
      %p52 = scmp.eq.s32.totalorder %s19, 0
      %p53 = por %p51, %p52
      %s55 = sadd.s32 %s54, 1
      %p58 = scmp.eq.s32.totalorder %s13, 1
      %p59 = scmp.ne.s32.totalorder %s54, %s56
      %p60 = scmp.eq.s32.totalorder %s13, 0
      %p61 = por %p59, %p60
      %p62 = scmp.ne.s32.totalorder %s54, %s56
      %p63 = scmp.eq.s32.totalorder %s18, 1
      %p64 = por %p62, %p63
      %p65 = scmp.ne.s32.totalorder %s56, %s57
      %p66 = scmp.eq.s32.totalorder %s18, 0
      %p67 = por %p65, %p66
      %p68 = scmp.ne.s32.totalorder %s56, %s57
      %p69 = scmp.eq.s32.totalorder %s19, 1
      %p70 = por %p68, %p69
      %p72 = scmp.ne.s32.totalorder %s57, %s71
      %p73 = scmp.eq.s32.totalorder %s19, 0
      %p74 = por %p72, %p73
      %s75 = ssub.s32 %s20, %s32
      %s76 = ssub.s32 %s21, %s28
      %s77 = sor.u32 %s75, %s76
      %p78 = scmp.eq.s32.totalorder %s77, 0
      %s80 = sadd.s32 %s79, 1
      %s81 = scalar_select %p78, %s79, %s80
      %p84 = pneg %p78
      %p85 = scmp.eq.s32.totalorder %s13, 1
      %p86 = por %p84, %p85
      %p87 = scmp.ne.s32.totalorder %s79, %s82
      %p88 = scmp.eq.s32.totalorder %s13, 0
      %p89 = por %p87, %p88
      %p90 = scmp.ne.s32.totalorder %s79, %s82
      %p91 = scmp.eq.s32.totalorder %s18, 1
      %p92 = por %p90, %p91
      %p93 = scmp.ne.s32.totalorder %s82, %s83
      %p94 = scmp.eq.s32.totalorder %s18, 0
      %p95 = por %p93, %p94
      %p96 = scmp.ne.s32.totalorder %s82, %s83
      %p97 = scmp.eq.s32.totalorder %s19, 1
      %p98 = por %p96, %p97
      %p100 = scmp.ne.s32.totalorder %s83, %s99
      %p101 = scmp.eq.s32.totalorder %s19, 0
      %p102 = por %p100, %p101
      %p103 = scmp.le.s32.totalorder 1, %s13
      %p104 = scmp.lt.s32.totalorder %s13, 3
      %p105 = pnand %p103, %p104
      %p106 = pneg %p105
      // Predicated region
      $region9: #{tpu_custom_call.1} parent=5 // pred_check
        _
      $region10: #{tpu_custom_call.1} parent=5 // pred_check_branch
        %108 = sbr.rel (%p105) target = $region12
      $region11: #{tpu_custom_call.1} parent=5 // pred_region
        %s109 = ssub.s32 %s13, 1
        // Predicated region
        $region13: #{tpu_custom_call.1} parent=11 // pred_check
          %p110 = pneg %p46
        $region14: #{tpu_custom_call.1} parent=11 // pred_check_branch
          %112 = sbr.rel (%p110) target = $region16
        $region15: #{tpu_custom_call.1} parent=11 // pred_region
          %s114 = ssub.s32 16, 16
          %115 = vsyncadd [#allocation4], %s114
          %118 = dma.hbm_to_smem %s0, 16, [#allocation2], [#allocation4]
        $region16: #{tpu_custom_call.1} parent=11 // pred_fallthru
          _
        // Predicated region
        $region17: #{tpu_custom_call.1} parent=11 // pred_check
          %p119 = pneg %p67
        $region18: #{tpu_custom_call.1} parent=11 // pred_check_branch
          %121 = sbr.rel (%p119) target = $region20
        $region19: #{tpu_custom_call.1} parent=11 // pred_region
          %s123 = ssub.s32 16, 16
          %124 = vsyncadd [#allocation5], %s123
          %s126 = sshll.u32 %s1, 4
          %s127 = int_to_ptr.vmem [resolvable:$true] %s126
          %129 = dma.vmem_to_smem %s127, 16, [#allocation6], [#allocation5]
        $region20: #{tpu_custom_call.1} parent=11 // pred_fallthru
          _
      $region12: #{tpu_custom_call.1} parent=5 // pred_fallthru
        _
      %p130 = scmp.lt.s32.totalorder %s13, 2
      // Predicated region
      $region21: #{tpu_custom_call.1} parent=5 // pred_check
        %p131 = pneg %p130
      $region22: #{tpu_custom_call.1} parent=5 // pred_check_branch
        %133 = sbr.rel (%p131) target = $region24
      $region23: #{tpu_custom_call.1} parent=5 // pred_region
        _
      $region24: #{tpu_custom_call.1} parent=5 // pred_fallthru
        _
      %p134 = scmp.le.s32.totalorder 1, %s13
      %p135 = scmp.lt.s32.totalorder %s13, 3
      %p136 = pnand %p134, %p135
      %p137 = pneg %p136
      // Predicated region
      $region25: #{tpu_custom_call.1} parent=5 // pred_check
        _
      $region26: #{tpu_custom_call.1} parent=5 // pred_check_branch
        %139 = sbr.rel (%p136) target = $region28
      $region27: #{tpu_custom_call.1} parent=5 // pred_region
        %s140 = ssub.s32 %s13, 1
        // Predicated region
        $region29: #{tpu_custom_call.1} parent=27 // pred_check
          %p141 = pneg %p46
        $region30: #{tpu_custom_call.1} parent=27 // pred_check_branch
          %143 = sbr.rel (%p141) target = $region32
        $region31: #{tpu_custom_call.1} parent=27 // pred_region
          %144 = dma.done [#allocation4], 16
        $region32: #{tpu_custom_call.1} parent=27 // pred_fallthru
          _
        // Predicated region
        $region33: #{tpu_custom_call.1} parent=27 // pred_check
          %p145 = pneg %p67
        $region34: #{tpu_custom_call.1} parent=27 // pred_check_branch
          %147 = sbr.rel (%p145) target = $region36
        $region35: #{tpu_custom_call.1} parent=27 // pred_region
          %148 = dma.done [#allocation5], 16
        $region36: #{tpu_custom_call.1} parent=27 // pred_fallthru
          _
        %149 = sfence
        %p150 = pneg %p46
        %p151 = pneg %p43
        %p152 = pneg %p67
        %p153 = pneg %p64
        %p154 = pneg %p95
        %p155 = pneg %p92
        %s156 = sand.u32 %s82, 1
        %s157 = scalar_lea.sflag [#allocation3], %s156
        %s158 = sand.u32 %s82, 1
        %s159 = smul.addr %s158, 384
        %s160 = scalar_lea.vmem [#allocation7], %s159
        %s161 = smul.u32 8, %s23
        %s162 = smul.u32 %s23, 8
        %s163 = smul.u32 %s22, 16
        %s164 = smul.u32 %s22, 12
        %s165 = sld [smem:[#allocation2 + %s163]]
        %s166 = sadd.s32 %s163, 1
        %s167 = sld [smem:[#allocation2 + %s166]]
        %s168 = sadd.s32 %s163, 2
        %s169 = sld [smem:[#allocation2 + %s168]]
        %s170 = sadd.s32 %s163, 3
        %s171 = sld [smem:[#allocation2 + %s170]]
        %s172 = sadd.s32 %s163, 4
        %s173 = sld [smem:[#allocation2 + %s172]]
        %s174 = sadd.s32 %s163, 5
        %s175 = sld [smem:[#allocation2 + %s174]]
        %s176 = sadd.s32 %s163, 6
        %s177 = sld [smem:[#allocation2 + %s176]]
        %s178 = sadd.s32 %s163, 7
        %s179 = sld [smem:[#allocation2 + %s178]]
        %s180 = sadd.s32 %s163, 8
        %s181 = sld [smem:[#allocation2 + %s180]]
        %s182 = sadd.s32 %s163, 9
        %s183 = sld [smem:[#allocation2 + %s182]]
        %s184 = sadd.s32 %s163, 10
        %s185 = sld [smem:[#allocation2 + %s184]]
        %s186 = sadd.s32 %s163, 11
        %s187 = sld [smem:[#allocation2 + %s186]]
        %s188 = sadd.s32 %s163, 12
        %s189 = sld [smem:[#allocation2 + %s188]]
        %s190 = sadd.s32 %s163, 13
        %s191 = sld [smem:[#allocation2 + %s190]]
        %s192 = sadd.s32 %s163, 14
        %s193 = sld [smem:[#allocation2 + %s192]]
        %s194 = sadd.s32 %s163, 15
        %s195 = sld [smem:[#allocation2 + %s194]]
        %s196 = sld [smem:[#allocation6 + %s164]]
        %s197 = sadd.s32 %s164, 1
        %s198 = sld [smem:[#allocation6 + %s197]]
        %s199 = sadd.s32 %s164, 2
        %s200 = sld [smem:[#allocation6 + %s199]]
        %s201 = sadd.s32 %s164, 3
        %s202 = sld [smem:[#allocation6 + %s201]]
        %s203 = sadd.s32 %s164, 4
        %s204 = sld [smem:[#allocation6 + %s203]]
        %s205 = sadd.s32 %s164, 5
        %s206 = sld [smem:[#allocation6 + %s205]]
        %s207 = sadd.s32 %s164, 6
        %s208 = sld [smem:[#allocation6 + %s207]]
        %s209 = sadd.s32 %s164, 7
        %s210 = sld [smem:[#allocation6 + %s209]]
        %s211 = sadd.s32 %s164, 8
        %s212 = sld [smem:[#allocation6 + %s211]]
        %s213 = sadd.s32 %s164, 9
        %s214 = sld [smem:[#allocation6 + %s213]]
        %s215 = sadd.s32 %s164, 10
        %s216 = sld [smem:[#allocation6 + %s215]]
        %s217 = sadd.s32 %s164, 11
        %s218 = sld [smem:[#allocation6 + %s217]]
        %v219 = vlaneseq
        %v220 = vand.u32 %v219, 127
        %v221 = vcvt.s32.f32 %v220
        %v222 = vadd.f32 %v221, 0.5
        %v223 = vlaneseq
        %v224 = vshrl.u32 %v223, 7
        %v225 = vadd.s32 %v224, 8
        %v226 = vcvt.s32.f32 %v224
        %v227 = vcvt.s32.f32 %v225
        %v228 = vadd.f32 %v226, 0.5
        %v229 = vadd.f32 %v227, 0.5
        %v230 = vstv %s167
        %v231 = vmul.f32 %v230, %v222
        %v232 = vstv %s169
        %v233 = vmul.f32 %v232, %v228
        %v234 = vmul.f32 %v232, %v229
        %v235 = vadd.f32 %v231, %v233
        %v236 = vadd.f32 %v231, %v234
        %v237 = vstv %s171
        %v238 = vadd.f32 %v235, %v237
        %v239 = vadd.f32 %v236, %v237
        %v240 = vstv %s175
        %v241 = vmul.f32 %v240, %v222
        %v242 = vstv %s177
        %v243 = vmul.f32 %v242, %v228
        %v244 = vmul.f32 %v242, %v229
        %v245 = vadd.f32 %v241, %v243
        %v246 = vadd.f32 %v241, %v244
        %v247 = vstv %s179
        %v248 = vadd.f32 %v245, %v247
        %v249 = vadd.f32 %v246, %v247
        %v250 = vstv %s183
        %v251 = vmul.f32 %v250, %v222
        %v252 = vstv %s185
        %v253 = vmul.f32 %v252, %v228
        %v254 = vmul.f32 %v252, %v229
        %v255 = vadd.f32 %v251, %v253
        %v256 = vadd.f32 %v251, %v254
        %v257 = vstv %s187
        %v258 = vadd.f32 %v255, %v257
        %v259 = vadd.f32 %v256, %v257
        %v260 = vstv %s191
        %v261 = vmul.f32 %v260, %v222
        %v262 = vstv %s193
        %v263 = vmul.f32 %v262, %v228
        %v264 = vmul.f32 %v262, %v229
        %v265 = vadd.f32 %v261, %v263
        %v266 = vadd.f32 %v261, %v264
        %v267 = vstv %s195
        %v268 = vadd.f32 %v265, %v267
        %v269 = vadd.f32 %v266, %v267
        %s270 = scvt.s32.f32 %s162
        %s271 = sadd.f32 %s270, 0.5
        %s272 = smul.f32 %s189, %s271
        %v273 = vstv %s272
        %v274 = vadd.f32 %v268, %v273
        %v275 = vadd.f32 %v269, %v273
        %v276 = vand.u32 2147483647, %v274
        %v277 = vand.u32 2147483647, %v275
        %vm278 = vcmp.gt.f32.partialorder %v276, 1e-08
        %vm279 = vcmp.gt.f32.partialorder %v277, 1e-08
        %v280 = vadd.f32 %v274, 1e-08
        %v281 = vadd.f32 %v275, 1e-08
        %v282 = vrcp.pop %v280
        %v283 = vmul.f32 1.0, %v282
        %v284 = vrcp.pop %v281
        %v285 = vmul.f32 1.0, %v284
        %v286 = vsel %vm278, %v283, 1.0
        %v287 = vsel %vm279, %v285, 1.0
        %s288 = smul.f32 %s165, %s271
        %v289 = vstv %s288
        %v290 = vadd.f32 %v238, %v289
        %v291 = vadd.f32 %v239, %v289
        %v292 = vmul.f32 %v290, %v286
        %v293 = vmul.f32 %v291, %v287
        %s294 = smul.f32 %s173, %s271
        %v295 = vstv %s294
        %v296 = vadd.f32 %v248, %v295
        %v297 = vadd.f32 %v249, %v295
        %v298 = vmul.f32 %v296, %v286
        %v299 = vmul.f32 %v297, %v287
        %s300 = smul.f32 %s181, %s271
        %v301 = vstv %s300
        %v302 = vadd.f32 %v258, %v301
        %v303 = vadd.f32 %v259, %v301
        %v304 = vmul.f32 %v302, %v286
        %v305 = vmul.f32 %v303, %v287
        %v306 = vstv %s196
        %v307 = vmul.f32 %v306, %v292
        %v308 = vmul.f32 %v306, %v293
        %v309 = vstv %s198
        %v310 = vmul.f32 %v309, %v298
        %v311 = vmul.f32 %v309, %v299
        %v312 = vadd.f32 %v307, %v310
        %v313 = vadd.f32 %v308, %v311
        %v314 = vstv %s200
        %v315 = vmul.f32 %v314, %v304
        %v316 = vmul.f32 %v314, %v305
        %v317 = vadd.f32 %v312, %v315
        %v318 = vadd.f32 %v313, %v316
        %v319 = vstv %s202
        %v320 = vadd.f32 %v317, %v319
        %v321 = vadd.f32 %v318, %v319
        %v322 = vstv %s204
        %v323 = vmul.f32 %v322, %v292
        %v324 = vmul.f32 %v322, %v293
        %v325 = vstv %s206
        %v326 = vmul.f32 %v325, %v298
        %v327 = vmul.f32 %v325, %v299
        %v328 = vadd.f32 %v323, %v326
        %v329 = vadd.f32 %v324, %v327
        %v330 = vstv %s208
        %v331 = vmul.f32 %v330, %v304
        %v332 = vmul.f32 %v330, %v305
        %v333 = vadd.f32 %v328, %v331
        %v334 = vadd.f32 %v329, %v332
        %v335 = vstv %s210
        %v336 = vadd.f32 %v333, %v335
        %v337 = vadd.f32 %v334, %v335
        %v338 = vstv %s212
        %v339 = vmul.f32 %v338, %v292
        %v340 = vmul.f32 %v338, %v293
        %v341 = vstv %s214
        %v342 = vmul.f32 %v341, %v298
        %v343 = vmul.f32 %v341, %v299
        %v344 = vadd.f32 %v339, %v342
        %v345 = vadd.f32 %v340, %v343
        %v346 = vstv %s216
        %v347 = vmul.f32 %v346, %v304
        %v348 = vmul.f32 %v346, %v305
        %v349 = vadd.f32 %v344, %v347
        %v350 = vadd.f32 %v345, %v348
        %v351 = vstv %s218
        %v352 = vadd.f32 %v349, %v351
        %v353 = vadd.f32 %v350, %v351
        %v354 = vand.u32 2147483647, %v352
        %v355 = vand.u32 2147483647, %v353
        %vm356 = vcmp.gt.f32.partialorder %v354, 1e-08
        %vm357 = vcmp.gt.f32.partialorder %v355, 1e-08
        %v358 = vadd.f32 %v352, 1e-08
        %v359 = vadd.f32 %v353, 1e-08
        %v360 = vrcp.pop %v358
        %v361 = vmul.f32 1.0, %v360
        %v362 = vrcp.pop %v359
        %v363 = vmul.f32 1.0, %v362
        %v364 = vsel %vm356, %v361, 1.0
        %v365 = vsel %vm357, %v363, 1.0
        %v366 = vmul.f32 %v320, %v364
        %v367 = vmul.f32 %v321, %v365
        %v368 = vmul.f32 %v336, %v364
        %v369 = vmul.f32 %v337, %v365
        %v370 = vsub.f32 %v352, %v351
        %v371 = vsub.f32 %v353, %v351
        %v372 = vsub.f32 %v370, 2.0
        %v373 = vsub.f32 %v371, 2.0
        %v374 = vmul.f32 %v372, 146.42857
        %v375 = vmul.f32 %v373, 146.42857
        %v376 = vadd.f32 %v374, 1.0
        %v377 = vadd.f32 %v375, 1.0
        %v378 = vrsqrt.pop %v376
        %v379 = vmul.f32 %v376, %v378
        %vm380 = vcmp.eq.f32.partialorder %v376, inf
        %v381 = vsel %vm380, %v376, %v379
        %vm382 = vcmp.eq.f32.partialorder %v376, 0.0
        %v383 = vand.u32 %v376, 2147483648
        %v384 = vsel %vm382, %v383, %v381
        %v385 = vrsqrt.pop %v377
        %v386 = vmul.f32 %v377, %v385
        %vm387 = vcmp.eq.f32.partialorder %v377, inf
        %v388 = vsel %vm387, %v377, %v386
        %vm389 = vcmp.eq.f32.partialorder %v377, 0.0
        %v390 = vand.u32 %v377, 2147483648
        %v391 = vsel %vm389, %v390, %v388
        %v392 = vmul.f32 %v384, 0.5
        %v393 = vmul.f32 %v391, 0.5
        %v394 = vadd.f32 %v392, -0.5
        %v395 = vadd.f32 %v393, -0.5
        %vm396 = vcmp.lt.f32.partialorder %v394, 0.0
        %vm397 = vcmp.lt.f32.partialorder %v395, 0.0
        %vm398 = vcmp.gt.f32.partialorder %v394, 40.0
        %vm399 = vcmp.gt.f32.partialorder %v395, 40.0
        %vm400 = vmor %vm396, %vm398
        %vm401 = vmor %vm397, %vm399
        %vm402 = vweird.f32 %v394
        %vm403 = vweird.f32 %v395
        %vm404 = vmor %vm400, %vm402
        %vm405 = vmor %vm401, %vm403
        %v406 = vsel %vm404, 40.0, %v394
        %v407 = vsel %vm405, 40.0, %v395
        %v408 = vfloor.f32 %v406
        %v409 = vfloor.f32 %v407
        %v410 = vmul.f32 %v366, 0.0055710305
        %v411 = vmul.f32 %v367, 0.0055710305
        %v412 = vsub.f32 %v410, 1.0
        %v413 = vsub.f32 %v411, 1.0
        %v414 = vmul.f32 %v368, 0.008368201
        %v415 = vmul.f32 %v369, 0.008368201
        %v416 = vsub.f32 %v414, 1.0
        %v417 = vsub.f32 %v415, 1.0
        %v418 = vmul.f32 %v408, 0.051282052
        %v419 = vmul.f32 %v409, 0.051282052
        %v420 = vsub.f32 %v418, 1.0
        %v421 = vsub.f32 %v419, 1.0
        %vm422 = vweird.f32 %v412
        %vm423 = vweird.f32 %v413
        %vm424 = vmxor %vm422, 1
        %vm425 = vmxor %vm423, 1
        %v426 = vsel %vm424, %v412, -2.0
        %v427 = vsel %vm425, %v413, -2.0
        %428 = vst [vmem:[%s160] sm:$0xff] %v426
        %429 = vst [vmem:[%s160 + $0x8] sm:$0xff] %v427
        %vm430 = vweird.f32 %v416
        %vm431 = vweird.f32 %v417
        %vm432 = vmxor %vm430, 1
        %vm433 = vmxor %vm431, 1
        %v434 = vsel %vm432, %v416, -2.0
        %v435 = vsel %vm433, %v417, -2.0
        %s436 = scalar_lea.vmem %s160, 16 [#allocation7]
        %437 = vst [vmem:[%s436] sm:$0xff] %v434
        %438 = vst [vmem:[%s436 + $0x8] sm:$0xff] %v435
        %s439 = scalar_lea.vmem %s160, 32 [#allocation7]
        %440 = vst [vmem:[%s439] sm:$0xff] %v420
        %441 = vst [vmem:[%s439 + $0x8] sm:$0xff] %v421
        %s442 = sadd.s32 %s162, 1
        %s443 = scvt.s32.f32 %s442
        %s444 = sadd.f32 %s443, 0.5
        %s445 = smul.f32 %s189, %s444
        %v446 = vstv %s445
        %v447 = vadd.f32 %v268, %v446
        %v448 = vadd.f32 %v269, %v446
        %v449 = vand.u32 2147483647, %v447
        %v450 = vand.u32 2147483647, %v448
        %vm451 = vcmp.gt.f32.partialorder %v449, 1e-08
        %vm452 = vcmp.gt.f32.partialorder %v450, 1e-08
        %v453 = vadd.f32 %v447, 1e-08
        %v454 = vadd.f32 %v448, 1e-08
        %v455 = vrcp.pop %v453
        %v456 = vmul.f32 1.0, %v455
        %v457 = vrcp.pop %v454
        %v458 = vmul.f32 1.0, %v457
        %v459 = vsel %vm451, %v456, 1.0
        %v460 = vsel %vm452, %v458, 1.0
        %s461 = smul.f32 %s165, %s444
        %v462 = vstv %s461
        %v463 = vadd.f32 %v238, %v462
        %v464 = vadd.f32 %v239, %v462
        %v465 = vmul.f32 %v463, %v459
        %v466 = vmul.f32 %v464, %v460
        %s467 = smul.f32 %s173, %s444
        %v468 = vstv %s467
        %v469 = vadd.f32 %v248, %v468
        %v470 = vadd.f32 %v249, %v468
        %v471 = vmul.f32 %v469, %v459
        %v472 = vmul.f32 %v470, %v460
        %s473 = smul.f32 %s181, %s444
        %v474 = vstv %s473
        %v475 = vadd.f32 %v258, %v474
        %v476 = vadd.f32 %v259, %v474
        %v477 = vmul.f32 %v475, %v459
        %v478 = vmul.f32 %v476, %v460
        %v479 = vmul.f32 %v306, %v465
        %v480 = vmul.f32 %v306, %v466
        %v481 = vmul.f32 %v309, %v471
        %v482 = vmul.f32 %v309, %v472
        %v483 = vadd.f32 %v479, %v481
        %v484 = vadd.f32 %v480, %v482
        %v485 = vmul.f32 %v314, %v477
        %v486 = vmul.f32 %v314, %v478
        %v487 = vadd.f32 %v483, %v485
        %v488 = vadd.f32 %v484, %v486
        %v489 = vadd.f32 %v487, %v319
        %v490 = vadd.f32 %v488, %v319
        %v491 = vmul.f32 %v322, %v465
        %v492 = vmul.f32 %v322, %v466
        %v493 = vmul.f32 %v325, %v471
        %v494 = vmul.f32 %v325, %v472
        %v495 = vadd.f32 %v491, %v493
        %v496 = vadd.f32 %v492, %v494
        %v497 = vmul.f32 %v330, %v477
        %v498 = vmul.f32 %v330, %v478
        %v499 = vadd.f32 %v495, %v497
        %v500 = vadd.f32 %v496, %v498
        %v501 = vadd.f32 %v499, %v335
        %v502 = vadd.f32 %v500, %v335
        %v503 = vmul.f32 %v338, %v465
        %v504 = vmul.f32 %v338, %v466
        %v505 = vmul.f32 %v341, %v471
        %v506 = vmul.f32 %v341, %v472
        %v507 = vadd.f32 %v503, %v505
        %v508 = vadd.f32 %v504, %v506
        %v509 = vmul.f32 %v346, %v477
        %v510 = vmul.f32 %v346, %v478
        %v511 = vadd.f32 %v507, %v509
        %v512 = vadd.f32 %v508, %v510
        %v513 = vadd.f32 %v511, %v351
        %v514 = vadd.f32 %v512, %v351
        %v515 = vand.u32 2147483647, %v513
        %v516 = vand.u32 2147483647, %v514
        %vm517 = vcmp.gt.f32.partialorder %v515, 1e-08
        %vm518 = vcmp.gt.f32.partialorder %v516, 1e-08
        %v519 = vadd.f32 %v513, 1e-08
        %v520 = vadd.f32 %v514, 1e-08
        %v521 = vrcp.pop %v519
        %v522 = vmul.f32 1.0, %v521
        %v523 = vrcp.pop %v520
        %v524 = vmul.f32 1.0, %v523
        %v525 = vsel %vm517, %v522, 1.0
        %v526 = vsel %vm518, %v524, 1.0
        %v527 = vmul.f32 %v489, %v525
        %v528 = vmul.f32 %v490, %v526
        %v529 = vmul.f32 %v501, %v525
        %v530 = vmul.f32 %v502, %v526
        %v531 = vsub.f32 %v513, %v351
        %v532 = vsub.f32 %v514, %v351
        %v533 = vsub.f32 %v531, 2.0
        %v534 = vsub.f32 %v532, 2.0
        %v535 = vmul.f32 %v533, 146.42857
        %v536 = vmul.f32 %v534, 146.42857
        %v537 = vadd.f32 %v535, 1.0
        %v538 = vadd.f32 %v536, 1.0
        %v539 = vrsqrt.pop %v537
        %v540 = vmul.f32 %v537, %v539
        %vm541 = vcmp.eq.f32.partialorder %v537, inf
        %v542 = vsel %vm541, %v537, %v540
        %vm543 = vcmp.eq.f32.partialorder %v537, 0.0
        %v544 = vand.u32 %v537, 2147483648
        %v545 = vsel %vm543, %v544, %v542
        %v546 = vrsqrt.pop %v538
        %v547 = vmul.f32 %v538, %v546
        %vm548 = vcmp.eq.f32.partialorder %v538, inf
        %v549 = vsel %vm548, %v538, %v547
        %vm550 = vcmp.eq.f32.partialorder %v538, 0.0
        %v551 = vand.u32 %v538, 2147483648
        %v552 = vsel %vm550, %v551, %v549
        %v553 = vmul.f32 %v545, 0.5
        %v554 = vmul.f32 %v552, 0.5
        %v555 = vadd.f32 %v553, -0.5
        %v556 = vadd.f32 %v554, -0.5
        %vm557 = vcmp.lt.f32.partialorder %v555, 0.0
        %vm558 = vcmp.lt.f32.partialorder %v556, 0.0
        %vm559 = vcmp.gt.f32.partialorder %v555, 40.0
        %vm560 = vcmp.gt.f32.partialorder %v556, 40.0
        %vm561 = vmor %vm557, %vm559
        %vm562 = vmor %vm558, %vm560
        %vm563 = vweird.f32 %v555
        %vm564 = vweird.f32 %v556
        %vm565 = vmor %vm561, %vm563
        %vm566 = vmor %vm562, %vm564
        %v567 = vsel %vm565, 40.0, %v555
        %v568 = vsel %vm566, 40.0, %v556
        %v569 = vfloor.f32 %v567
        %v570 = vfloor.f32 %v568
        %v571 = vmul.f32 %v527, 0.0055710305
        %v572 = vmul.f32 %v528, 0.0055710305
        %v573 = vsub.f32 %v571, 1.0
        %v574 = vsub.f32 %v572, 1.0
        %v575 = vmul.f32 %v529, 0.008368201
        %v576 = vmul.f32 %v530, 0.008368201
        %v577 = vsub.f32 %v575, 1.0
        %v578 = vsub.f32 %v576, 1.0
        %v579 = vmul.f32 %v569, 0.051282052
        %v580 = vmul.f32 %v570, 0.051282052
        %v581 = vsub.f32 %v579, 1.0
        %v582 = vsub.f32 %v580, 1.0
        %vm583 = vweird.f32 %v573
        %vm584 = vweird.f32 %v574
        %vm585 = vmxor %vm583, 1
        %vm586 = vmxor %vm584, 1
        %v587 = vsel %vm585, %v573, -2.0
        %v588 = vsel %vm586, %v574, -2.0
        %s589 = scalar_lea.vmem %s160, 48 [#allocation7]
        %590 = vst [vmem:[%s589] sm:$0xff] %v587
        %591 = vst [vmem:[%s589 + $0x8] sm:$0xff] %v588
        %vm592 = vweird.f32 %v577
        %vm593 = vweird.f32 %v578
        %vm594 = vmxor %vm592, 1
        %vm595 = vmxor %vm593, 1
        %v596 = vsel %vm594, %v577, -2.0
        %v597 = vsel %vm595, %v578, -2.0
        %s598 = scalar_lea.vmem %s160, 64 [#allocation7]
        %599 = vst [vmem:[%s598] sm:$0xff] %v596
        %600 = vst [vmem:[%s598 + $0x8] sm:$0xff] %v597
        %s601 = scalar_lea.vmem %s160, 80 [#allocation7]
        %602 = vst [vmem:[%s601] sm:$0xff] %v581
        %603 = vst [vmem:[%s601 + $0x8] sm:$0xff] %v582
        %s604 = sadd.s32 %s162, 2
        %s605 = scvt.s32.f32 %s604
        %s606 = sadd.f32 %s605, 0.5
        %s607 = smul.f32 %s189, %s606
        %v608 = vstv %s607
        %v609 = vadd.f32 %v268, %v608
        %v610 = vadd.f32 %v269, %v608
        %v611 = vand.u32 2147483647, %v609
        %v612 = vand.u32 2147483647, %v610
        %vm613 = vcmp.gt.f32.partialorder %v611, 1e-08
        %vm614 = vcmp.gt.f32.partialorder %v612, 1e-08
        %v615 = vadd.f32 %v609, 1e-08
        %v616 = vadd.f32 %v610, 1e-08
        %v617 = vrcp.pop %v615
        %v618 = vmul.f32 1.0, %v617
        %v619 = vrcp.pop %v616
        %v620 = vmul.f32 1.0, %v619
        %v621 = vsel %vm613, %v618, 1.0
        %v622 = vsel %vm614, %v620, 1.0
        %s623 = smul.f32 %s165, %s606
        %v624 = vstv %s623
        %v625 = vadd.f32 %v238, %v624
        %v626 = vadd.f32 %v239, %v624
        %v627 = vmul.f32 %v625, %v621
        %v628 = vmul.f32 %v626, %v622
        %s629 = smul.f32 %s173, %s606
        %v630 = vstv %s629
        %v631 = vadd.f32 %v248, %v630
        %v632 = vadd.f32 %v249, %v630
        %v633 = vmul.f32 %v631, %v621
        %v634 = vmul.f32 %v632, %v622
        %s635 = smul.f32 %s181, %s606
        %v636 = vstv %s635
        %v637 = vadd.f32 %v258, %v636
        %v638 = vadd.f32 %v259, %v636
        %v639 = vmul.f32 %v637, %v621
        %v640 = vmul.f32 %v638, %v622
        %v641 = vmul.f32 %v306, %v627
        %v642 = vmul.f32 %v306, %v628
        %v643 = vmul.f32 %v309, %v633
        %v644 = vmul.f32 %v309, %v634
        %v645 = vadd.f32 %v641, %v643
        %v646 = vadd.f32 %v642, %v644
        %v647 = vmul.f32 %v314, %v639
        %v648 = vmul.f32 %v314, %v640
        %v649 = vadd.f32 %v645, %v647
        %v650 = vadd.f32 %v646, %v648
        %v651 = vadd.f32 %v649, %v319
        %v652 = vadd.f32 %v650, %v319
        %v653 = vmul.f32 %v322, %v627
        %v654 = vmul.f32 %v322, %v628
        %v655 = vmul.f32 %v325, %v633
        %v656 = vmul.f32 %v325, %v634
        %v657 = vadd.f32 %v653, %v655
        %v658 = vadd.f32 %v654, %v656
        %v659 = vmul.f32 %v330, %v639
        %v660 = vmul.f32 %v330, %v640
        %v661 = vadd.f32 %v657, %v659
        %v662 = vadd.f32 %v658, %v660
        %v663 = vadd.f32 %v661, %v335
        %v664 = vadd.f32 %v662, %v335
        %v665 = vmul.f32 %v338, %v627
        %v666 = vmul.f32 %v338, %v628
        %v667 = vmul.f32 %v341, %v633
        %v668 = vmul.f32 %v341, %v634
        %v669 = vadd.f32 %v665, %v667
        %v670 = vadd.f32 %v666, %v668
        %v671 = vmul.f32 %v346, %v639
        %v672 = vmul.f32 %v346, %v640
        %v673 = vadd.f32 %v669, %v671
        %v674 = vadd.f32 %v670, %v672
        %v675 = vadd.f32 %v673, %v351
        %v676 = vadd.f32 %v674, %v351
        %v677 = vand.u32 2147483647, %v675
        %v678 = vand.u32 2147483647, %v676
        %vm679 = vcmp.gt.f32.partialorder %v677, 1e-08
        %vm680 = vcmp.gt.f32.partialorder %v678, 1e-08
        %v681 = vadd.f32 %v675, 1e-08
        %v682 = vadd.f32 %v676, 1e-08
        %v683 = vrcp.pop %v681
        %v684 = vmul.f32 1.0, %v683
        %v685 = vrcp.pop %v682
        %v686 = vmul.f32 1.0, %v685
        %v687 = vsel %vm679, %v684, 1.0
        %v688 = vsel %vm680, %v686, 1.0
        %v689 = vmul.f32 %v651, %v687
        %v690 = vmul.f32 %v652, %v688
        %v691 = vmul.f32 %v663, %v687
        %v692 = vmul.f32 %v664, %v688
        %v693 = vsub.f32 %v675, %v351
        %v694 = vsub.f32 %v676, %v351
        %v695 = vsub.f32 %v693, 2.0
        %v696 = vsub.f32 %v694, 2.0
        %v697 = vmul.f32 %v695, 146.42857
        %v698 = vmul.f32 %v696, 146.42857
        %v699 = vadd.f32 %v697, 1.0
        %v700 = vadd.f32 %v698, 1.0
        %v701 = vrsqrt.pop %v699
        %v702 = vmul.f32 %v699, %v701
        %vm703 = vcmp.eq.f32.partialorder %v699, inf
        %v704 = vsel %vm703, %v699, %v702
        %vm705 = vcmp.eq.f32.partialorder %v699, 0.0
        %v706 = vand.u32 %v699, 2147483648
        %v707 = vsel %vm705, %v706, %v704
        %v708 = vrsqrt.pop %v700
        %v709 = vmul.f32 %v700, %v708
        %vm710 = vcmp.eq.f32.partialorder %v700, inf
        %v711 = vsel %vm710, %v700, %v709
        %vm712 = vcmp.eq.f32.partialorder %v700, 0.0
        %v713 = vand.u32 %v700, 2147483648
        %v714 = vsel %vm712, %v713, %v711
        %v715 = vmul.f32 %v707, 0.5
        %v716 = vmul.f32 %v714, 0.5
        %v717 = vadd.f32 %v715, -0.5
        %v718 = vadd.f32 %v716, -0.5
        %vm719 = vcmp.lt.f32.partialorder %v717, 0.0
        %vm720 = vcmp.lt.f32.partialorder %v718, 0.0
        %vm721 = vcmp.gt.f32.partialorder %v717, 40.0
        %vm722 = vcmp.gt.f32.partialorder %v718, 40.0
        %vm723 = vmor %vm719, %vm721
        %vm724 = vmor %vm720, %vm722
        %vm725 = vweird.f32 %v717
        %vm726 = vweird.f32 %v718
        %vm727 = vmor %vm723, %vm725
        %vm728 = vmor %vm724, %vm726
        %v729 = vsel %vm727, 40.0, %v717
        %v730 = vsel %vm728, 40.0, %v718
        %v731 = vfloor.f32 %v729
        %v732 = vfloor.f32 %v730
        %v733 = vmul.f32 %v689, 0.0055710305
        %v734 = vmul.f32 %v690, 0.0055710305
        %v735 = vsub.f32 %v733, 1.0
        %v736 = vsub.f32 %v734, 1.0
        %v737 = vmul.f32 %v691, 0.008368201
        %v738 = vmul.f32 %v692, 0.008368201
        %v739 = vsub.f32 %v737, 1.0
        %v740 = vsub.f32 %v738, 1.0
        %v741 = vmul.f32 %v731, 0.051282052
        %v742 = vmul.f32 %v732, 0.051282052
        %v743 = vsub.f32 %v741, 1.0
        %v744 = vsub.f32 %v742, 1.0
        %vm745 = vweird.f32 %v735
        %vm746 = vweird.f32 %v736
        %vm747 = vmxor %vm745, 1
        %vm748 = vmxor %vm746, 1
        %v749 = vsel %vm747, %v735, -2.0
        %v750 = vsel %vm748, %v736, -2.0
        %s751 = scalar_lea.vmem %s160, 96 [#allocation7]
        %752 = vst [vmem:[%s751] sm:$0xff] %v749
        %753 = vst [vmem:[%s751 + $0x8] sm:$0xff] %v750
        %vm754 = vweird.f32 %v739
        %vm755 = vweird.f32 %v740
        %vm756 = vmxor %vm754, 1
        %vm757 = vmxor %vm755, 1
        %v758 = vsel %vm756, %v739, -2.0
        %v759 = vsel %vm757, %v740, -2.0
        %s760 = scalar_lea.vmem %s160, 112 [#allocation7]
        %761 = vst [vmem:[%s760] sm:$0xff] %v758
        %762 = vst [vmem:[%s760 + $0x8] sm:$0xff] %v759
        %s763 = scalar_lea.vmem %s160, 128 [#allocation7]
        %764 = vst [vmem:[%s763] sm:$0xff] %v743
        %765 = vst [vmem:[%s763 + $0x8] sm:$0xff] %v744
        %s766 = sadd.s32 %s162, 3
        %s767 = scvt.s32.f32 %s766
        %s768 = sadd.f32 %s767, 0.5
        %s769 = smul.f32 %s189, %s768
        %v770 = vstv %s769
        %v771 = vadd.f32 %v268, %v770
        %v772 = vadd.f32 %v269, %v770
        %v773 = vand.u32 2147483647, %v771
        %v774 = vand.u32 2147483647, %v772
        %vm775 = vcmp.gt.f32.partialorder %v773, 1e-08
        %vm776 = vcmp.gt.f32.partialorder %v774, 1e-08
        %v777 = vadd.f32 %v771, 1e-08
        %v778 = vadd.f32 %v772, 1e-08
        %v779 = vrcp.pop %v777
        %v780 = vmul.f32 1.0, %v779
        %v781 = vrcp.pop %v778
        %v782 = vmul.f32 1.0, %v781
        %v783 = vsel %vm775, %v780, 1.0
        %v784 = vsel %vm776, %v782, 1.0
        %s785 = smul.f32 %s165, %s768
        %v786 = vstv %s785
        %v787 = vadd.f32 %v238, %v786
        %v788 = vadd.f32 %v239, %v786
        %v789 = vmul.f32 %v787, %v783
        %v790 = vmul.f32 %v788, %v784
        %s791 = smul.f32 %s173, %s768
        %v792 = vstv %s791
        %v793 = vadd.f32 %v248, %v792
        %v794 = vadd.f32 %v249, %v792
        %v795 = vmul.f32 %v793, %v783
        %v796 = vmul.f32 %v794, %v784
        %s797 = smul.f32 %s181, %s768
        %v798 = vstv %s797
        %v799 = vadd.f32 %v258, %v798
        %v800 = vadd.f32 %v259, %v798
        %v801 = vmul.f32 %v799, %v783
        %v802 = vmul.f32 %v800, %v784
        %v803 = vmul.f32 %v306, %v789
        %v804 = vmul.f32 %v306, %v790
        %v805 = vmul.f32 %v309, %v795
        %v806 = vmul.f32 %v309, %v796
        %v807 = vadd.f32 %v803, %v805
        %v808 = vadd.f32 %v804, %v806
        %v809 = vmul.f32 %v314, %v801
        %v810 = vmul.f32 %v314, %v802
        %v811 = vadd.f32 %v807, %v809
        %v812 = vadd.f32 %v808, %v810
        %v813 = vadd.f32 %v811, %v319
        %v814 = vadd.f32 %v812, %v319
        %v815 = vmul.f32 %v322, %v789
        %v816 = vmul.f32 %v322, %v790
        %v817 = vmul.f32 %v325, %v795
        %v818 = vmul.f32 %v325, %v796
        %v819 = vadd.f32 %v815, %v817
        %v820 = vadd.f32 %v816, %v818
        %v821 = vmul.f32 %v330, %v801
        %v822 = vmul.f32 %v330, %v802
        %v823 = vadd.f32 %v819, %v821
        %v824 = vadd.f32 %v820, %v822
        %v825 = vadd.f32 %v823, %v335
        %v826 = vadd.f32 %v824, %v335
        %v827 = vmul.f32 %v338, %v789
        %v828 = vmul.f32 %v338, %v790
        %v829 = vmul.f32 %v341, %v795
        %v830 = vmul.f32 %v341, %v796
        %v831 = vadd.f32 %v827, %v829
        %v832 = vadd.f32 %v828, %v830
        %v833 = vmul.f32 %v346, %v801
        %v834 = vmul.f32 %v346, %v802
        %v835 = vadd.f32 %v831, %v833
        %v836 = vadd.f32 %v832, %v834
        %v837 = vadd.f32 %v835, %v351
        %v838 = vadd.f32 %v836, %v351
        %v839 = vand.u32 2147483647, %v837
        %v840 = vand.u32 2147483647, %v838
        %vm841 = vcmp.gt.f32.partialorder %v839, 1e-08
        %vm842 = vcmp.gt.f32.partialorder %v840, 1e-08
        %v843 = vadd.f32 %v837, 1e-08
        %v844 = vadd.f32 %v838, 1e-08
        %v845 = vrcp.pop %v843
        %v846 = vmul.f32 1.0, %v845
        %v847 = vrcp.pop %v844
        %v848 = vmul.f32 1.0, %v847
        %v849 = vsel %vm841, %v846, 1.0
        %v850 = vsel %vm842, %v848, 1.0
        %v851 = vmul.f32 %v813, %v849
        %v852 = vmul.f32 %v814, %v850
        %v853 = vmul.f32 %v825, %v849
        %v854 = vmul.f32 %v826, %v850
        %v855 = vsub.f32 %v837, %v351
        %v856 = vsub.f32 %v838, %v351
        %v857 = vsub.f32 %v855, 2.0
        %v858 = vsub.f32 %v856, 2.0
        %v859 = vmul.f32 %v857, 146.42857
        %v860 = vmul.f32 %v858, 146.42857
        %v861 = vadd.f32 %v859, 1.0
        %v862 = vadd.f32 %v860, 1.0
        %v863 = vrsqrt.pop %v861
        %v864 = vmul.f32 %v861, %v863
        %vm865 = vcmp.eq.f32.partialorder %v861, inf
        %v866 = vsel %vm865, %v861, %v864
        %vm867 = vcmp.eq.f32.partialorder %v861, 0.0
        %v868 = vand.u32 %v861, 2147483648
        %v869 = vsel %vm867, %v868, %v866
        %v870 = vrsqrt.pop %v862
        %v871 = vmul.f32 %v862, %v870
        %vm872 = vcmp.eq.f32.partialorder %v862, inf
        %v873 = vsel %vm872, %v862, %v871
        %vm874 = vcmp.eq.f32.partialorder %v862, 0.0
        %v875 = vand.u32 %v862, 2147483648
        %v876 = vsel %vm874, %v875, %v873
        %v877 = vmul.f32 %v869, 0.5
        %v878 = vmul.f32 %v876, 0.5
        %v879 = vadd.f32 %v877, -0.5
        %v880 = vadd.f32 %v878, -0.5
        %vm881 = vcmp.lt.f32.partialorder %v879, 0.0
        %vm882 = vcmp.lt.f32.partialorder %v880, 0.0
        %vm883 = vcmp.gt.f32.partialorder %v879, 40.0
        %vm884 = vcmp.gt.f32.partialorder %v880, 40.0
        %vm885 = vmor %vm881, %vm883
        %vm886 = vmor %vm882, %vm884
        %vm887 = vweird.f32 %v879
        %vm888 = vweird.f32 %v880
        %vm889 = vmor %vm885, %vm887
        %vm890 = vmor %vm886, %vm888
        %v891 = vsel %vm889, 40.0, %v879
        %v892 = vsel %vm890, 40.0, %v880
        %v893 = vfloor.f32 %v891
        %v894 = vfloor.f32 %v892
        %v895 = vmul.f32 %v851, 0.0055710305
        %v896 = vmul.f32 %v852, 0.0055710305
        %v897 = vsub.f32 %v895, 1.0
        %v898 = vsub.f32 %v896, 1.0
        %v899 = vmul.f32 %v853, 0.008368201
        %v900 = vmul.f32 %v854, 0.008368201
        %v901 = vsub.f32 %v899, 1.0
        %v902 = vsub.f32 %v900, 1.0
        %v903 = vmul.f32 %v893, 0.051282052
        %v904 = vmul.f32 %v894, 0.051282052
        %v905 = vsub.f32 %v903, 1.0
        %v906 = vsub.f32 %v904, 1.0
        %vm907 = vweird.f32 %v897
        %vm908 = vweird.f32 %v898
        %vm909 = vmxor %vm907, 1
        %vm910 = vmxor %vm908, 1
        %v911 = vsel %vm909, %v897, -2.0
        %v912 = vsel %vm910, %v898, -2.0
        %s913 = scalar_lea.vmem %s160, 144 [#allocation7]
        %914 = vst [vmem:[%s913] sm:$0xff] %v911
        %915 = vst [vmem:[%s913 + $0x8] sm:$0xff] %v912
        %vm916 = vweird.f32 %v901
        %vm917 = vweird.f32 %v902
        %vm918 = vmxor %vm916, 1
        %vm919 = vmxor %vm917, 1
        %v920 = vsel %vm918, %v901, -2.0
        %v921 = vsel %vm919, %v902, -2.0
        %s922 = scalar_lea.vmem %s160, 160 [#allocation7]
        %923 = vst [vmem:[%s922] sm:$0xff] %v920
        %924 = vst [vmem:[%s922 + $0x8] sm:$0xff] %v921
        %s925 = scalar_lea.vmem %s160, 176 [#allocation7]
        %926 = vst [vmem:[%s925] sm:$0xff] %v905
        %927 = vst [vmem:[%s925 + $0x8] sm:$0xff] %v906
        %s928 = sadd.s32 %s162, 4
        %s929 = scvt.s32.f32 %s928
        %s930 = sadd.f32 %s929, 0.5
        %s931 = smul.f32 %s189, %s930
        %v932 = vstv %s931
        %v933 = vadd.f32 %v268, %v932
        %v934 = vadd.f32 %v269, %v932
        %v935 = vand.u32 2147483647, %v933
        %v936 = vand.u32 2147483647, %v934
        %vm937 = vcmp.gt.f32.partialorder %v935, 1e-08
        %vm938 = vcmp.gt.f32.partialorder %v936, 1e-08
        %v939 = vadd.f32 %v933, 1e-08
        %v940 = vadd.f32 %v934, 1e-08
        %v941 = vrcp.pop %v939
        %v942 = vmul.f32 1.0, %v941
        %v943 = vrcp.pop %v940
        %v944 = vmul.f32 1.0, %v943
        %v945 = vsel %vm937, %v942, 1.0
        %v946 = vsel %vm938, %v944, 1.0
        %s947 = smul.f32 %s165, %s930
        %v948 = vstv %s947
        %v949 = vadd.f32 %v238, %v948
        %v950 = vadd.f32 %v239, %v948
        %v951 = vmul.f32 %v949, %v945
        %v952 = vmul.f32 %v950, %v946
        %s953 = smul.f32 %s173, %s930
        %v954 = vstv %s953
        %v955 = vadd.f32 %v248, %v954
        %v956 = vadd.f32 %v249, %v954
        %v957 = vmul.f32 %v955, %v945
        %v958 = vmul.f32 %v956, %v946
        %s959 = smul.f32 %s181, %s930
        %v960 = vstv %s959
        %v961 = vadd.f32 %v258, %v960
        %v962 = vadd.f32 %v259, %v960
        %v963 = vmul.f32 %v961, %v945
        %v964 = vmul.f32 %v962, %v946
        %v965 = vmul.f32 %v306, %v951
        %v966 = vmul.f32 %v306, %v952
        %v967 = vmul.f32 %v309, %v957
        %v968 = vmul.f32 %v309, %v958
        %v969 = vadd.f32 %v965, %v967
        %v970 = vadd.f32 %v966, %v968
        %v971 = vmul.f32 %v314, %v963
        %v972 = vmul.f32 %v314, %v964
        %v973 = vadd.f32 %v969, %v971
        %v974 = vadd.f32 %v970, %v972
        %v975 = vadd.f32 %v973, %v319
        %v976 = vadd.f32 %v974, %v319
        %v977 = vmul.f32 %v322, %v951
        %v978 = vmul.f32 %v322, %v952
        %v979 = vmul.f32 %v325, %v957
        %v980 = vmul.f32 %v325, %v958
        %v981 = vadd.f32 %v977, %v979
        %v982 = vadd.f32 %v978, %v980
        %v983 = vmul.f32 %v330, %v963
        %v984 = vmul.f32 %v330, %v964
        %v985 = vadd.f32 %v981, %v983
        %v986 = vadd.f32 %v982, %v984
        %v987 = vadd.f32 %v985, %v335
        %v988 = vadd.f32 %v986, %v335
        %v989 = vmul.f32 %v338, %v951
        %v990 = vmul.f32 %v338, %v952
        %v991 = vmul.f32 %v341, %v957
        %v992 = vmul.f32 %v341, %v958
        %v993 = vadd.f32 %v989, %v991
        %v994 = vadd.f32 %v990, %v992
        %v995 = vmul.f32 %v346, %v963
        %v996 = vmul.f32 %v346, %v964
        %v997 = vadd.f32 %v993, %v995
        %v998 = vadd.f32 %v994, %v996
        %v999 = vadd.f32 %v997, %v351
        %v1000 = vadd.f32 %v998, %v351
        %v1001 = vand.u32 2147483647, %v999
        %v1002 = vand.u32 2147483647, %v1000
        %vm1003 = vcmp.gt.f32.partialorder %v1001, 1e-08
        %vm1004 = vcmp.gt.f32.partialorder %v1002, 1e-08
        %v1005 = vadd.f32 %v999, 1e-08
        %v1006 = vadd.f32 %v1000, 1e-08
        %v1007 = vrcp.pop %v1005
        %v1008 = vmul.f32 1.0, %v1007
        %v1009 = vrcp.pop %v1006
        %v1010 = vmul.f32 1.0, %v1009
        %v1011 = vsel %vm1003, %v1008, 1.0
        %v1012 = vsel %vm1004, %v1010, 1.0
        %v1013 = vmul.f32 %v975, %v1011
        %v1014 = vmul.f32 %v976, %v1012
        %v1015 = vmul.f32 %v987, %v1011
        %v1016 = vmul.f32 %v988, %v1012
        %v1017 = vsub.f32 %v999, %v351
        %v1018 = vsub.f32 %v1000, %v351
        %v1019 = vsub.f32 %v1017, 2.0
        %v1020 = vsub.f32 %v1018, 2.0
        %v1021 = vmul.f32 %v1019, 146.42857
        %v1022 = vmul.f32 %v1020, 146.42857
        %v1023 = vadd.f32 %v1021, 1.0
        %v1024 = vadd.f32 %v1022, 1.0
        %v1025 = vrsqrt.pop %v1023
        %v1026 = vmul.f32 %v1023, %v1025
        %vm1027 = vcmp.eq.f32.partialorder %v1023, inf
        %v1028 = vsel %vm1027, %v1023, %v1026
        %vm1029 = vcmp.eq.f32.partialorder %v1023, 0.0
        %v1030 = vand.u32 %v1023, 2147483648
        %v1031 = vsel %vm1029, %v1030, %v1028
        %v1032 = vrsqrt.pop %v1024
        %v1033 = vmul.f32 %v1024, %v1032
        %vm1034 = vcmp.eq.f32.partialorder %v1024, inf
        %v1035 = vsel %vm1034, %v1024, %v1033
        %vm1036 = vcmp.eq.f32.partialorder %v1024, 0.0
        %v1037 = vand.u32 %v1024, 2147483648
        %v1038 = vsel %vm1036, %v1037, %v1035
        %v1039 = vmul.f32 %v1031, 0.5
        %v1040 = vmul.f32 %v1038, 0.5
        %v1041 = vadd.f32 %v1039, -0.5
        %v1042 = vadd.f32 %v1040, -0.5
        %vm1043 = vcmp.lt.f32.partialorder %v1041, 0.0
        %vm1044 = vcmp.lt.f32.partialorder %v1042, 0.0
        %vm1045 = vcmp.gt.f32.partialorder %v1041, 40.0
        %vm1046 = vcmp.gt.f32.partialorder %v1042, 40.0
        %vm1047 = vmor %vm1043, %vm1045
        %vm1048 = vmor %vm1044, %vm1046
        %vm1049 = vweird.f32 %v1041
        %vm1050 = vweird.f32 %v1042
        %vm1051 = vmor %vm1047, %vm1049
        %vm1052 = vmor %vm1048, %vm1050
        %v1053 = vsel %vm1051, 40.0, %v1041
        %v1054 = vsel %vm1052, 40.0, %v1042
        %v1055 = vfloor.f32 %v1053
        %v1056 = vfloor.f32 %v1054
        %v1057 = vmul.f32 %v1013, 0.0055710305
        %v1058 = vmul.f32 %v1014, 0.0055710305
        %v1059 = vsub.f32 %v1057, 1.0
        %v1060 = vsub.f32 %v1058, 1.0
        %v1061 = vmul.f32 %v1015, 0.008368201
        %v1062 = vmul.f32 %v1016, 0.008368201
        %v1063 = vsub.f32 %v1061, 1.0
        %v1064 = vsub.f32 %v1062, 1.0
        %v1065 = vmul.f32 %v1055, 0.051282052
        %v1066 = vmul.f32 %v1056, 0.051282052
        %v1067 = vsub.f32 %v1065, 1.0
        %v1068 = vsub.f32 %v1066, 1.0
        %vm1069 = vweird.f32 %v1059
        %vm1070 = vweird.f32 %v1060
        %vm1071 = vmxor %vm1069, 1
        %vm1072 = vmxor %vm1070, 1
        %v1073 = vsel %vm1071, %v1059, -2.0
        %v1074 = vsel %vm1072, %v1060, -2.0
        %s1075 = scalar_lea.vmem %s160, 192 [#allocation7]
        %1076 = vst [vmem:[%s1075] sm:$0xff] %v1073
        %1077 = vst [vmem:[%s1075 + $0x8] sm:$0xff] %v1074
        %vm1078 = vweird.f32 %v1063
        %vm1079 = vweird.f32 %v1064
        %vm1080 = vmxor %vm1078, 1
        %vm1081 = vmxor %vm1079, 1
        %v1082 = vsel %vm1080, %v1063, -2.0
        %v1083 = vsel %vm1081, %v1064, -2.0
        %s1084 = scalar_lea.vmem %s160, 208 [#allocation7]
        %1085 = vst [vmem:[%s1084] sm:$0xff] %v1082
        %1086 = vst [vmem:[%s1084 + $0x8] sm:$0xff] %v1083
        %s1087 = scalar_lea.vmem %s160, 224 [#allocation7]
        %1088 = vst [vmem:[%s1087] sm:$0xff] %v1067
        %1089 = vst [vmem:[%s1087 + $0x8] sm:$0xff] %v1068
        %s1090 = sadd.s32 %s162, 5
        %s1091 = scvt.s32.f32 %s1090
        %s1092 = sadd.f32 %s1091, 0.5
        %s1093 = smul.f32 %s189, %s1092
        %v1094 = vstv %s1093
        %v1095 = vadd.f32 %v268, %v1094
        %v1096 = vadd.f32 %v269, %v1094
        %v1097 = vand.u32 2147483647, %v1095
        %v1098 = vand.u32 2147483647, %v1096
        %vm1099 = vcmp.gt.f32.partialorder %v1097, 1e-08
        %vm1100 = vcmp.gt.f32.partialorder %v1098, 1e-08
        %v1101 = vadd.f32 %v1095, 1e-08
        %v1102 = vadd.f32 %v1096, 1e-08
        %v1103 = vrcp.pop %v1101
        %v1104 = vmul.f32 1.0, %v1103
        %v1105 = vrcp.pop %v1102
        %v1106 = vmul.f32 1.0, %v1105
        %v1107 = vsel %vm1099, %v1104, 1.0
        %v1108 = vsel %vm1100, %v1106, 1.0
        %s1109 = smul.f32 %s165, %s1092
        %v1110 = vstv %s1109
        %v1111 = vadd.f32 %v238, %v1110
        %v1112 = vadd.f32 %v239, %v1110
        %v1113 = vmul.f32 %v1111, %v1107
        %v1114 = vmul.f32 %v1112, %v1108
        %s1115 = smul.f32 %s173, %s1092
        %v1116 = vstv %s1115
        %v1117 = vadd.f32 %v248, %v1116
        %v1118 = vadd.f32 %v249, %v1116
        %v1119 = vmul.f32 %v1117, %v1107
        %v1120 = vmul.f32 %v1118, %v1108
        %s1121 = smul.f32 %s181, %s1092
        %v1122 = vstv %s1121
        %v1123 = vadd.f32 %v258, %v1122
        %v1124 = vadd.f32 %v259, %v1122
        %v1125 = vmul.f32 %v1123, %v1107
        %v1126 = vmul.f32 %v1124, %v1108
        %v1127 = vmul.f32 %v306, %v1113
        %v1128 = vmul.f32 %v306, %v1114
        %v1129 = vmul.f32 %v309, %v1119
        %v1130 = vmul.f32 %v309, %v1120
        %v1131 = vadd.f32 %v1127, %v1129
        %v1132 = vadd.f32 %v1128, %v1130
        %v1133 = vmul.f32 %v314, %v1125
        %v1134 = vmul.f32 %v314, %v1126
        %v1135 = vadd.f32 %v1131, %v1133
        %v1136 = vadd.f32 %v1132, %v1134
        %v1137 = vadd.f32 %v1135, %v319
        %v1138 = vadd.f32 %v1136, %v319
        %v1139 = vmul.f32 %v322, %v1113
        %v1140 = vmul.f32 %v322, %v1114
        %v1141 = vmul.f32 %v325, %v1119
        %v1142 = vmul.f32 %v325, %v1120
        %v1143 = vadd.f32 %v1139, %v1141
        %v1144 = vadd.f32 %v1140, %v1142
        %v1145 = vmul.f32 %v330, %v1125
        %v1146 = vmul.f32 %v330, %v1126
        %v1147 = vadd.f32 %v1143, %v1145
        %v1148 = vadd.f32 %v1144, %v1146
        %v1149 = vadd.f32 %v1147, %v335
        %v1150 = vadd.f32 %v1148, %v335
        %v1151 = vmul.f32 %v338, %v1113
        %v1152 = vmul.f32 %v338, %v1114
        %v1153 = vmul.f32 %v341, %v1119
        %v1154 = vmul.f32 %v341, %v1120
        %v1155 = vadd.f32 %v1151, %v1153
        %v1156 = vadd.f32 %v1152, %v1154
        %v1157 = vmul.f32 %v346, %v1125
        %v1158 = vmul.f32 %v346, %v1126
        %v1159 = vadd.f32 %v1155, %v1157
        %v1160 = vadd.f32 %v1156, %v1158
        %v1161 = vadd.f32 %v1159, %v351
        %v1162 = vadd.f32 %v1160, %v351
        %v1163 = vand.u32 2147483647, %v1161
        %v1164 = vand.u32 2147483647, %v1162
        %vm1165 = vcmp.gt.f32.partialorder %v1163, 1e-08
        %vm1166 = vcmp.gt.f32.partialorder %v1164, 1e-08
        %v1167 = vadd.f32 %v1161, 1e-08
        %v1168 = vadd.f32 %v1162, 1e-08
        %v1169 = vrcp.pop %v1167
        %v1170 = vmul.f32 1.0, %v1169
        %v1171 = vrcp.pop %v1168
        %v1172 = vmul.f32 1.0, %v1171
        %v1173 = vsel %vm1165, %v1170, 1.0
        %v1174 = vsel %vm1166, %v1172, 1.0
        %v1175 = vmul.f32 %v1137, %v1173
        %v1176 = vmul.f32 %v1138, %v1174
        %v1177 = vmul.f32 %v1149, %v1173
        %v1178 = vmul.f32 %v1150, %v1174
        %v1179 = vsub.f32 %v1161, %v351
        %v1180 = vsub.f32 %v1162, %v351
        %v1181 = vsub.f32 %v1179, 2.0
        %v1182 = vsub.f32 %v1180, 2.0
        %v1183 = vmul.f32 %v1181, 146.42857
        %v1184 = vmul.f32 %v1182, 146.42857
        %v1185 = vadd.f32 %v1183, 1.0
        %v1186 = vadd.f32 %v1184, 1.0
        %v1187 = vrsqrt.pop %v1185
        %v1188 = vmul.f32 %v1185, %v1187
        %vm1189 = vcmp.eq.f32.partialorder %v1185, inf
        %v1190 = vsel %vm1189, %v1185, %v1188
        %vm1191 = vcmp.eq.f32.partialorder %v1185, 0.0
        %v1192 = vand.u32 %v1185, 2147483648
        %v1193 = vsel %vm1191, %v1192, %v1190
        %v1194 = vrsqrt.pop %v1186
        %v1195 = vmul.f32 %v1186, %v1194
        %vm1196 = vcmp.eq.f32.partialorder %v1186, inf
        %v1197 = vsel %vm1196, %v1186, %v1195
        %vm1198 = vcmp.eq.f32.partialorder %v1186, 0.0
        %v1199 = vand.u32 %v1186, 2147483648
        %v1200 = vsel %vm1198, %v1199, %v1197
        %v1201 = vmul.f32 %v1193, 0.5
        %v1202 = vmul.f32 %v1200, 0.5
        %v1203 = vadd.f32 %v1201, -0.5
        %v1204 = vadd.f32 %v1202, -0.5
        %vm1205 = vcmp.lt.f32.partialorder %v1203, 0.0
        %vm1206 = vcmp.lt.f32.partialorder %v1204, 0.0
        %vm1207 = vcmp.gt.f32.partialorder %v1203, 40.0
        %vm1208 = vcmp.gt.f32.partialorder %v1204, 40.0
        %vm1209 = vmor %vm1205, %vm1207
        %vm1210 = vmor %vm1206, %vm1208
        %vm1211 = vweird.f32 %v1203
        %vm1212 = vweird.f32 %v1204
        %vm1213 = vmor %vm1209, %vm1211
        %vm1214 = vmor %vm1210, %vm1212
        %v1215 = vsel %vm1213, 40.0, %v1203
        %v1216 = vsel %vm1214, 40.0, %v1204
        %v1217 = vfloor.f32 %v1215
        %v1218 = vfloor.f32 %v1216
        %v1219 = vmul.f32 %v1175, 0.0055710305
        %v1220 = vmul.f32 %v1176, 0.0055710305
        %v1221 = vsub.f32 %v1219, 1.0
        %v1222 = vsub.f32 %v1220, 1.0
        %v1223 = vmul.f32 %v1177, 0.008368201
        %v1224 = vmul.f32 %v1178, 0.008368201
        %v1225 = vsub.f32 %v1223, 1.0
        %v1226 = vsub.f32 %v1224, 1.0
        %v1227 = vmul.f32 %v1217, 0.051282052
        %v1228 = vmul.f32 %v1218, 0.051282052
        %v1229 = vsub.f32 %v1227, 1.0
        %v1230 = vsub.f32 %v1228, 1.0
        %vm1231 = vweird.f32 %v1221
        %vm1232 = vweird.f32 %v1222
        %vm1233 = vmxor %vm1231, 1
        %vm1234 = vmxor %vm1232, 1
        %v1235 = vsel %vm1233, %v1221, -2.0
        %v1236 = vsel %vm1234, %v1222, -2.0
        %s1237 = scalar_lea.vmem %s160, 240 [#allocation7]
        %1238 = vst [vmem:[%s1237] sm:$0xff] %v1235
        %1239 = vst [vmem:[%s1237 + $0x8] sm:$0xff] %v1236
        %vm1240 = vweird.f32 %v1225
        %vm1241 = vweird.f32 %v1226
        %vm1242 = vmxor %vm1240, 1
        %vm1243 = vmxor %vm1241, 1
        %v1244 = vsel %vm1242, %v1225, -2.0
        %v1245 = vsel %vm1243, %v1226, -2.0
        %s1246 = scalar_lea.vmem %s160, 256 [#allocation7]
        %1247 = vst [vmem:[%s1246] sm:$0xff] %v1244
        %1248 = vst [vmem:[%s1246 + $0x8] sm:$0xff] %v1245
        %s1249 = scalar_lea.vmem %s160, 272 [#allocation7]
        %1250 = vst [vmem:[%s1249] sm:$0xff] %v1229
        %1251 = vst [vmem:[%s1249 + $0x8] sm:$0xff] %v1230
        %s1252 = sadd.s32 %s162, 6
        %s1253 = scvt.s32.f32 %s1252
        %s1254 = sadd.f32 %s1253, 0.5
        %s1255 = smul.f32 %s189, %s1254
        %v1256 = vstv %s1255
        %v1257 = vadd.f32 %v268, %v1256
        %v1258 = vadd.f32 %v269, %v1256
        %v1259 = vand.u32 2147483647, %v1257
        %v1260 = vand.u32 2147483647, %v1258
        %vm1261 = vcmp.gt.f32.partialorder %v1259, 1e-08
        %vm1262 = vcmp.gt.f32.partialorder %v1260, 1e-08
        %v1263 = vadd.f32 %v1257, 1e-08
        %v1264 = vadd.f32 %v1258, 1e-08
        %v1265 = vrcp.pop %v1263
        %v1266 = vmul.f32 1.0, %v1265
        %v1267 = vrcp.pop %v1264
        %v1268 = vmul.f32 1.0, %v1267
        %v1269 = vsel %vm1261, %v1266, 1.0
        %v1270 = vsel %vm1262, %v1268, 1.0
        %s1271 = smul.f32 %s165, %s1254
        %v1272 = vstv %s1271
        %v1273 = vadd.f32 %v238, %v1272
        %v1274 = vadd.f32 %v239, %v1272
        %v1275 = vmul.f32 %v1273, %v1269
        %v1276 = vmul.f32 %v1274, %v1270
        %s1277 = smul.f32 %s173, %s1254
        %v1278 = vstv %s1277
        %v1279 = vadd.f32 %v248, %v1278
        %v1280 = vadd.f32 %v249, %v1278
        %v1281 = vmul.f32 %v1279, %v1269
        %v1282 = vmul.f32 %v1280, %v1270
        %s1283 = smul.f32 %s181, %s1254
        %v1284 = vstv %s1283
        %v1285 = vadd.f32 %v258, %v1284
        %v1286 = vadd.f32 %v259, %v1284
        %v1287 = vmul.f32 %v1285, %v1269
        %v1288 = vmul.f32 %v1286, %v1270
        %v1289 = vmul.f32 %v306, %v1275
        %v1290 = vmul.f32 %v306, %v1276
        %v1291 = vmul.f32 %v309, %v1281
        %v1292 = vmul.f32 %v309, %v1282
        %v1293 = vadd.f32 %v1289, %v1291
        %v1294 = vadd.f32 %v1290, %v1292
        %v1295 = vmul.f32 %v314, %v1287
        %v1296 = vmul.f32 %v314, %v1288
        %v1297 = vadd.f32 %v1293, %v1295
        %v1298 = vadd.f32 %v1294, %v1296
        %v1299 = vadd.f32 %v1297, %v319
        %v1300 = vadd.f32 %v1298, %v319
        %v1301 = vmul.f32 %v322, %v1275
        %v1302 = vmul.f32 %v322, %v1276
        %v1303 = vmul.f32 %v325, %v1281
        %v1304 = vmul.f32 %v325, %v1282
        %v1305 = vadd.f32 %v1301, %v1303
        %v1306 = vadd.f32 %v1302, %v1304
        %v1307 = vmul.f32 %v330, %v1287
        %v1308 = vmul.f32 %v330, %v1288
        %v1309 = vadd.f32 %v1305, %v1307
        %v1310 = vadd.f32 %v1306, %v1308
        %v1311 = vadd.f32 %v1309, %v335
        %v1312 = vadd.f32 %v1310, %v335
        %v1313 = vmul.f32 %v338, %v1275
        %v1314 = vmul.f32 %v338, %v1276
        %v1315 = vmul.f32 %v341, %v1281
        %v1316 = vmul.f32 %v341, %v1282
        %v1317 = vadd.f32 %v1313, %v1315
        %v1318 = vadd.f32 %v1314, %v1316
        %v1319 = vmul.f32 %v346, %v1287
        %v1320 = vmul.f32 %v346, %v1288
        %v1321 = vadd.f32 %v1317, %v1319
        %v1322 = vadd.f32 %v1318, %v1320
        %v1323 = vadd.f32 %v1321, %v351
        %v1324 = vadd.f32 %v1322, %v351
        %v1325 = vand.u32 2147483647, %v1323
        %v1326 = vand.u32 2147483647, %v1324
        %vm1327 = vcmp.gt.f32.partialorder %v1325, 1e-08
        %vm1328 = vcmp.gt.f32.partialorder %v1326, 1e-08
        %v1329 = vadd.f32 %v1323, 1e-08
        %v1330 = vadd.f32 %v1324, 1e-08
        %v1331 = vrcp.pop %v1329
        %v1332 = vmul.f32 1.0, %v1331
        %v1333 = vrcp.pop %v1330
        %v1334 = vmul.f32 1.0, %v1333
        %v1335 = vsel %vm1327, %v1332, 1.0
        %v1336 = vsel %vm1328, %v1334, 1.0
        %v1337 = vmul.f32 %v1299, %v1335
        %v1338 = vmul.f32 %v1300, %v1336
        %v1339 = vmul.f32 %v1311, %v1335
        %v1340 = vmul.f32 %v1312, %v1336
        %v1341 = vsub.f32 %v1323, %v351
        %v1342 = vsub.f32 %v1324, %v351
        %v1343 = vsub.f32 %v1341, 2.0
        %v1344 = vsub.f32 %v1342, 2.0
        %v1345 = vmul.f32 %v1343, 146.42857
        %v1346 = vmul.f32 %v1344, 146.42857
        %v1347 = vadd.f32 %v1345, 1.0
        %v1348 = vadd.f32 %v1346, 1.0
        %v1349 = vrsqrt.pop %v1347
        %v1350 = vmul.f32 %v1347, %v1349
        %vm1351 = vcmp.eq.f32.partialorder %v1347, inf
        %v1352 = vsel %vm1351, %v1347, %v1350
        %vm1353 = vcmp.eq.f32.partialorder %v1347, 0.0
        %v1354 = vand.u32 %v1347, 2147483648
        %v1355 = vsel %vm1353, %v1354, %v1352
        %v1356 = vrsqrt.pop %v1348
        %v1357 = vmul.f32 %v1348, %v1356
        %vm1358 = vcmp.eq.f32.partialorder %v1348, inf
        %v1359 = vsel %vm1358, %v1348, %v1357
        %vm1360 = vcmp.eq.f32.partialorder %v1348, 0.0
        %v1361 = vand.u32 %v1348, 2147483648
        %v1362 = vsel %vm1360, %v1361, %v1359
        %v1363 = vmul.f32 %v1355, 0.5
        %v1364 = vmul.f32 %v1362, 0.5
        %v1365 = vadd.f32 %v1363, -0.5
        %v1366 = vadd.f32 %v1364, -0.5
        %vm1367 = vcmp.lt.f32.partialorder %v1365, 0.0
        %vm1368 = vcmp.lt.f32.partialorder %v1366, 0.0
        %vm1369 = vcmp.gt.f32.partialorder %v1365, 40.0
        %vm1370 = vcmp.gt.f32.partialorder %v1366, 40.0
        %vm1371 = vmor %vm1367, %vm1369
        %vm1372 = vmor %vm1368, %vm1370
        %vm1373 = vweird.f32 %v1365
        %vm1374 = vweird.f32 %v1366
        %vm1375 = vmor %vm1371, %vm1373
        %vm1376 = vmor %vm1372, %vm1374
        %v1377 = vsel %vm1375, 40.0, %v1365
        %v1378 = vsel %vm1376, 40.0, %v1366
        %v1379 = vfloor.f32 %v1377
        %v1380 = vfloor.f32 %v1378
        %v1381 = vmul.f32 %v1337, 0.0055710305
        %v1382 = vmul.f32 %v1338, 0.0055710305
        %v1383 = vsub.f32 %v1381, 1.0
        %v1384 = vsub.f32 %v1382, 1.0
        %v1385 = vmul.f32 %v1339, 0.008368201
        %v1386 = vmul.f32 %v1340, 0.008368201
        %v1387 = vsub.f32 %v1385, 1.0
        %v1388 = vsub.f32 %v1386, 1.0
        %v1389 = vmul.f32 %v1379, 0.051282052
        %v1390 = vmul.f32 %v1380, 0.051282052
        %v1391 = vsub.f32 %v1389, 1.0
        %v1392 = vsub.f32 %v1390, 1.0
        %vm1393 = vweird.f32 %v1383
        %vm1394 = vweird.f32 %v1384
        %vm1395 = vmxor %vm1393, 1
        %vm1396 = vmxor %vm1394, 1
        %v1397 = vsel %vm1395, %v1383, -2.0
        %v1398 = vsel %vm1396, %v1384, -2.0
        %s1399 = scalar_lea.vmem %s160, 288 [#allocation7]
        %1400 = vst [vmem:[%s1399] sm:$0xff] %v1397
        %1401 = vst [vmem:[%s1399 + $0x8] sm:$0xff] %v1398
        %vm1402 = vweird.f32 %v1387
        %vm1403 = vweird.f32 %v1388
        %vm1404 = vmxor %vm1402, 1
        %vm1405 = vmxor %vm1403, 1
        %v1406 = vsel %vm1404, %v1387, -2.0
        %v1407 = vsel %vm1405, %v1388, -2.0
        %s1408 = scalar_lea.vmem %s160, 304 [#allocation7]
        %1409 = vst [vmem:[%s1408] sm:$0xff] %v1406
        %1410 = vst [vmem:[%s1408 + $0x8] sm:$0xff] %v1407
        %s1411 = scalar_lea.vmem %s160, 320 [#allocation7]
        %1412 = vst [vmem:[%s1411] sm:$0xff] %v1391
        %1413 = vst [vmem:[%s1411 + $0x8] sm:$0xff] %v1392
        %s1414 = sadd.s32 %s162, 7
        %s1415 = scvt.s32.f32 %s1414
        %s1416 = sadd.f32 %s1415, 0.5
        %s1417 = smul.f32 %s189, %s1416
        %v1418 = vstv %s1417
        %v1419 = vadd.f32 %v268, %v1418
        %v1420 = vadd.f32 %v269, %v1418
        %v1421 = vand.u32 2147483647, %v1419
        %v1422 = vand.u32 2147483647, %v1420
        %vm1423 = vcmp.gt.f32.partialorder %v1421, 1e-08
        %vm1424 = vcmp.gt.f32.partialorder %v1422, 1e-08
        %v1425 = vadd.f32 %v1419, 1e-08
        %v1426 = vadd.f32 %v1420, 1e-08
        %v1427 = vrcp.pop %v1425
        %v1428 = vmul.f32 1.0, %v1427
        %v1429 = vrcp.pop %v1426
        %v1430 = vmul.f32 1.0, %v1429
        %v1431 = vsel %vm1423, %v1428, 1.0
        %v1432 = vsel %vm1424, %v1430, 1.0
        %s1433 = smul.f32 %s165, %s1416
        %v1434 = vstv %s1433
        %v1435 = vadd.f32 %v238, %v1434
        %v1436 = vadd.f32 %v239, %v1434
        %v1437 = vmul.f32 %v1435, %v1431
        %v1438 = vmul.f32 %v1436, %v1432
        %s1439 = smul.f32 %s173, %s1416
        %v1440 = vstv %s1439
        %v1441 = vadd.f32 %v248, %v1440
        %v1442 = vadd.f32 %v249, %v1440
        %v1443 = vmul.f32 %v1441, %v1431
        %v1444 = vmul.f32 %v1442, %v1432
        %s1445 = smul.f32 %s181, %s1416
        %v1446 = vstv %s1445
        %v1447 = vadd.f32 %v258, %v1446
        %v1448 = vadd.f32 %v259, %v1446
        %v1449 = vmul.f32 %v1447, %v1431
        %v1450 = vmul.f32 %v1448, %v1432
        %v1451 = vmul.f32 %v306, %v1437
        %v1452 = vmul.f32 %v306, %v1438
        %v1453 = vmul.f32 %v309, %v1443
        %v1454 = vmul.f32 %v309, %v1444
        %v1455 = vadd.f32 %v1451, %v1453
        %v1456 = vadd.f32 %v1452, %v1454
        %v1457 = vmul.f32 %v314, %v1449
        %v1458 = vmul.f32 %v314, %v1450
        %v1459 = vadd.f32 %v1455, %v1457
        %v1460 = vadd.f32 %v1456, %v1458
        %v1461 = vadd.f32 %v1459, %v319
        %v1462 = vadd.f32 %v1460, %v319
        %v1463 = vmul.f32 %v322, %v1437
        %v1464 = vmul.f32 %v322, %v1438
        %v1465 = vmul.f32 %v325, %v1443
        %v1466 = vmul.f32 %v325, %v1444
        %v1467 = vadd.f32 %v1463, %v1465
        %v1468 = vadd.f32 %v1464, %v1466
        %v1469 = vmul.f32 %v330, %v1449
        %v1470 = vmul.f32 %v330, %v1450
        %v1471 = vadd.f32 %v1467, %v1469
        %v1472 = vadd.f32 %v1468, %v1470
        %v1473 = vadd.f32 %v1471, %v335
        %v1474 = vadd.f32 %v1472, %v335
        %v1475 = vmul.f32 %v338, %v1437
        %v1476 = vmul.f32 %v338, %v1438
        %v1477 = vmul.f32 %v341, %v1443
        %v1478 = vmul.f32 %v341, %v1444
        %v1479 = vadd.f32 %v1475, %v1477
        %v1480 = vadd.f32 %v1476, %v1478
        %v1481 = vmul.f32 %v346, %v1449
        %v1482 = vmul.f32 %v346, %v1450
        %v1483 = vadd.f32 %v1479, %v1481
        %v1484 = vadd.f32 %v1480, %v1482
        %v1485 = vadd.f32 %v1483, %v351
        %v1486 = vadd.f32 %v1484, %v351
        %v1487 = vand.u32 2147483647, %v1485
        %v1488 = vand.u32 2147483647, %v1486
        %vm1489 = vcmp.gt.f32.partialorder %v1487, 1e-08
        %vm1490 = vcmp.gt.f32.partialorder %v1488, 1e-08
        %v1491 = vadd.f32 %v1485, 1e-08
        %v1492 = vadd.f32 %v1486, 1e-08
        %v1493 = vrcp.pop %v1491
        %v1494 = vmul.f32 1.0, %v1493
        %v1495 = vrcp.pop %v1492
        %v1496 = vmul.f32 1.0, %v1495
        %v1497 = vsel %vm1489, %v1494, 1.0
        %v1498 = vsel %vm1490, %v1496, 1.0
        %v1499 = vmul.f32 %v1461, %v1497
        %v1500 = vmul.f32 %v1462, %v1498
        %v1501 = vmul.f32 %v1473, %v1497
        %v1502 = vmul.f32 %v1474, %v1498
        %v1503 = vsub.f32 %v1485, %v351
        %v1504 = vsub.f32 %v1486, %v351
        %v1505 = vsub.f32 %v1503, 2.0
        %v1506 = vsub.f32 %v1504, 2.0
        %v1507 = vmul.f32 %v1505, 146.42857
        %v1508 = vmul.f32 %v1506, 146.42857
        %v1509 = vadd.f32 %v1507, 1.0
        %v1510 = vadd.f32 %v1508, 1.0
        %v1511 = vrsqrt.pop %v1509
        %v1512 = vmul.f32 %v1509, %v1511
        %vm1513 = vcmp.eq.f32.partialorder %v1509, inf
        %v1514 = vsel %vm1513, %v1509, %v1512
        %vm1515 = vcmp.eq.f32.partialorder %v1509, 0.0
        %v1516 = vand.u32 %v1509, 2147483648
        %v1517 = vsel %vm1515, %v1516, %v1514
        %v1518 = vrsqrt.pop %v1510
        %v1519 = vmul.f32 %v1510, %v1518
        %vm1520 = vcmp.eq.f32.partialorder %v1510, inf
        %v1521 = vsel %vm1520, %v1510, %v1519
        %vm1522 = vcmp.eq.f32.partialorder %v1510, 0.0
        %v1523 = vand.u32 %v1510, 2147483648
        %v1524 = vsel %vm1522, %v1523, %v1521
        %v1525 = vmul.f32 %v1517, 0.5
        %v1526 = vmul.f32 %v1524, 0.5
        %v1527 = vadd.f32 %v1525, -0.5
        %v1528 = vadd.f32 %v1526, -0.5
        %vm1529 = vcmp.lt.f32.partialorder %v1527, 0.0
        %vm1530 = vcmp.lt.f32.partialorder %v1528, 0.0
        %vm1531 = vcmp.gt.f32.partialorder %v1527, 40.0
        %vm1532 = vcmp.gt.f32.partialorder %v1528, 40.0
        %vm1533 = vmor %vm1529, %vm1531
        %vm1534 = vmor %vm1530, %vm1532
        %vm1535 = vweird.f32 %v1527
        %vm1536 = vweird.f32 %v1528
        %vm1537 = vmor %vm1533, %vm1535
        %vm1538 = vmor %vm1534, %vm1536
        %v1539 = vsel %vm1537, 40.0, %v1527
        %v1540 = vsel %vm1538, 40.0, %v1528
        %v1541 = vfloor.f32 %v1539
        %v1542 = vfloor.f32 %v1540
        %v1543 = vmul.f32 %v1499, 0.0055710305
        %v1544 = vmul.f32 %v1500, 0.0055710305
        %v1545 = vsub.f32 %v1543, 1.0
        %v1546 = vsub.f32 %v1544, 1.0
        %v1547 = vmul.f32 %v1501, 0.008368201
        %v1548 = vmul.f32 %v1502, 0.008368201
        %v1549 = vsub.f32 %v1547, 1.0
        %v1550 = vsub.f32 %v1548, 1.0
        %v1551 = vmul.f32 %v1541, 0.051282052
        %v1552 = vmul.f32 %v1542, 0.051282052
        %v1553 = vsub.f32 %v1551, 1.0
        %v1554 = vsub.f32 %v1552, 1.0
        %vm1555 = vweird.f32 %v1545
        %vm1556 = vweird.f32 %v1546
        %vm1557 = vmxor %vm1555, 1
        %vm1558 = vmxor %vm1556, 1
        %v1559 = vsel %vm1557, %v1545, -2.0
        %v1560 = vsel %vm1558, %v1546, -2.0
        %s1561 = scalar_lea.vmem %s160, 336 [#allocation7]
        %1562 = vst [vmem:[%s1561] sm:$0xff] %v1559
        %1563 = vst [vmem:[%s1561 + $0x8] sm:$0xff] %v1560
        %vm1564 = vweird.f32 %v1549
        %vm1565 = vweird.f32 %v1550
        %vm1566 = vmxor %vm1564, 1
        %vm1567 = vmxor %vm1565, 1
        %v1568 = vsel %vm1566, %v1549, -2.0
        %v1569 = vsel %vm1567, %v1550, -2.0
        %s1570 = scalar_lea.vmem %s160, 352 [#allocation7]
        %1571 = vst [vmem:[%s1570] sm:$0xff] %v1568
        %1572 = vst [vmem:[%s1570 + $0x8] sm:$0xff] %v1569
        %s1573 = scalar_lea.vmem %s160, 368 [#allocation7]
        %1574 = vst [vmem:[%s1573] sm:$0xff] %v1553
        %1575 = vst [vmem:[%s1573 + $0x8] sm:$0xff] %v1554
        %s1576 = sand.u32 %s82, 1
        %s1577 = scalar_lea.sflag [#allocation3], %s1576
        %s1578 = sand.u32 %s82, 1
        %s1579 = smul.addr %s1578, 384
        %s1580 = scalar_lea.vmem [#allocation7], %s1579
        // Predicated region
        $region37: #{tpu_custom_call.1} parent=27 // pred_check
          %p1581 = pneg %p92
        $region38: #{tpu_custom_call.1} parent=27 // pred_check_branch
          %1583 = sbr.rel (%p1581) target = $region40
        $region39: #{tpu_custom_call.1} parent=27 // pred_region
          %s1584 = smul.u32 8, %s23
          %s1586 = ssub.s32 6144, 6144
          %1587 = vsyncadd %s1577, %s1586
          %s1588 = smul.addr %s1584, 6
          %s1589 = smul.addr %s22, 48
          %s1590 = sadd.s32 %s1588, %s1589
          %s1591 = smul.addr %s1590, 128
          %s1592 = scalar_lea.hbm %s2, %s1591
          %s1593 = sshll.u32 %s1580, 4
          %s1594 = int_to_ptr.vmem [resolvable:$true] %s1593
          %1599 = dma.vmem_to_hbm [thread:$0]  %s1594, 6144, %s1592, %s1577, 128, 128, 8
        $region40: #{tpu_custom_call.1} parent=27 // pred_fallthru
          _
      $region28: #{tpu_custom_call.1} parent=5 // pred_fallthru
        _
      %p1600 = scmp.le.s32.totalorder 2, %s13
      // Predicated region
      $region41: #{tpu_custom_call.1} parent=5 // pred_check
        %p1601 = pneg %p1600
      $region42: #{tpu_custom_call.1} parent=5 // pred_check_branch
        %1603 = sbr.rel (%p1601) target = $region44
      $region43: #{tpu_custom_call.1} parent=5 // pred_region
        %s1604 = ssub.s32 %s13, 2
        // Predicated region
        $region45: #{tpu_custom_call.1} parent=43 // pred_check
          %p1605 = pneg %p98
        $region46: #{tpu_custom_call.1} parent=43 // pred_check_branch
          %1607 = sbr.rel (%p1605) target = $region48
        $region47: #{tpu_custom_call.1} parent=43 // pred_region
          %s1608 = sand.u32 %s83, 1
          %s1609 = scalar_lea.sflag [#allocation3], %s1608
          %s1610 = sand.u32 %s83, 1
          %s1611 = smul.addr %s1610, 384
          %s1612 = scalar_lea.vmem [#allocation7], %s1611
          %1613 = dma.done %s1609, 6144
        $region48: #{tpu_custom_call.1} parent=43 // pred_fallthru
          _
      $region44: #{tpu_custom_call.1} parent=5 // pred_fallthru
        _
    $region6: #{tpu_custom_call.1} parent=1 // loop_footer
      %s17 = sadd.s32 1, %s13
    $region7: #{tpu_custom_call.1} parent=1 // loop_footer_branch
      %12 = sbr.rel target = $region3
    $region8: #{tpu_custom_call.1} parent=1 // loop_exit
      _
    %1614 = vsyncpa [#allocation3], 1
    %s1615 = scalar_lea.sflag [#allocation3], 1
    %1616 = vsyncpa %s1615, 1
    %1617 = vsyncpa [#allocation4], 1
    %s1618 = scalar_lea.sflag [#allocation4], 1
    %1619 = vsyncpa %s1618, 1
    %1620 = vsyncpa [#allocation5], 1
    %s1621 = scalar_lea.sflag [#allocation5], 1
    %1622 = vsyncpa %s1621, 1

</llo_original>
